<compile_context>
chip_gen: v7x
topology: tpu7x:2x2x1
jax: 0.10.0
libtpu: 0.0.40
codegen_flags: <defaults>
</compile_context>

<pallas_src>
import functools

import numpy as np

import jax
import jax.numpy as jnp
from jax.experimental import pallas as pl
from jax.experimental.pallas import tpu as pltpu

_VMEM_LIMIT = 48 * 1024 * 1024   # <= v7x physical (64 MiB); raises v5e's 16 MiB default
_BN_EPS = 1e-5                   # PyTorch BatchNorm2d default


# ----------------------------------------------------------------------------
# Shared helpers (usable both inside kernels and in the reference)
# ----------------------------------------------------------------------------

def _apply_act(y, act):
    if act == "leaky":
        return jnp.where(y > 0, y, 0.01 * y)
    if act == "relu":
        return jnp.maximum(y, 0.0)
    if act == "sigmoid":
        return jax.nn.sigmoid(y)
    if act == "tanh":
        return jnp.tanh(y)
    return y


def _im2col_dot(x, w_ref, *, K, W, rows):
    """x: (in_rows, Cin) bf16 value; w_ref: (K*K*Cin, Cout) bf16 ref.

    Builds the im2col tile in VMEM as K*K shifted contiguous slices concatenated
    along channels and issues ONE MXU dot with contraction depth K*K*Cin.
    """
    taps = [x[kh * W + kw: kh * W + kw + rows, :]
            for kh in range(K) for kw in range(K)]
    lhs = jnp.concatenate(taps, axis=-1) if len(taps) > 1 else taps[0]
    return jnp.dot(lhs, w_ref[...], preferred_element_type=jnp.float32)


def _store_and_stats(acc, mask_ref, y_ref, stats_ref, *, rows, out_slack):
    """Store the conv tile (plus zeroed slack rows) and the masked BN partials."""
    cout = y_ref.shape[-1]
    if out_slack:
        y_ref[0, :rows, :] = acc.astype(y_ref.dtype)
        y_ref[0, rows:, :] = jnp.zeros((out_slack, cout), y_ref.dtype)
    else:
        y_ref[0] = acc.astype(y_ref.dtype)
    masked = acc * mask_ref[...]                     # (rows, Cout), junk cols -> 0
    stats_ref[0, :, :cout] = jnp.sum(masked, axis=0, keepdims=True)
    stats_ref[0, :, cout:] = jnp.sum(masked * acc, axis=0, keepdims=True)


# ----------------------------------------------------------------------------
# Kernels
# ----------------------------------------------------------------------------

def _conv_kernel(x_ref, w_ref, mask_ref, y_ref, stats_ref, *,
                 K, W, rows, out_slack):
    """Fused im2col + GEMM + BN partial statistics for one image (stage 1).

    x_ref    (1, rows + (K-1)*(W+1), Cin) bf16  flattened image incl. slack rows
    w_ref    (K*K*Cin, Cout)              bf16  grid-invariant (fetched once)
    mask_ref (rows, 1)                    f32   1.0 on valid columns, 0.0 on junk
    y_ref    (1, rows + out_slack, Cout)  bf16  full-width conv output
    stats_ref(1, 1, 2*Cout)               f32   [sum | sum_sq] over valid pixels
    """
    acc = _im2col_dot(x_ref[0], w_ref, K=K, W=W, rows=rows)
    _store_and_stats(acc, mask_ref, y_ref, stats_ref, rows=rows,
                     out_slack=out_slack)


def _bn_act_conv_kernel(x_ref, w_ref, mask_ref, sc_ref, sh_ref, y_ref, stats_ref,
                        *, K, W, rows, out_slack, act):
    """Stage 2: BN1 + act1 fused into the conv prologue, then im2col GEMM.

    sc_ref / sh_ref: (1, Cin) f32 hoisted BatchNorm scale / shift of stage 1.
    """
    x = x_ref[0].astype(jnp.float32) * sc_ref[...] + sh_ref[...]
    x = _apply_act(x, act).astype(jnp.bfloat16)
    acc = _im2col_dot(x, w_ref, K=K, W=W, rows=rows)
    _store_and_stats(acc, mask_ref, y_ref, stats_ref, rows=rows,
                     out_slack=out_slack)


def _scale_shift_act_kernel(y_ref, sc_ref, sh_ref, o_ref, *, act):
    """Final BN2 + act2: per-tile work is a single FMA + activation."""
    y = y_ref[...].astype(jnp.float32) * sc_ref[...] + sh_ref[...]
    o_ref[...] = _apply_act(y, act).astype(o_ref.dtype)


# ----------------------------------------------------------------------------
# Pallas wrappers
# ----------------------------------------------------------------------------

def _conv_stage(x_flat, w2d, *, K, W, OH, OW, out_slack, in_bn=None, act=None):
    """x_flat: (N, rows_in, Cin) bf16; w2d: (K*K*Cin, Cout) bf16.

    Returns y: (N, OH*W + out_slack, Cout) bf16 full-width conv output
    (slack rows zeroed) and stats: (N, 2*Cout) f32 per-image BN partials.
    If `in_bn=(scale, shift)` is given, the input tile is normalized and
    activated (with `act`) inside the kernel before the convolution.
    """
    n, in_rows, cin = x_flat.shape
    kkc, cout = w2d.shape
    assert kkc == K * K * cin
    rows = OH * W
    out_rows = rows + out_slack
    assert in_rows == rows + (K - 1) * (W + 1)

    # Valid-column mask (1.0 where column < OW), precomputed once.
    mask = ((jnp.arange(rows, dtype=jnp.int32) % W) < OW)
    mask = mask.astype(jnp.float32).reshape(rows, 1)

    in_specs = [
        pl.BlockSpec((1, in_rows, cin), lambda i: (i, 0, 0)),
        pl.BlockSpec((kkc, cout), lambda i: (0, 0)),      # constant -> DMA'd once
        pl.BlockSpec((rows, 1), lambda i: (0, 0)),        # constant -> DMA'd once
    ]
    if in_bn is None:
        kern = functools.partial(_conv_kernel, K=K, W=W, rows=rows,
                                 out_slack=out_slack)
        args = (x_flat, w2d, mask)
    else:
        scale, shift = in_bn
        kern = functools.partial(_bn_act_conv_kernel, K=K, W=W, rows=rows,
                                 out_slack=out_slack, act=act)
        in_specs = in_specs + [pl.BlockSpec((1, cin), lambda i: (0, 0)),
                               pl.BlockSpec((1, cin), lambda i: (0, 0))]
        args = (x_flat, w2d, mask, scale, shift)

    y, stats = pl.pallas_call(
        kern,
        grid=(n,),
        in_specs=in_specs,
        out_specs=(
            pl.BlockSpec((1, out_rows, cout), lambda i: (i, 0, 0)),
            pl.BlockSpec((1, 1, 2 * cout), lambda i: (i, 0, 0)),
        ),
        out_shape=(
            jax.ShapeDtypeStruct((n, out_rows, cout), jnp.bfloat16),
            jax.ShapeDtypeStruct((n, 1, 2 * cout), jnp.float32),
        ),
        compiler_params=pltpu.CompilerParams(
            dimension_semantics=("parallel",),
            vmem_limit_bytes=_VMEM_LIMIT),
    )(*args)
    return y, stats.reshape(n, 2 * cout)


def _bn_scale_shift(stats, gamma, beta, *, count):
    """Tiny wrapper-side reduction of the (N, 2C) partials -> (1, C) scale/shift."""
    c = gamma.shape[0]
    st = jnp.sum(stats.astype(jnp.float32), axis=0)
    mean = st[:c] / count
    var = jnp.maximum(st[c:] / count - mean * mean, 0.0)   # biased, as PyTorch
    scale = gamma.astype(jnp.float32) * jax.lax.rsqrt(var + _BN_EPS)
    shift = beta.astype(jnp.float32) - mean * scale
    return scale.reshape(1, c), shift.reshape(1, c)


def _pick_row_tile(m, target=1024):
    """Largest multiple-of-8 divisor of m that is <= target (whole array if small)."""
    if m <= target:
        return m
    for t in range(target - target % 8, 7, -8):
        if m % t == 0:
            return t
    return target   # fallback: ragged last block (Pallas masks the writes)


def _scale_shift_act(y2d, scale, shift, *, act, out_dtype):
    """y2d: (M, C) bf16 conv output; scale/shift: (1, C) f32 hoisted BN params."""
    m, c = y2d.shape
    tr = _pick_row_tile(m)
    return pl.pallas_call(
        functools.partial(_scale_shift_act_kernel, act=act),
        grid=(pl.cdiv(m, tr),),
        in_specs=[
            pl.BlockSpec((tr, c), lambda i: (i, 0)),
            pl.BlockSpec((1, c), lambda i: (0, 0)),
            pl.BlockSpec((1, c), lambda i: (0, 0)),
        ],
        out_specs=pl.BlockSpec((tr, c), lambda i: (i, 0)),
        out_shape=jax.ShapeDtypeStruct((m, c), out_dtype),
        compiler_params=pltpu.CompilerParams(
            dimension_semantics=("parallel",),
            vmem_limit_bytes=_VMEM_LIMIT),
    )(y2d, scale, shift)


# ----------------------------------------------------------------------------
# DoubleConv forward (training-mode BatchNorm, matching the PyTorch module)
# ----------------------------------------------------------------------------

def double_conv_forward(x, params, *, act="relu", kernel_size=3, stride=1,
                        padding=0):
    """x: (N, H, W, Cin) float32 NHWC.  Equivalent to
    DoubleConv(act, Cin, Cmid, Cout, kernel_size, stride, padding) in training
    mode (BatchNorm2d uses batch statistics)."""
    assert stride == 1  # TODO(synk): strided conv path not implemented.
    K = kernel_size
    n, h, w_dim, cin = x.shape
    if padding:
        x = jnp.pad(x, ((0, 0), (padding, padding), (padding, padding), (0, 0)))
        h += 2 * padding
        w_dim += 2 * padding

    oh1, ow1 = h - K + 1, w_dim - K + 1
    oh2, ow2 = oh1 - K + 1, ow1 - K + 1
    cmid = params["w1"].shape[-1]
    cout = params["w2"].shape[-1]

    w1 = params["w1"].reshape(K * K * cin, cmid).astype(jnp.bfloat16)
    w2 = params["w2"].reshape(K * K * cmid, cout).astype(jnp.bfloat16)

    # Raw input: flatten row-major and append the K-1 slack rows (the only
    # wrapper-side pad - the raw input has no producing kernel; the slack rows
    # only feed junk columns that are masked / sliced away downstream).
    x_flat = jnp.pad(x.astype(jnp.bfloat16).reshape(n, h * w_dim, cin),
                     ((0, 0), (0, K - 1), (0, 0)))

    # ---- conv1 (bias dropped: BN cancels it) + BN1 partial stats -------------
    y1, st1 = _conv_stage(x_flat, w1, K=K, W=w_dim, OH=oh1, OW=ow1,
                          out_slack=K - 1)
    sc1, sh1 = _bn_scale_shift(st1, params["g1"], params["be1"],
                               count=n * oh1 * ow1)

    # ---- conv2 with BN1 + act1 fused into its prologue ------------------------
    y2, st2 = _conv_stage(y1, w2, K=K, W=w_dim, OH=oh2, OW=ow2, out_slack=0,
                          in_bn=(sc1, sh1), act=act)
    sc2, sh2 = _bn_scale_shift(st2, params["g2"], params["be2"],
                               count=n * oh2 * ow2)

    # ---- BN2 + act2: hoisted scale/shift -> elementwise FMA + activation ------
    a2 = _scale_shift_act(y2.reshape(n * oh2 * w_dim, cout), sc2, sh2,
                          act=act, out_dtype=jnp.float32)
    return a2.reshape(n, oh2, w_dim, cout)[:, :, :ow2, :]


# ----------------------------------------------------------------------------
# Pure-JAX reference (f32, with bias) for correctness checking
# ----------------------------------------------------------------------------

def double_conv_reference(x, params, *, act="relu", kernel_size=3, padding=0):
    K = kernel_size

    def conv(xx, w, b):
        _, ci, co = w.shape
        w4 = w.reshape(K, K, ci, co)
        y = jax.lax.conv_general_dilated(
            xx, w4, window_strides=(1, 1),
            padding=[(padding, padding), (padding, padding)],
            dimension_numbers=("NHWC", "HWIO", "NHWC"))
        return y + b

    def bn(y, g, be):
        mean = jnp.mean(y, axis=(0, 1, 2), keepdims=True)
        var = jnp.mean(jnp.square(y - mean), axis=(0, 1, 2), keepdims=True)
        return (y - mean) * jax.lax.rsqrt(var + _BN_EPS) * g + be

    y = _apply_act(bn(conv(x, params["w1"], params["b1"]),
                      params["g1"], params["be1"]), act)
    y = _apply_act(bn(conv(y, params["w2"], params["b2"]),
                      params["g2"], params["be2"]), act)
    return y


# ----------------------------------------------------------------------------
# Deterministic PyTorch-like parameter init
# ----------------------------------------------------------------------------

def init_double_conv_params(key, cin, cmid, cout, kernel_size=3):
    k = kernel_size
    kw1, kb1, kw2, kb2, kg1, kg2, kbe1, kbe2 = jax.random.split(key, 8)

    def conv_init(kw_, kb_, ci, co):
        s = 1.0 / np.sqrt(ci * k * k)
        w = jax.random.uniform(kw_, (k * k, ci, co), jnp.float32, -s, s)
        b = jax.random.uniform(kb_, (co,), jnp.float32, -s, s)
        return w, b

    w1, b1 = conv_init(kw1, kb1, cin, cmid)
    w2, b2 = conv_init(kw2, kb2, cmid, cout)
    g1 = 1.0 + 0.1 * jax.random.normal(kg1, (cmid,), jnp.float32)
    be1 = 0.1 * jax.random.normal(kbe1, (cmid,), jnp.float32)
    g2 = 1.0 + 0.1 * jax.random.normal(kg2, (cout,), jnp.float32)
    be2 = 0.1 * jax.random.normal(kbe2, (cout,), jnp.float32)
    return dict(w1=w1, b1=b1, g1=g1, be1=be1, w2=w2, b2=b2, g2=g2, be2=be2)


# ----------------------------------------------------------------------------

if __name__ == "__main__":
    key = jax.random.PRNGKey(0)
    pkey, xkey = jax.random.split(key)

    N, H, W, CIN, CMID, COUT = 2, 20, 20, 4, 128, 128   # lane-dense channels
    params = init_double_conv_params(pkey, CIN, CMID, COUT)
    x = jax.random.normal(xkey, (N, H, W, CIN), jnp.float32)

    fwd = jax.jit(functools.partial(double_conv_forward, act="relu"))
    out = jax.block_until_ready(fwd(x, params))

    assert out.shape == (N, H - 4, W - 4, COUT), out.shape
    assert bool(jnp.all(jnp.isfinite(out)))

    ref = double_conv_reference(x, params, act="relu")
    np.testing.assert_allclose(np.asarray(out), np.asarray(ref),
                               atol=1e-1, rtol=1e-1)
    print("KERNEL_OK")
</pallas_src>

<mosaic_0001>
module attributes {stable_mosaic.version = 11 : i64} {
  func.func @_conv_kernel(%arg0: i32, %arg1: memref<1x402x4xbf16, #tpu.memory_space<vmem>>, %arg2: memref<36x128xbf16, #tpu.memory_space<vmem>>, %arg3: memref<360x1xf32, #tpu.memory_space<vmem>>, %arg4: memref<1x362x128xbf16, #tpu.memory_space<vmem>>, %arg5: memref<1x1x256xf32, #tpu.memory_space<vmem>>) attributes {dimension_semantics = [#tpu.dimension_semantics<parallel>], iteration_bounds = array<i64: 2>, scalar_prefetch = 0 : i64, scratch_operands = 0 : i64, tpu.core_type = #tpu.core_type<tc>, window_params = [{transform_indices = @transform_0, window_bounds = array<i64: 1, 402, 4>}, {pipeline_mode = #tpu.pipeline_mode<synchronous>, transform_indices = @transform_1, window_bounds = array<i64: 36, 128>}, {pipeline_mode = #tpu.pipeline_mode<synchronous>, transform_indices = @transform_2, window_bounds = array<i64: 360, 1>}, {transform_indices = @transform_3, window_bounds = array<i64: 1, 362, 128>}, {transform_indices = @transform_4, window_bounds = array<i64: 1, 1, 256>}]} {
    %c0 = arith.constant 0 : index
    %c0_0 = arith.constant 0 : index
    %c0_1 = arith.constant 0 : index
    %0 = vector.load %arg1[%c0, %c0_0, %c0_1] : memref<1x402x4xbf16, #tpu.memory_space<vmem>>, vector<1x402x4xbf16>
    %1 = vector.shape_cast %0 : vector<1x402x4xbf16> to vector<402x4xbf16>
    %2 = vector.extract_strided_slice %1 {offsets = [0, 0], sizes = [360, 4], strides = [1, 1]} : vector<402x4xbf16> to vector<360x4xbf16>
    %3 = vector.extract_strided_slice %1 {offsets = [1, 0], sizes = [360, 4], strides = [1, 1]} : vector<402x4xbf16> to vector<360x4xbf16>
    %4 = vector.extract_strided_slice %1 {offsets = [2, 0], sizes = [360, 4], strides = [1, 1]} : vector<402x4xbf16> to vector<360x4xbf16>
    %5 = vector.extract_strided_slice %1 {offsets = [20, 0], sizes = [360, 4], strides = [1, 1]} : vector<402x4xbf16> to vector<360x4xbf16>
    %6 = vector.extract_strided_slice %1 {offsets = [21, 0], sizes = [360, 4], strides = [1, 1]} : vector<402x4xbf16> to vector<360x4xbf16>
    %7 = vector.extract_strided_slice %1 {offsets = [22, 0], sizes = [360, 4], strides = [1, 1]} : vector<402x4xbf16> to vector<360x4xbf16>
    %8 = vector.extract_strided_slice %1 {offsets = [40, 0], sizes = [360, 4], strides = [1, 1]} : vector<402x4xbf16> to vector<360x4xbf16>
    %9 = vector.extract_strided_slice %1 {offsets = [41, 0], sizes = [360, 4], strides = [1, 1]} : vector<402x4xbf16> to vector<360x4xbf16>
    %10 = vector.extract_strided_slice %1 {offsets = [42, 0], sizes = [360, 4], strides = [1, 1]} : vector<402x4xbf16> to vector<360x4xbf16>
    %11 = tpu.concatenate %2, %3, %4, %5, %6, %7, %8, %9, %10 in 1 : vector<360x4xbf16>, vector<360x4xbf16>, vector<360x4xbf16>, vector<360x4xbf16>, vector<360x4xbf16>, vector<360x4xbf16>, vector<360x4xbf16>, vector<360x4xbf16>, vector<360x4xbf16> -> vector<360x36xbf16>
    %c0_2 = arith.constant 0 : index
    %c0_3 = arith.constant 0 : index
    %12 = vector.load %arg2[%c0_2, %c0_3] : memref<36x128xbf16, #tpu.memory_space<vmem>>, vector<36x128xbf16>
    %cst = arith.constant dense<0.000000e+00> : vector<360x128xf32>
    %13 = tpu.matmul %11, %12, %cst {dimension_numbers = #tpu.dot_dimension_numbers<[1], [0], [0], [1], [0, 0, 1, 1], [], []>} : vector<360x36xbf16>, vector<36x128xbf16>, vector<360x128xf32> -> vector<360x128xf32>
    %14 = arith.truncf %13 : vector<360x128xf32> to vector<360x128xbf16>
    %c0_4 = arith.constant 0 : index
    %c0_5 = arith.constant 0 : index
    %c0_6 = arith.constant 0 : index
    %15 = vector.load %arg4[%c0_4, %c0_5, %c0_6] : memref<1x362x128xbf16, #tpu.memory_space<vmem>>, vector<1x360x128xbf16>
    %16 = vector.shape_cast %15 : vector<1x360x128xbf16> to vector<360x128xbf16>
    %17 = vector.shape_cast %14 : vector<360x128xbf16> to vector<1x360x128xbf16>
    tpu.vector_store %arg4[%c0_4, %c0_5, %c0_6], %17 {strides = array<i32>} : memref<1x362x128xbf16, #tpu.memory_space<vmem>>, vector<1x360x128xbf16>,
    %cst_7 = arith.constant 0.000000e+00 : bf16
    %18 = vector.broadcast %cst_7 : bf16 to vector<2x128xbf16>
    %c0_8 = arith.constant 0 : index
    %c360 = arith.constant 360 : index
    %c0_9 = arith.constant 0 : index
    %19 = vector.load %arg4[%c0_8, %c360, %c0_9] : memref<1x362x128xbf16, #tpu.memory_space<vmem>>, vector<1x2x128xbf16>
    %20 = vector.shape_cast %19 : vector<1x2x128xbf16> to vector<2x128xbf16>
    %21 = vector.shape_cast %18 : vector<2x128xbf16> to vector<1x2x128xbf16>
    tpu.vector_store %arg4[%c0_8, %c360, %c0_9], %21 {strides = array<i32>} : memref<1x362x128xbf16, #tpu.memory_space<vmem>>, vector<1x2x128xbf16>,
    %c0_10 = arith.constant 0 : index
    %c0_11 = arith.constant 0 : index
    %22 = vector.load %arg3[%c0_10, %c0_11] : memref<360x1xf32, #tpu.memory_space<vmem>>, vector<360x1xf32>
    %23 = vector.broadcast %22 : vector<360x1xf32> to vector<360x128xf32>
    %24 = arith.mulf %13, %23 : vector<360x128xf32>
    %cst_12 = arith.constant dense<0.000000e+00> : vector<128xf32>
    %25 = vector.multi_reduction <add>, %24, %cst_12 [0] : vector<360x128xf32> to vector<128xf32>
    %26 = vector.shape_cast %25 : vector<128xf32> to vector<1x128xf32>
    %c0_13 = arith.constant 0 : index
    %c0_14 = arith.constant 0 : index
    %c0_15 = arith.constant 0 : index
    %27 = vector.load %arg5[%c0_13, %c0_14, %c0_15] : memref<1x1x256xf32, #tpu.memory_space<vmem>>, vector<1x1x128xf32>
    %28 = vector.shape_cast %27 : vector<1x1x128xf32> to vector<1x128xf32>
    %29 = vector.shape_cast %26 : vector<1x128xf32> to vector<1x1x128xf32>
    tpu.vector_store %arg5[%c0_13, %c0_14, %c0_15], %29 {strides = array<i32>} : memref<1x1x256xf32, #tpu.memory_space<vmem>>, vector<1x1x128xf32>,
    %30 = arith.mulf %24, %13 : vector<360x128xf32>
    %cst_16 = arith.constant dense<0.000000e+00> : vector<128xf32>
    %31 = vector.multi_reduction <add>, %30, %cst_16 [0] : vector<360x128xf32> to vector<128xf32>
    %32 = vector.shape_cast %31 : vector<128xf32> to vector<1x128xf32>
    %c0_17 = arith.constant 0 : index
    %c0_18 = arith.constant 0 : index
    %c128 = arith.constant 128 : index
    %33 = vector.load %arg5[%c0_17, %c0_18, %c128] : memref<1x1x256xf32, #tpu.memory_space<vmem>>, vector<1x1x128xf32>
    %34 = vector.shape_cast %33 : vector<1x1x128xf32> to vector<1x128xf32>
    %35 = vector.shape_cast %32 : vector<1x128xf32> to vector<1x1x128xf32>
    tpu.vector_store %arg5[%c0_17, %c0_18, %c128], %35 {strides = array<i32>} : memref<1x1x256xf32, #tpu.memory_space<vmem>>, vector<1x1x128xf32>,
    return
  }
  func.func @transform_0(%arg0: i32) -> (i32, i32, i32) {
    %c0_i32 = arith.constant 0 : i32
    %c0_i32_0 = arith.constant 0 : i32
    %c0_i32_1 = arith.constant 0 : i32
    return %arg0, %c0_i32, %c0_i32_0 : i32, i32, i32
  }
  func.func @transform_1(%arg0: i32) -> (i32, i32) {
    %c0_i32 = arith.constant 0 : i32
    %c0_i32_0 = arith.constant 0 : i32
    %c0_i32_1 = arith.constant 0 : i32
    return %c0_i32, %c0_i32_0 : i32, i32
  }
  func.func @transform_2(%arg0: i32) -> (i32, i32) {
    %c0_i32 = arith.constant 0 : i32
    %c0_i32_0 = arith.constant 0 : i32
    %c0_i32_1 = arith.constant 0 : i32
    return %c0_i32, %c0_i32_0 : i32, i32
  }
  func.func @transform_3(%arg0: i32) -> (i32, i32, i32) {
    %c0_i32 = arith.constant 0 : i32
    %c0_i32_0 = arith.constant 0 : i32
    %c0_i32_1 = arith.constant 0 : i32
    return %arg0, %c0_i32, %c0_i32_0 : i32, i32, i32
  }
  func.func @transform_4(%arg0: i32) -> (i32, i32, i32) {
    %c0_i32 = arith.constant 0 : i32
    %c0_i32_0 = arith.constant 0 : i32
    %c0_i32_1 = arith.constant 0 : i32
    return %arg0, %c0_i32, %c0_i32_0 : i32, i32, i32
  }
}

module attributes {stable_mosaic.version = 11 : i64} {
  func.func @_bn_act_conv_kernel(%arg0: i32, %arg1: memref<1x362x128xbf16, #tpu.memory_space<vmem>>, %arg2: memref<1152x128xbf16, #tpu.memory_space<vmem>>, %arg3: memref<320x1xf32, #tpu.memory_space<vmem>>, %arg4: memref<1x128xf32, #tpu.memory_space<vmem>>, %arg5: memref<1x128xf32, #tpu.memory_space<vmem>>, %arg6: memref<1x320x128xbf16, #tpu.memory_space<vmem>>, %arg7: memref<1x1x256xf32, #tpu.memory_space<vmem>>) attributes {dimension_semantics = [#tpu.dimension_semantics<parallel>], iteration_bounds = array<i64: 2>, scalar_prefetch = 0 : i64, scratch_operands = 0 : i64, tpu.core_type = #tpu.core_type<tc>, window_params = [{transform_indices = @transform_0, window_bounds = array<i64: 1, 362, 128>}, {pipeline_mode = #tpu.pipeline_mode<synchronous>, transform_indices = @transform_1, window_bounds = array<i64: 1152, 128>}, {pipeline_mode = #tpu.pipeline_mode<synchronous>, transform_indices = @transform_2, window_bounds = array<i64: 320, 1>}, {pipeline_mode = #tpu.pipeline_mode<synchronous>, transform_indices = @transform_3, window_bounds = array<i64: 1, 128>}, {pipeline_mode = #tpu.pipeline_mode<synchronous>, transform_indices = @transform_4, window_bounds = array<i64: 1, 128>}, {transform_indices = @transform_5, window_bounds = array<i64: 1, 320, 128>}, {transform_indices = @transform_6, window_bounds = array<i64: 1, 1, 256>}]} {
    %c0 = arith.constant 0 : index
    %c0_0 = arith.constant 0 : index
    %c0_1 = arith.constant 0 : index
    %0 = vector.load %arg1[%c0, %c0_0, %c0_1] : memref<1x362x128xbf16, #tpu.memory_space<vmem>>, vector<1x362x128xbf16>
    %1 = vector.shape_cast %0 : vector<1x362x128xbf16> to vector<362x128xbf16>
    %2 = arith.extf %1 : vector<362x128xbf16> to vector<362x128xf32>
    %c0_2 = arith.constant 0 : index
    %c0_3 = arith.constant 0 : index
    %3 = vector.load %arg4[%c0_2, %c0_3] : memref<1x128xf32, #tpu.memory_space<vmem>>, vector<1x128xf32>
    %4 = vector.broadcast %3 : vector<1x128xf32> to vector<362x128xf32>
    %5 = arith.mulf %2, %4 : vector<362x128xf32>
    %c0_4 = arith.constant 0 : index
    %c0_5 = arith.constant 0 : index
    %6 = vector.load %arg5[%c0_4, %c0_5] : memref<1x128xf32, #tpu.memory_space<vmem>>, vector<1x128xf32>
    %7 = vector.broadcast %6 : vector<1x128xf32> to vector<362x128xf32>
    %8 = arith.addf %5, %7 : vector<362x128xf32>
    %cst = arith.constant 0.000000e+00 : f32
    %9 = vector.broadcast %cst : f32 to vector<362x128xf32>
    %10 = arith.maximumf %8, %9 : vector<362x128xf32>
    %11 = arith.truncf %10 : vector<362x128xf32> to vector<362x128xbf16>
    %12 = vector.extract_strided_slice %11 {offsets = [0, 0], sizes = [320, 128], strides = [1, 1]} : vector<362x128xbf16> to vector<320x128xbf16>
    %13 = vector.extract_strided_slice %11 {offsets = [1, 0], sizes = [320, 128], strides = [1, 1]} : vector<362x128xbf16> to vector<320x128xbf16>
    %14 = vector.extract_strided_slice %11 {offsets = [2, 0], sizes = [320, 128], strides = [1, 1]} : vector<362x128xbf16> to vector<320x128xbf16>
    %15 = vector.extract_strided_slice %11 {offsets = [20, 0], sizes = [320, 128], strides = [1, 1]} : vector<362x128xbf16> to vector<320x128xbf16>
    %16 = vector.extract_strided_slice %11 {offsets = [21, 0], sizes = [320, 128], strides = [1, 1]} : vector<362x128xbf16> to vector<320x128xbf16>
    %17 = vector.extract_strided_slice %11 {offsets = [22, 0], sizes = [320, 128], strides = [1, 1]} : vector<362x128xbf16> to vector<320x128xbf16>
    %18 = vector.extract_strided_slice %11 {offsets = [40, 0], sizes = [320, 128], strides = [1, 1]} : vector<362x128xbf16> to vector<320x128xbf16>
    %19 = vector.extract_strided_slice %11 {offsets = [41, 0], sizes = [320, 128], strides = [1, 1]} : vector<362x128xbf16> to vector<320x128xbf16>
    %20 = vector.extract_strided_slice %11 {offsets = [42, 0], sizes = [320, 128], strides = [1, 1]} : vector<362x128xbf16> to vector<320x128xbf16>
    %21 = tpu.concatenate %12, %13, %14, %15, %16, %17, %18, %19, %20 in 1 : vector<320x128xbf16>, vector<320x128xbf16>, vector<320x128xbf16>, vector<320x128xbf16>, vector<320x128xbf16>, vector<320x128xbf16>, vector<320x128xbf16>, vector<320x128xbf16>, vector<320x128xbf16> -> vector<320x1152xbf16>
    %c0_6 = arith.constant 0 : index
    %c0_7 = arith.constant 0 : index
    %22 = vector.load %arg2[%c0_6, %c0_7] : memref<1152x128xbf16, #tpu.memory_space<vmem>>, vector<1152x128xbf16>
    %cst_8 = arith.constant dense<0.000000e+00> : vector<320x128xf32>
    %23 = tpu.matmul %21, %22, %cst_8 {dimension_numbers = #tpu.dot_dimension_numbers<[1], [0], [0], [1], [0, 0, 1, 1], [], []>} : vector<320x1152xbf16>, vector<1152x128xbf16>, vector<320x128xf32> -> vector<320x128xf32>
    %24 = arith.truncf %23 : vector<320x128xf32> to vector<320x128xbf16>
    %c0_9 = arith.constant 0 : index
    %c0_10 = arith.constant 0 : index
    %c0_11 = arith.constant 0 : index
    %25 = vector.load %arg6[%c0_9, %c0_10, %c0_11] : memref<1x320x128xbf16, #tpu.memory_space<vmem>>, vector<1x320x128xbf16>
    %26 = vector.shape_cast %25 : vector<1x320x128xbf16> to vector<320x128xbf16>
    %27 = vector.shape_cast %24 : vector<320x128xbf16> to vector<1x320x128xbf16>
    tpu.vector_store %arg6[%c0_9, %c0_10, %c0_11], %27 {strides = array<i32>} : memref<1x320x128xbf16, #tpu.memory_space<vmem>>, vector<1x320x128xbf16>,
    %c0_12 = arith.constant 0 : index
    %c0_13 = arith.constant 0 : index
    %28 = vector.load %arg3[%c0_12, %c0_13] : memref<320x1xf32, #tpu.memory_space<vmem>>, vector<320x1xf32>
    %29 = vector.broadcast %28 : vector<320x1xf32> to vector<320x128xf32>
    %30 = arith.mulf %23, %29 : vector<320x128xf32>
    %cst_14 = arith.constant dense<0.000000e+00> : vector<128xf32>
    %31 = vector.multi_reduction <add>, %30, %cst_14 [0] : vector<320x128xf32> to vector<128xf32>
    %32 = vector.shape_cast %31 : vector<128xf32> to vector<1x128xf32>
    %c0_15 = arith.constant 0 : index
    %c0_16 = arith.constant 0 : index
    %c0_17 = arith.constant 0 : index
    %33 = vector.load %arg7[%c0_15, %c0_16, %c0_17] : memref<1x1x256xf32, #tpu.memory_space<vmem>>, vector<1x1x128xf32>
    %34 = vector.shape_cast %33 : vector<1x1x128xf32> to vector<1x128xf32>
    %35 = vector.shape_cast %32 : vector<1x128xf32> to vector<1x1x128xf32>
    tpu.vector_store %arg7[%c0_15, %c0_16, %c0_17], %35 {strides = array<i32>} : memref<1x1x256xf32, #tpu.memory_space<vmem>>, vector<1x1x128xf32>,
    %36 = arith.mulf %30, %23 : vector<320x128xf32>
    %cst_18 = arith.constant dense<0.000000e+00> : vector<128xf32>
    %37 = vector.multi_reduction <add>, %36, %cst_18 [0] : vector<320x128xf32> to vector<128xf32>
    %38 = vector.shape_cast %37 : vector<128xf32> to vector<1x128xf32>
    %c0_19 = arith.constant 0 : index
    %c0_20 = arith.constant 0 : index
    %c128 = arith.constant 128 : index
    %39 = vector.load %arg7[%c0_19, %c0_20, %c128] : memref<1x1x256xf32, #tpu.memory_space<vmem>>, vector<1x1x128xf32>
    %40 = vector.shape_cast %39 : vector<1x1x128xf32> to vector<1x128xf32>
    %41 = vector.shape_cast %38 : vector<1x128xf32> to vector<1x1x128xf32>
    tpu.vector_store %arg7[%c0_19, %c0_20, %c128], %41 {strides = array<i32>} : memref<1x1x256xf32, #tpu.memory_space<vmem>>, vector<1x1x128xf32>,
    return
  }
  func.func @transform_0(%arg0: i32) -> (i32, i32, i32) {
    %c0_i32 = arith.constant 0 : i32
    %c0_i32_0 = arith.constant 0 : i32
    %c0_i32_1 = arith.constant 0 : i32
    return %arg0, %c0_i32, %c0_i32_0 : i32, i32, i32
  }
  func.func @transform_1(%arg0: i32) -> (i32, i32) {
    %c0_i32 = arith.constant 0 : i32
    %c0_i32_0 = arith.constant 0 : i32
    %c0_i32_1 = arith.constant 0 : i32
    return %c0_i32, %c0_i32_0 : i32, i32
  }
  func.func @transform_2(%arg0: i32) -> (i32, i32) {
    %c0_i32 = arith.constant 0 : i32
    %c0_i32_0 = arith.constant 0 : i32
    %c0_i32_1 = arith.constant 0 : i32
    return %c0_i32, %c0_i32_0 : i32, i32
  }
  func.func @transform_3(%arg0: i32) -> (i32, i32) {
    %c0_i32 = arith.constant 0 : i32
    %c0_i32_0 = arith.constant 0 : i32
    %c0_i32_1 = arith.constant 0 : i32
    return %c0_i32, %c0_i32_0 : i32, i32
  }
  func.func @transform_4(%arg0: i32) -> (i32, i32) {
    %c0_i32 = arith.constant 0 : i32
    %c0_i32_0 = arith.constant 0 : i32
    %c0_i32_1 = arith.constant 0 : i32
    return %c0_i32, %c0_i32_0 : i32, i32
  }
  func.func @transform_5(%arg0: i32) -> (i32, i32, i32) {
    %c0_i32 = arith.constant 0 : i32
    %c0_i32_0 = arith.constant 0 : i32
    %c0_i32_1 = arith.constant 0 : i32
    return %arg0, %c0_i32, %c0_i32_0 : i32, i32, i32
  }
  func.func @transform_6(%arg0: i32) -> (i32, i32, i32) {
    %c0_i32 = arith.constant 0 : i32
    %c0_i32_0 = arith.constant 0 : i32
    %c0_i32_1 = arith.constant 0 : i32
    return %arg0, %c0_i32, %c0_i32_0 : i32, i32, i32
  }
}

module attributes {stable_mosaic.version = 11 : i64} {
  func.func @_scale_shift_act_kernel(%arg0: i32, %arg1: memref<640x128xbf16, #tpu.memory_space<vmem>>, %arg2: memref<1x128xf32, #tpu.memory_space<vmem>>, %arg3: memref<1x128xf32, #tpu.memory_space<vmem>>, %arg4: memref<640x128xf32, #tpu.memory_space<vmem>>) attributes {dimension_semantics = [#tpu.dimension_semantics<parallel>], iteration_bounds = array<i64: 1>, scalar_prefetch = 0 : i64, scratch_operands = 0 : i64, tpu.core_type = #tpu.core_type<tc>, window_params = [{transform_indices = @transform_0, window_bounds = array<i64: 640, 128>}, {pipeline_mode = #tpu.pipeline_mode<synchronous>, transform_indices = @transform_1, window_bounds = array<i64: 1, 128>}, {pipeline_mode = #tpu.pipeline_mode<synchronous>, transform_indices = @transform_2, window_bounds = array<i64: 1, 128>}, {transform_indices = @transform_3, window_bounds = array<i64: 640, 128>}]} {
    %c0 = arith.constant 0 : index
    %c0_0 = arith.constant 0 : index
    %0 = vector.load %arg1[%c0, %c0_0] : memref<640x128xbf16, #tpu.memory_space<vmem>>, vector<640x128xbf16>
    %1 = arith.extf %0 : vector<640x128xbf16> to vector<640x128xf32>
    %c0_1 = arith.constant 0 : index
    %c0_2 = arith.constant 0 : index
    %2 = vector.load %arg2[%c0_1, %c0_2] : memref<1x128xf32, #tpu.memory_space<vmem>>, vector<1x128xf32>
    %3 = vector.broadcast %2 : vector<1x128xf32> to vector<640x128xf32>
    %4 = arith.mulf %1, %3 : vector<640x128xf32>
    %c0_3 = arith.constant 0 : index
    %c0_4 = arith.constant 0 : index
    %5 = vector.load %arg3[%c0_3, %c0_4] : memref<1x128xf32, #tpu.memory_space<vmem>>, vector<1x128xf32>
    %6 = vector.broadcast %5 : vector<1x128xf32> to vector<640x128xf32>
    %7 = arith.addf %4, %6 : vector<640x128xf32>
    %cst = arith.constant 0.000000e+00 : f32
    %8 = vector.broadcast %cst : f32 to vector<640x128xf32>
    %9 = arith.maximumf %7, %8 : vector<640x128xf32>
    %c0_5 = arith.constant 0 : index
    %c0_6 = arith.constant 0 : index
    %10 = vector.load %arg4[%c0_5, %c0_6] : memref<640x128xf32, #tpu.memory_space<vmem>>, vector<640x128xf32>
    tpu.vector_store %arg4[%c0_5, %c0_6], %9 {strides = array<i32>} : memref<640x128xf32, #tpu.memory_space<vmem>>, vector<640x128xf32>,
    return
  }
  func.func @transform_0(%arg0: i32) -> (i32, i32) {
    %c0_i32 = arith.constant 0 : i32
    %c0_i32_0 = arith.constant 0 : i32
    return %arg0, %c0_i32 : i32, i32
  }
  func.func @transform_1(%arg0: i32) -> (i32, i32) {
    %c0_i32 = arith.constant 0 : i32
    %c0_i32_0 = arith.constant 0 : i32
    %c0_i32_1 = arith.constant 0 : i32
    return %c0_i32, %c0_i32_0 : i32, i32
  }
  func.func @transform_2(%arg0: i32) -> (i32, i32) {
    %c0_i32 = arith.constant 0 : i32
    %c0_i32_0 = arith.constant 0 : i32
    %c0_i32_1 = arith.constant 0 : i32
    return %c0_i32, %c0_i32_0 : i32, i32
  }
  func.func @transform_3(%arg0: i32) -> (i32, i32) {
    %c0_i32 = arith.constant 0 : i32
    %c0_i32_0 = arith.constant 0 : i32
    return %arg0, %c0_i32 : i32, i32
  }
}

</mosaic_0001>

<llo_original>
// kernel: double_conv_forward.5
$region0: #{double_conv_forward.5}
  #allocation0 [shape = 'u32[]', space=smem, size = 0x4, offset = 0x4, fixed_abs, tag = 'smem constant byte address 0x4 - core index']
  #allocation1 [shape = 'u32[144,128]{1,0:T(1,128)}', space=vmem, size = 0x12000, scoped, tag = 'internal scratch']
  %s0 = inlined_call_operand.vmem [shape: bf16[640,128], index: 0, kind: input, shape index: {}]
  %s1 = inlined_call_operand.vmem [shape: f32[1,128], index: 1, kind: input, shape index: {}]
  %s2 = inlined_call_operand.vmem [shape: f32[1,128], index: 2, kind: input, shape index: {}]
  %s3 = inlined_call_operand.vmem [shape: f32[640,128], index: 3, kind: output, shape index: {}]
  %s4 = sld [smem:[#allocation0]]
  $region22: #{double_conv_forward.5} parent=0
    _
  %s6 = ssub.s32 1, %s4
  %s7 = scalar_select 0, %s6, %s4
  // Predicated region
  $region2: #{double_conv_forward.5} parent=0 // pred_check
    _
  $region3: #{double_conv_forward.5} parent=0 // pred_check_branch
    %9 = sbr.rel (0) target = $region5
  $region4: #{double_conv_forward.5} parent=0 // pred_region
    _
  $region5: #{double_conv_forward.5} parent=0 // pred_fallthru
    _
  // Predicated region
  $region6: #{double_conv_forward.5} parent=0 // pred_check
    _
  $region7: #{double_conv_forward.5} parent=0 // pred_check_branch
    %11 = sbr.rel (0) target = $region9
  $region8: #{double_conv_forward.5} parent=0 // pred_region
    _
  $region9: #{double_conv_forward.5} parent=0 // pred_fallthru
    _
  // Predicated region
  $region10: #{double_conv_forward.5} parent=0 // pred_check
    _
  $region11: #{double_conv_forward.5} parent=0 // pred_check_branch
    %13 = sbr.rel (0) target = $region13
  $region12: #{double_conv_forward.5} parent=0 // pred_region
    _
  $region13: #{double_conv_forward.5} parent=0 // pred_fallthru
    _
  %v14 = vld [vmem:[%s0] sm:$0xf]
  %v15 = vld [vmem:[%s0 + $0x4] sm:$0xf]
  %v16 = vld [vmem:[%s0 + $0x8] sm:$0xf]
  %v17 = vld [vmem:[%s0 + $0xc] sm:$0xf]
  %v18 = vld [vmem:[%s0 + $0x10] sm:$0xf]
  %v19 = vld [vmem:[%s0 + $0x14] sm:$0xf]
  %v20 = vld [vmem:[%s0 + $0x18] sm:$0xf]
  %v21 = vld [vmem:[%s0 + $0x1c] sm:$0xf]
  %v22 = vld [vmem:[%s0 + $0x20] sm:$0xf]
  %v23 = vld [vmem:[%s0 + $0x24] sm:$0xf]
  %v24 = vld [vmem:[%s0 + $0x28] sm:$0xf]
  %v25 = vld [vmem:[%s0 + $0x2c] sm:$0xf]
  %v26 = vld [vmem:[%s0 + $0x30] sm:$0xf]
  %v27 = vld [vmem:[%s0 + $0x34] sm:$0xf]
  %v28 = vld [vmem:[%s0 + $0x38] sm:$0xf]
  %v29 = vld [vmem:[%s0 + $0x3c] sm:$0xf]
  %v30 = vld [vmem:[%s0 + $0x40] sm:$0xf]
  %v31 = vld [vmem:[%s0 + $0x44] sm:$0xf]
  %v32 = vld [vmem:[%s0 + $0x48] sm:$0xf]
  %v33 = vld [vmem:[%s0 + $0x4c] sm:$0xf]
  %v34 = vld [vmem:[%s0 + $0x50] sm:$0xf]
  %v35 = vld [vmem:[%s0 + $0x54] sm:$0xf]
  %v36 = vld [vmem:[%s0 + $0x58] sm:$0xf]
  %v37 = vld [vmem:[%s0 + $0x5c] sm:$0xf]
  %v38 = vld [vmem:[%s0 + $0x60] sm:$0xf]
  %v39 = vld [vmem:[%s0 + $0x64] sm:$0xf]
  %v40 = vld [vmem:[%s0 + $0x68] sm:$0xf]
  %v41 = vld [vmem:[%s0 + $0x6c] sm:$0xf]
  %v42 = vld [vmem:[%s0 + $0x70] sm:$0xf]
  %v43 = vld [vmem:[%s0 + $0x74] sm:$0xf]
  %v44 = vld [vmem:[%s0 + $0x78] sm:$0xf]
  %v45 = vld [vmem:[%s0 + $0x7c] sm:$0xf]
  %v46 = vld [vmem:[%s0 + $0x80] sm:$0xf]
  %v47 = vld [vmem:[%s0 + $0x84] sm:$0xf]
  %v48 = vld [vmem:[%s0 + $0x88] sm:$0xf]
  %v49 = vld [vmem:[%s0 + $0x8c] sm:$0xf]
  %v50 = vld [vmem:[%s0 + $0x90] sm:$0xf]
  %v51 = vld [vmem:[%s0 + $0x94] sm:$0xf]
  %v52 = vld [vmem:[%s0 + $0x98] sm:$0xf]
  %v53 = vld [vmem:[%s0 + $0x9c] sm:$0xf]
  %v54 = vld [vmem:[%s0 + $0xa0] sm:$0xf]
  %v55 = vld [vmem:[%s0 + $0xa4] sm:$0xf]
  %v56 = vld [vmem:[%s0 + $0xa8] sm:$0xf]
  %v57 = vld [vmem:[%s0 + $0xac] sm:$0xf]
  %v58 = vld [vmem:[%s0 + $0xb0] sm:$0xf]
  %v59 = vld [vmem:[%s0 + $0xb4] sm:$0xf]
  %v60 = vld [vmem:[%s0 + $0xb8] sm:$0xf]
  %v61 = vld [vmem:[%s0 + $0xbc] sm:$0xf]
  %v62 = vld [vmem:[%s0 + $0xc0] sm:$0xf]
  %v63 = vld [vmem:[%s0 + $0xc4] sm:$0xf]
  %v64 = vld [vmem:[%s0 + $0xc8] sm:$0xf]
  %v65 = vld [vmem:[%s0 + $0xcc] sm:$0xf]
  %v66 = vld [vmem:[%s0 + $0xd0] sm:$0xf]
  %v67 = vld [vmem:[%s0 + $0xd4] sm:$0xf]
  %v68 = vld [vmem:[%s0 + $0xd8] sm:$0xf]
  %v69 = vld [vmem:[%s0 + $0xdc] sm:$0xf]
  %v70 = vld [vmem:[%s0 + $0xe0] sm:$0xf]
  %v71 = vld [vmem:[%s0 + $0xe4] sm:$0xf]
  %v72 = vld [vmem:[%s0 + $0xe8] sm:$0xf]
  %v73 = vld [vmem:[%s0 + $0xec] sm:$0xf]
  %v74 = vld [vmem:[%s0 + $0xf0] sm:$0xf]
  %v75 = vld [vmem:[%s0 + $0xf4] sm:$0xf]
  %v76 = vld [vmem:[%s0 + $0xf8] sm:$0xf]
  %v77 = vld [vmem:[%s0 + $0xfc] sm:$0xf]
  %v78 = vld [vmem:[%s0 + $0x100] sm:$0xf]
  %v79 = vld [vmem:[%s0 + $0x104] sm:$0xf]
  %v80 = vld [vmem:[%s0 + $0x108] sm:$0xf]
  %v81 = vld [vmem:[%s0 + $0x10c] sm:$0xf]
  %v82 = vld [vmem:[%s0 + $0x110] sm:$0xf]
  %v83 = vld [vmem:[%s0 + $0x114] sm:$0xf]
  %v84 = vld [vmem:[%s0 + $0x118] sm:$0xf]
  %v85 = vld [vmem:[%s0 + $0x11c] sm:$0xf]
  %v86 = vld [vmem:[%s0 + $0x120] sm:$0xf]
  %v87 = vld [vmem:[%s0 + $0x124] sm:$0xf]
  %v88 = vld [vmem:[%s0 + $0x128] sm:$0xf]
  %v89 = vld [vmem:[%s0 + $0x12c] sm:$0xf]
  %v90 = vld [vmem:[%s0 + $0x130] sm:$0xf]
  %v91 = vld [vmem:[%s0 + $0x134] sm:$0xf]
  %v92 = vld [vmem:[%s0 + $0x138] sm:$0xf]
  %v93 = vld [vmem:[%s0 + $0x13c] sm:$0xf]
  %v94 = vunpack.c.l.bf16 %v14
  %v95 = vunpack.c.l.bf16 %v15
  %v96 = vunpack.c.l.bf16 %v16
  %v97 = vunpack.c.l.bf16 %v17
  %v98 = vunpack.c.l.bf16 %v18
  %v99 = vunpack.c.l.bf16 %v19
  %v100 = vunpack.c.l.bf16 %v20
  %v101 = vunpack.c.l.bf16 %v21
  %v102 = vunpack.c.l.bf16 %v22
  %v103 = vunpack.c.l.bf16 %v23
  %v104 = vunpack.c.l.bf16 %v24
  %v105 = vunpack.c.l.bf16 %v25
  %v106 = vunpack.c.l.bf16 %v26
  %v107 = vunpack.c.l.bf16 %v27
  %v108 = vunpack.c.l.bf16 %v28
  %v109 = vunpack.c.l.bf16 %v29
  %v110 = vunpack.c.l.bf16 %v30
  %v111 = vunpack.c.l.bf16 %v31
  %v112 = vunpack.c.l.bf16 %v32
  %v113 = vunpack.c.l.bf16 %v33
  %v114 = vunpack.c.l.bf16 %v34
  %v115 = vunpack.c.l.bf16 %v35
  %v116 = vunpack.c.l.bf16 %v36
  %v117 = vunpack.c.l.bf16 %v37
  %v118 = vunpack.c.l.bf16 %v38
  %v119 = vunpack.c.l.bf16 %v39
  %v120 = vunpack.c.l.bf16 %v40
  %v121 = vunpack.c.l.bf16 %v41
  %v122 = vunpack.c.l.bf16 %v42
  %v123 = vunpack.c.l.bf16 %v43
  %v124 = vunpack.c.l.bf16 %v44
  %v125 = vunpack.c.l.bf16 %v45
  %v126 = vunpack.c.l.bf16 %v46
  %v127 = vunpack.c.l.bf16 %v47
  %v128 = vunpack.c.l.bf16 %v48
  %v129 = vunpack.c.l.bf16 %v49
  %v130 = vunpack.c.l.bf16 %v50
  %v131 = vunpack.c.l.bf16 %v51
  %v132 = vunpack.c.l.bf16 %v52
  %v133 = vunpack.c.l.bf16 %v53
  %v134 = vunpack.c.l.bf16 %v54
  %v135 = vunpack.c.l.bf16 %v55
  %v136 = vunpack.c.l.bf16 %v56
  %v137 = vunpack.c.l.bf16 %v57
  %v138 = vunpack.c.l.bf16 %v58
  %v139 = vunpack.c.l.bf16 %v59
  %v140 = vunpack.c.l.bf16 %v60
  %v141 = vunpack.c.l.bf16 %v61
  %v142 = vunpack.c.l.bf16 %v62
  %v143 = vunpack.c.l.bf16 %v63
  %v144 = vunpack.c.l.bf16 %v64
  %v145 = vunpack.c.l.bf16 %v65
  %v146 = vunpack.c.l.bf16 %v66
  %v147 = vunpack.c.l.bf16 %v67
  %v148 = vunpack.c.l.bf16 %v68
  %v149 = vunpack.c.l.bf16 %v69
  %v150 = vunpack.c.l.bf16 %v70
  %v151 = vunpack.c.l.bf16 %v71
  %v152 = vunpack.c.l.bf16 %v72
  %v153 = vunpack.c.l.bf16 %v73
  %v154 = vunpack.c.l.bf16 %v74
  %v155 = vunpack.c.l.bf16 %v75
  %v156 = vunpack.c.l.bf16 %v76
  %v157 = vunpack.c.l.bf16 %v77
  %v158 = vunpack.c.l.bf16 %v78
  %v159 = vunpack.c.l.bf16 %v79
  %v160 = vunpack.c.l.bf16 %v80
  %v161 = vunpack.c.l.bf16 %v81
  %v162 = vunpack.c.l.bf16 %v82
  %v163 = vunpack.c.l.bf16 %v83
  %v164 = vunpack.c.l.bf16 %v84
  %v165 = vunpack.c.l.bf16 %v85
  %v166 = vunpack.c.l.bf16 %v86
  %v167 = vunpack.c.l.bf16 %v87
  %v168 = vunpack.c.l.bf16 %v88
  %v169 = vunpack.c.l.bf16 %v89
  %v170 = vunpack.c.l.bf16 %v90
  %v171 = vunpack.c.l.bf16 %v91
  %v172 = vunpack.c.l.bf16 %v92
  %v173 = vunpack.c.l.bf16 %v93
  %v174 = vld [vmem:[%s1] sm:$0x1]
  %v176 = vlaneseq
  %v177 = vshrl.u32 %v176, 7
  %v178 = vsub.s32 0, %v177
  %v179 = vrot.slane %v174, %v178
  %v181 = vmul.f32 %v94, %v179
  %v182 = vmul.f32 %v95, %v179
  %v183 = vmul.f32 %v96, %v179
  %v184 = vmul.f32 %v97, %v179
  %v185 = vmul.f32 %v98, %v179
  %v186 = vmul.f32 %v99, %v179
  %v187 = vmul.f32 %v100, %v179
  %v188 = vmul.f32 %v101, %v179
  %v189 = vmul.f32 %v102, %v179
  %v190 = vmul.f32 %v103, %v179
  %v191 = vmul.f32 %v104, %v179
  %v192 = vmul.f32 %v105, %v179
  %v193 = vmul.f32 %v106, %v179
  %v194 = vmul.f32 %v107, %v179
  %v195 = vmul.f32 %v108, %v179
  %v196 = vmul.f32 %v109, %v179
  %v197 = vmul.f32 %v110, %v179
  %v198 = vmul.f32 %v111, %v179
  %v199 = vmul.f32 %v112, %v179
  %v200 = vmul.f32 %v113, %v179
  %v201 = vmul.f32 %v114, %v179
  %v202 = vmul.f32 %v115, %v179
  %v203 = vmul.f32 %v116, %v179
  %v204 = vmul.f32 %v117, %v179
  %v205 = vmul.f32 %v118, %v179
  %v206 = vmul.f32 %v119, %v179
  %v207 = vmul.f32 %v120, %v179
  %v208 = vmul.f32 %v121, %v179
  %v209 = vmul.f32 %v122, %v179
  %v210 = vmul.f32 %v123, %v179
  %v211 = vmul.f32 %v124, %v179
  %v212 = vmul.f32 %v125, %v179
  %v213 = vmul.f32 %v126, %v179
  %v214 = vmul.f32 %v127, %v179
  %v215 = vmul.f32 %v128, %v179
  %v216 = vmul.f32 %v129, %v179
  %v217 = vmul.f32 %v130, %v179
  %v218 = vmul.f32 %v131, %v179
  %v219 = vmul.f32 %v132, %v179
  %v220 = vmul.f32 %v133, %v179
  %v221 = vmul.f32 %v134, %v179
  %v222 = vmul.f32 %v135, %v179
  %v223 = vmul.f32 %v136, %v179
  %v224 = vmul.f32 %v137, %v179
  %v225 = vmul.f32 %v138, %v179
  %v226 = vmul.f32 %v139, %v179
  %v227 = vmul.f32 %v140, %v179
  %v228 = vmul.f32 %v141, %v179
  %v229 = vmul.f32 %v142, %v179
  %v230 = vmul.f32 %v143, %v179
  %v231 = vmul.f32 %v144, %v179
  %v232 = vmul.f32 %v145, %v179
  %v233 = vmul.f32 %v146, %v179
  %v234 = vmul.f32 %v147, %v179
  %v235 = vmul.f32 %v148, %v179
  %v236 = vmul.f32 %v149, %v179
  %v237 = vmul.f32 %v150, %v179
  %v238 = vmul.f32 %v151, %v179
  %v239 = vmul.f32 %v152, %v179
  %v240 = vmul.f32 %v153, %v179
  %v241 = vmul.f32 %v154, %v179
  %v242 = vmul.f32 %v155, %v179
  %v243 = vmul.f32 %v156, %v179
  %v244 = vmul.f32 %v157, %v179
  %v245 = vmul.f32 %v158, %v179
  %v246 = vmul.f32 %v159, %v179
  %v247 = vmul.f32 %v160, %v179
  %v248 = vmul.f32 %v161, %v179
  %v249 = vmul.f32 %v162, %v179
  %v250 = vmul.f32 %v163, %v179
  %v251 = vmul.f32 %v164, %v179
  %v252 = vmul.f32 %v165, %v179
  %v253 = vmul.f32 %v166, %v179
  %v254 = vmul.f32 %v167, %v179
  %v255 = vmul.f32 %v168, %v179
  %v256 = vmul.f32 %v169, %v179
  %v257 = vmul.f32 %v170, %v179
  %v258 = vmul.f32 %v171, %v179
  %v259 = vmul.f32 %v172, %v179
  %v260 = vmul.f32 %v173, %v179
  %v261 = vld [vmem:[%s2] sm:$0x1]
  %v263 = vlaneseq
  %v264 = vshrl.u32 %v263, 7
  %v265 = vsub.s32 0, %v264
  %v266 = vrot.slane %v261, %v265
  %v268 = vadd.f32 %v181, %v266
  %v269 = vadd.f32 %v182, %v266
  %v270 = vadd.f32 %v183, %v266
  %v271 = vadd.f32 %v184, %v266
  %v272 = vadd.f32 %v185, %v266
  %v273 = vadd.f32 %v186, %v266
  %v274 = vadd.f32 %v187, %v266
  %v275 = vadd.f32 %v188, %v266
  %v276 = vadd.f32 %v189, %v266
  %v277 = vadd.f32 %v190, %v266
  %v278 = vadd.f32 %v191, %v266
  %v279 = vadd.f32 %v192, %v266
  %v280 = vadd.f32 %v193, %v266
  %v281 = vadd.f32 %v194, %v266
  %v282 = vadd.f32 %v195, %v266
  %v283 = vadd.f32 %v196, %v266
  %v284 = vadd.f32 %v197, %v266
  %v285 = vadd.f32 %v198, %v266
  %v286 = vadd.f32 %v199, %v266
  %v287 = vadd.f32 %v200, %v266
  %v288 = vadd.f32 %v201, %v266
  %v289 = vadd.f32 %v202, %v266
  %v290 = vadd.f32 %v203, %v266
  %v291 = vadd.f32 %v204, %v266
  %v292 = vadd.f32 %v205, %v266
  %v293 = vadd.f32 %v206, %v266
  %v294 = vadd.f32 %v207, %v266
  %v295 = vadd.f32 %v208, %v266
  %v296 = vadd.f32 %v209, %v266
  %v297 = vadd.f32 %v210, %v266
  %v298 = vadd.f32 %v211, %v266
  %v299 = vadd.f32 %v212, %v266
  %v300 = vadd.f32 %v213, %v266
  %v301 = vadd.f32 %v214, %v266
  %v302 = vadd.f32 %v215, %v266
  %v303 = vadd.f32 %v216, %v266
  %v304 = vadd.f32 %v217, %v266
  %v305 = vadd.f32 %v218, %v266
  %v306 = vadd.f32 %v219, %v266
  %v307 = vadd.f32 %v220, %v266
  %v308 = vadd.f32 %v221, %v266
  %v309 = vadd.f32 %v222, %v266
  %v310 = vadd.f32 %v223, %v266
  %v311 = vadd.f32 %v224, %v266
  %v312 = vadd.f32 %v225, %v266
  %v313 = vadd.f32 %v226, %v266
  %v314 = vadd.f32 %v227, %v266
  %v315 = vadd.f32 %v228, %v266
  %v316 = vadd.f32 %v229, %v266
  %v317 = vadd.f32 %v230, %v266
  %v318 = vadd.f32 %v231, %v266
  %v319 = vadd.f32 %v232, %v266
  %v320 = vadd.f32 %v233, %v266
  %v321 = vadd.f32 %v234, %v266
  %v322 = vadd.f32 %v235, %v266
  %v323 = vadd.f32 %v236, %v266
  %v324 = vadd.f32 %v237, %v266
  %v325 = vadd.f32 %v238, %v266
  %v326 = vadd.f32 %v239, %v266
  %v327 = vadd.f32 %v240, %v266
  %v328 = vadd.f32 %v241, %v266
  %v329 = vadd.f32 %v242, %v266
  %v330 = vadd.f32 %v243, %v266
  %v331 = vadd.f32 %v244, %v266
  %v332 = vadd.f32 %v245, %v266
  %v333 = vadd.f32 %v246, %v266
  %v334 = vadd.f32 %v247, %v266
  %v335 = vadd.f32 %v248, %v266
  %v336 = vadd.f32 %v249, %v266
  %v337 = vadd.f32 %v250, %v266
  %v338 = vadd.f32 %v251, %v266
  %v339 = vadd.f32 %v252, %v266
  %v340 = vadd.f32 %v253, %v266
  %v341 = vadd.f32 %v254, %v266
  %v342 = vadd.f32 %v255, %v266
  %v343 = vadd.f32 %v256, %v266
  %v344 = vadd.f32 %v257, %v266
  %v345 = vadd.f32 %v258, %v266
  %v346 = vadd.f32 %v259, %v266
  %v347 = vadd.f32 %v260, %v266
  %v348 = vmax.f32 %v268, 0.0
  %v349 = vmax.f32 %v269, 0.0
  %v350 = vmax.f32 %v270, 0.0
  %v351 = vmax.f32 %v271, 0.0
  %v352 = vmax.f32 %v272, 0.0
  %v353 = vmax.f32 %v273, 0.0
  %v354 = vmax.f32 %v274, 0.0
  %v355 = vmax.f32 %v275, 0.0
  %v356 = vmax.f32 %v276, 0.0
  %v357 = vmax.f32 %v277, 0.0
  %v358 = vmax.f32 %v278, 0.0
  %v359 = vmax.f32 %v279, 0.0
  %v360 = vmax.f32 %v280, 0.0
  %v361 = vmax.f32 %v281, 0.0
  %v362 = vmax.f32 %v282, 0.0
  %v363 = vmax.f32 %v283, 0.0
  %v364 = vmax.f32 %v284, 0.0
  %v365 = vmax.f32 %v285, 0.0
  %v366 = vmax.f32 %v286, 0.0
  %v367 = vmax.f32 %v287, 0.0
  %v368 = vmax.f32 %v288, 0.0
  %v369 = vmax.f32 %v289, 0.0
  %v370 = vmax.f32 %v290, 0.0
  %v371 = vmax.f32 %v291, 0.0
  %v372 = vmax.f32 %v292, 0.0
  %v373 = vmax.f32 %v293, 0.0
  %v374 = vmax.f32 %v294, 0.0
  %v375 = vmax.f32 %v295, 0.0
  %v376 = vmax.f32 %v296, 0.0
  %v377 = vmax.f32 %v297, 0.0
  %v378 = vmax.f32 %v298, 0.0
  %v379 = vmax.f32 %v299, 0.0
  %v380 = vmax.f32 %v300, 0.0
  %v381 = vmax.f32 %v301, 0.0
  %v382 = vmax.f32 %v302, 0.0
  %v383 = vmax.f32 %v303, 0.0
  %v384 = vmax.f32 %v304, 0.0
  %v385 = vmax.f32 %v305, 0.0
  %v386 = vmax.f32 %v306, 0.0
  %v387 = vmax.f32 %v307, 0.0
  %v388 = vmax.f32 %v308, 0.0
  %v389 = vmax.f32 %v309, 0.0
  %v390 = vmax.f32 %v310, 0.0
  %v391 = vmax.f32 %v311, 0.0
  %v392 = vmax.f32 %v312, 0.0
  %v393 = vmax.f32 %v313, 0.0
  %v394 = vmax.f32 %v314, 0.0
  %v395 = vmax.f32 %v315, 0.0
  %v396 = vmax.f32 %v316, 0.0
  %v397 = vmax.f32 %v317, 0.0
  %v398 = vmax.f32 %v318, 0.0
  %v399 = vmax.f32 %v319, 0.0
  %v400 = vmax.f32 %v320, 0.0
  %v401 = vmax.f32 %v321, 0.0
  %v402 = vmax.f32 %v322, 0.0
  %v403 = vmax.f32 %v323, 0.0
  %v404 = vmax.f32 %v324, 0.0
  %v405 = vmax.f32 %v325, 0.0
  %v406 = vmax.f32 %v326, 0.0
  %v407 = vmax.f32 %v327, 0.0
  %v408 = vmax.f32 %v328, 0.0
  %v409 = vmax.f32 %v329, 0.0
  %v410 = vmax.f32 %v330, 0.0
  %v411 = vmax.f32 %v331, 0.0
  %v412 = vmax.f32 %v332, 0.0
  %v413 = vmax.f32 %v333, 0.0
  %v414 = vmax.f32 %v334, 0.0
  %v415 = vmax.f32 %v335, 0.0
  %v416 = vmax.f32 %v336, 0.0
  %v417 = vmax.f32 %v337, 0.0
  %v418 = vmax.f32 %v338, 0.0
  %v419 = vmax.f32 %v339, 0.0
  %v420 = vmax.f32 %v340, 0.0
  %v421 = vmax.f32 %v341, 0.0
  %v422 = vmax.f32 %v342, 0.0
  %v423 = vmax.f32 %v343, 0.0
  %v424 = vmax.f32 %v344, 0.0
  %v425 = vmax.f32 %v345, 0.0
  %v426 = vmax.f32 %v346, 0.0
  %v427 = vmax.f32 %v347, 0.0
  %428 = vst [vmem:[%s3] sm:$0xff] %v348
  %429 = vst [vmem:[%s3 + $0x8] sm:$0xff] %v349
  %430 = vst [vmem:[%s3 + $0x10] sm:$0xff] %v350
  %431 = vst [vmem:[%s3 + $0x18] sm:$0xff] %v351
  %432 = vst [vmem:[%s3 + $0x20] sm:$0xff] %v352
  %433 = vst [vmem:[%s3 + $0x28] sm:$0xff] %v353
  %434 = vst [vmem:[%s3 + $0x30] sm:$0xff] %v354
  %435 = vst [vmem:[%s3 + $0x38] sm:$0xff] %v355
  %436 = vst [vmem:[%s3 + $0x40] sm:$0xff] %v356
  %437 = vst [vmem:[%s3 + $0x48] sm:$0xff] %v357
  %438 = vst [vmem:[%s3 + $0x50] sm:$0xff] %v358
  %439 = vst [vmem:[%s3 + $0x58] sm:$0xff] %v359
  %440 = vst [vmem:[%s3 + $0x60] sm:$0xff] %v360
  %441 = vst [vmem:[%s3 + $0x68] sm:$0xff] %v361
  %442 = vst [vmem:[%s3 + $0x70] sm:$0xff] %v362
  %443 = vst [vmem:[%s3 + $0x78] sm:$0xff] %v363
  %444 = vst [vmem:[%s3 + $0x80] sm:$0xff] %v364
  %445 = vst [vmem:[%s3 + $0x88] sm:$0xff] %v365
  %446 = vst [vmem:[%s3 + $0x90] sm:$0xff] %v366
  %447 = vst [vmem:[%s3 + $0x98] sm:$0xff] %v367
  %448 = vst [vmem:[%s3 + $0xa0] sm:$0xff] %v368
  %449 = vst [vmem:[%s3 + $0xa8] sm:$0xff] %v369
  %450 = vst [vmem:[%s3 + $0xb0] sm:$0xff] %v370
  %451 = vst [vmem:[%s3 + $0xb8] sm:$0xff] %v371
  %452 = vst [vmem:[%s3 + $0xc0] sm:$0xff] %v372
  %453 = vst [vmem:[%s3 + $0xc8] sm:$0xff] %v373
  %454 = vst [vmem:[%s3 + $0xd0] sm:$0xff] %v374
  %455 = vst [vmem:[%s3 + $0xd8] sm:$0xff] %v375
  %456 = vst [vmem:[%s3 + $0xe0] sm:$0xff] %v376
  %457 = vst [vmem:[%s3 + $0xe8] sm:$0xff] %v377
  %458 = vst [vmem:[%s3 + $0xf0] sm:$0xff] %v378
  %459 = vst [vmem:[%s3 + $0xf8] sm:$0xff] %v379
  %460 = vst [vmem:[%s3 + $0x100] sm:$0xff] %v380
  %461 = vst [vmem:[%s3 + $0x108] sm:$0xff] %v381
  %462 = vst [vmem:[%s3 + $0x110] sm:$0xff] %v382
  %463 = vst [vmem:[%s3 + $0x118] sm:$0xff] %v383
  %464 = vst [vmem:[%s3 + $0x120] sm:$0xff] %v384
  %465 = vst [vmem:[%s3 + $0x128] sm:$0xff] %v385
  %466 = vst [vmem:[%s3 + $0x130] sm:$0xff] %v386
  %467 = vst [vmem:[%s3 + $0x138] sm:$0xff] %v387
  %468 = vst [vmem:[%s3 + $0x140] sm:$0xff] %v388
  %469 = vst [vmem:[%s3 + $0x148] sm:$0xff] %v389
  %470 = vst [vmem:[%s3 + $0x150] sm:$0xff] %v390
  %471 = vst [vmem:[%s3 + $0x158] sm:$0xff] %v391
  %472 = vst [vmem:[%s3 + $0x160] sm:$0xff] %v392
  %473 = vst [vmem:[%s3 + $0x168] sm:$0xff] %v393
  %474 = vst [vmem:[%s3 + $0x170] sm:$0xff] %v394
  %475 = vst [vmem:[%s3 + $0x178] sm:$0xff] %v395
  %476 = vst [vmem:[%s3 + $0x180] sm:$0xff] %v396
  %477 = vst [vmem:[%s3 + $0x188] sm:$0xff] %v397
  %478 = vst [vmem:[%s3 + $0x190] sm:$0xff] %v398
  %479 = vst [vmem:[%s3 + $0x198] sm:$0xff] %v399
  %480 = vst [vmem:[%s3 + $0x1a0] sm:$0xff] %v400
  %481 = vst [vmem:[%s3 + $0x1a8] sm:$0xff] %v401
  %482 = vst [vmem:[%s3 + $0x1b0] sm:$0xff] %v402
  %483 = vst [vmem:[%s3 + $0x1b8] sm:$0xff] %v403
  %484 = vst [vmem:[%s3 + $0x1c0] sm:$0xff] %v404
  %485 = vst [vmem:[%s3 + $0x1c8] sm:$0xff] %v405
  %486 = vst [vmem:[%s3 + $0x1d0] sm:$0xff] %v406
  %487 = vst [vmem:[%s3 + $0x1d8] sm:$0xff] %v407
  %488 = vst [vmem:[%s3 + $0x1e0] sm:$0xff] %v408
  %489 = vst [vmem:[%s3 + $0x1e8] sm:$0xff] %v409
  %490 = vst [vmem:[%s3 + $0x1f0] sm:$0xff] %v410
  %491 = vst [vmem:[%s3 + $0x1f8] sm:$0xff] %v411
  %492 = vst [vmem:[%s3 + $0x200] sm:$0xff] %v412
  %493 = vst [vmem:[%s3 + $0x208] sm:$0xff] %v413
  %494 = vst [vmem:[%s3 + $0x210] sm:$0xff] %v414
  %495 = vst [vmem:[%s3 + $0x218] sm:$0xff] %v415
  %496 = vst [vmem:[%s3 + $0x220] sm:$0xff] %v416
  %497 = vst [vmem:[%s3 + $0x228] sm:$0xff] %v417
  %498 = vst [vmem:[%s3 + $0x230] sm:$0xff] %v418
  %499 = vst [vmem:[%s3 + $0x238] sm:$0xff] %v419
  %500 = vst [vmem:[%s3 + $0x240] sm:$0xff] %v420
  %501 = vst [vmem:[%s3 + $0x248] sm:$0xff] %v421
  %502 = vst [vmem:[%s3 + $0x250] sm:$0xff] %v422
  %503 = vst [vmem:[%s3 + $0x258] sm:$0xff] %v423
  %504 = vst [vmem:[%s3 + $0x260] sm:$0xff] %v424
  %505 = vst [vmem:[%s3 + $0x268] sm:$0xff] %v425
  %506 = vst [vmem:[%s3 + $0x270] sm:$0xff] %v426
  %507 = vst [vmem:[%s3 + $0x278] sm:$0xff] %v427
  // Predicated region
  $region14: #{double_conv_forward.5} parent=0 // pred_check
    _
  $region15: #{double_conv_forward.5} parent=0 // pred_check_branch
    %509 = sbr.rel (0) target = $region17
  $region16: #{double_conv_forward.5} parent=0 // pred_region
    _
  $region17: #{double_conv_forward.5} parent=0 // pred_fallthru
    _
  // Predicated region
  $region18: #{double_conv_forward.5} parent=0 // pred_check
    _
  $region19: #{double_conv_forward.5} parent=0 // pred_check_branch
    %511 = sbr.rel (0) target = $region21
  $region20: #{double_conv_forward.5} parent=0 // pred_region
    _
  $region21: #{double_conv_forward.5} parent=0 // pred_fallthru
    _

// kernel: double_conv_forward.3
$region0: #{double_conv_forward.3}
  #allocation0 [shape = 'u32[]', space=smem, size = 0x4, offset = 0x4, fixed_abs, tag = 'smem constant byte address 0x4 - core index']
  #allocation1 [shape = 'u32[144,128]{1,0:T(1,128)}', space=vmem, size = 0x12000, scoped, tag = 'internal scratch']
  %s0 = inlined_call_operand.vmem [shape: bf16[2,402,4], index: 0, kind: input, shape index: {}]
  %s1 = inlined_call_operand.vmem [shape: bf16[36,128], index: 1, kind: input, shape index: {}]
  %s2 = inlined_call_operand.vmem [shape: f32[360,1], index: 2, kind: input, shape index: {}]
  %s3 = inlined_call_operand.vmem [shape: bf16[2,362,128], index: 3, kind: output, shape index: {0}]
  %s4 = inlined_call_operand.vmem [shape: f32[2,1,256], index: 4, kind: output, shape index: {1}]
  %5 = xla_tuple %s3, %s4
  %s6 = sld [smem:[#allocation0]]
  $region53: #{double_conv_forward.3} parent=0
    _
  %s8 = ssub.s32 1, %s6
  %s9 = scalar_select 0, %s8, %s6
  loop: start=0, step=1, limit=4
  $region2: #{double_conv_forward.3} parent=0 // loop_pre_header
    _
  $region3: #{double_conv_forward.3} parent=0 // loop_header
    %s11 = sphi 0, %s15
    %p12 = scmp.ge.s32.totalorder %s11, 4
    %s21 = sphi 0, %s23
    %s24 = sphi 0, %s21
    %s25 = sphi 0, %s24
    %s41 = sphi 0, %s25
    %s45 = sphi 0, %s45
    %s47 = sphi 0, %s45
    %s48 = sphi 0, %s47
    %s62 = sphi 0, %s48
    %s66 = sphi 0, %s66
    %s68 = sphi 0, %s66
    %s69 = sphi 0, %s68
    %s83 = sphi 0, %s69
    %s89 = sphi 0, %s91
    %s92 = sphi 0, %s89
    %s93 = sphi 0, %s92
    %s109 = sphi 0, %s93
    %s115 = sphi 0, %s117
    %s118 = sphi 0, %s115
    %s119 = sphi 0, %s118
    %s135 = sphi 0, %s119
  $region4: #{double_conv_forward.3} parent=0 // loop_header_branch
    %14 = sbr.rel (%p12) target = $region8
  $region5: #{double_conv_forward.3} parent=0 // loop_body
    %s16 = ssub.s32 %s11, 1
    %s17 = ssub.s32 %s11, 2
    %s18 = sadd.s32 %s11, 1
    %s19 = ssub.s32 %s11, %s18
    %p20 = scmp.eq.s32.totalorder %s19, 0
    %s22 = sadd.s32 %s21, 1
    %s23 = scalar_select %p20, %s21, %s22
    %p26 = pneg %p20
    %p27 = scmp.eq.s32.totalorder %s11, 1
    %p28 = por %p26, %p27
    %p29 = scmp.ne.s32.totalorder %s21, %s24
    %p30 = scmp.eq.s32.totalorder %s11, 0
    %p31 = por %p29, %p30
    %p32 = scmp.ne.s32.totalorder %s21, %s24
    %p33 = scmp.eq.s32.totalorder %s16, 1
    %p34 = por %p32, %p33
    %p35 = scmp.ne.s32.totalorder %s24, %s25
    %p36 = scmp.eq.s32.totalorder %s16, 0
    %p37 = por %p35, %p36
    %p38 = scmp.ne.s32.totalorder %s24, %s25
    %p39 = scmp.eq.s32.totalorder %s17, 1
    %p40 = por %p38, %p39
    %p42 = scmp.ne.s32.totalorder %s25, %s41
    %p43 = scmp.eq.s32.totalorder %s17, 0
    %p44 = por %p42, %p43
    %s46 = sadd.s32 %s45, 1
    %p49 = scmp.eq.s32.totalorder %s11, 1
    %p50 = scmp.ne.s32.totalorder %s45, %s47
    %p51 = scmp.eq.s32.totalorder %s11, 0
    %p52 = por %p50, %p51
    %p53 = scmp.ne.s32.totalorder %s45, %s47
    %p54 = scmp.eq.s32.totalorder %s16, 1
    %p55 = por %p53, %p54
    %p56 = scmp.ne.s32.totalorder %s47, %s48
    %p57 = scmp.eq.s32.totalorder %s16, 0
    %p58 = por %p56, %p57
    %p59 = scmp.ne.s32.totalorder %s47, %s48
    %p60 = scmp.eq.s32.totalorder %s17, 1
    %p61 = por %p59, %p60
    %p63 = scmp.ne.s32.totalorder %s48, %s62
    %p64 = scmp.eq.s32.totalorder %s17, 0
    %p65 = por %p63, %p64
    %s67 = sadd.s32 %s66, 1
    %p70 = scmp.eq.s32.totalorder %s11, 1
    %p71 = scmp.ne.s32.totalorder %s66, %s68
    %p72 = scmp.eq.s32.totalorder %s11, 0
    %p73 = por %p71, %p72
    %p74 = scmp.ne.s32.totalorder %s66, %s68
    %p75 = scmp.eq.s32.totalorder %s16, 1
    %p76 = por %p74, %p75
    %p77 = scmp.ne.s32.totalorder %s68, %s69
    %p78 = scmp.eq.s32.totalorder %s16, 0
    %p79 = por %p77, %p78
    %p80 = scmp.ne.s32.totalorder %s68, %s69
    %p81 = scmp.eq.s32.totalorder %s17, 1
    %p82 = por %p80, %p81
    %p84 = scmp.ne.s32.totalorder %s69, %s83
    %p85 = scmp.eq.s32.totalorder %s17, 0
    %p86 = por %p84, %p85
    %s87 = ssub.s32 %s11, %s18
    %p88 = scmp.eq.s32.totalorder %s87, 0
    %s90 = sadd.s32 %s89, 1
    %s91 = scalar_select %p88, %s89, %s90
    %p94 = pneg %p88
    %p95 = scmp.eq.s32.totalorder %s11, 1
    %p96 = por %p94, %p95
    %p97 = scmp.ne.s32.totalorder %s89, %s92
    %p98 = scmp.eq.s32.totalorder %s11, 0
    %p99 = por %p97, %p98
    %p100 = scmp.ne.s32.totalorder %s89, %s92
    %p101 = scmp.eq.s32.totalorder %s16, 1
    %p102 = por %p100, %p101
    %p103 = scmp.ne.s32.totalorder %s92, %s93
    %p104 = scmp.eq.s32.totalorder %s16, 0
    %p105 = por %p103, %p104
    %p106 = scmp.ne.s32.totalorder %s92, %s93
    %p107 = scmp.eq.s32.totalorder %s17, 1
    %p108 = por %p106, %p107
    %p110 = scmp.ne.s32.totalorder %s93, %s109
    %p111 = scmp.eq.s32.totalorder %s17, 0
    %p112 = por %p110, %p111
    %s113 = ssub.s32 %s11, %s18
    %p114 = scmp.eq.s32.totalorder %s113, 0
    %s116 = sadd.s32 %s115, 1
    %s117 = scalar_select %p114, %s115, %s116
    %p120 = pneg %p114
    %p121 = scmp.eq.s32.totalorder %s11, 1
    %p122 = por %p120, %p121
    %p123 = scmp.ne.s32.totalorder %s115, %s118
    %p124 = scmp.eq.s32.totalorder %s11, 0
    %p125 = por %p123, %p124
    %p126 = scmp.ne.s32.totalorder %s115, %s118
    %p127 = scmp.eq.s32.totalorder %s16, 1
    %p128 = por %p126, %p127
    %p129 = scmp.ne.s32.totalorder %s118, %s119
    %p130 = scmp.eq.s32.totalorder %s16, 0
    %p131 = por %p129, %p130
    %p132 = scmp.ne.s32.totalorder %s118, %s119
    %p133 = scmp.eq.s32.totalorder %s17, 1
    %p134 = por %p132, %p133
    %p136 = scmp.ne.s32.totalorder %s119, %s135
    %p137 = scmp.eq.s32.totalorder %s17, 0
    %p138 = por %p136, %p137
    %p139 = scmp.le.s32.totalorder 1, %s11
    %p140 = scmp.lt.s32.totalorder %s11, 3
    %p141 = pnand %p139, %p140
    %p142 = pneg %p141
    // Predicated region
    $region9: #{double_conv_forward.3} parent=5 // pred_check
      _
    $region10: #{double_conv_forward.3} parent=5 // pred_check_branch
      %144 = sbr.rel (%p141) target = $region12
    $region11: #{double_conv_forward.3} parent=5 // pred_region
      %s145 = ssub.s32 %s11, 1
      // Predicated region
      $region13: #{double_conv_forward.3} parent=11 // pred_check
        %p146 = pneg %p58
      $region14: #{double_conv_forward.3} parent=11 // pred_check_branch
        %148 = sbr.rel (%p146) target = $region16
      $region15: #{double_conv_forward.3} parent=11 // pred_region
        _
      $region16: #{double_conv_forward.3} parent=11 // pred_fallthru
        _
      // Predicated region
      $region17: #{double_conv_forward.3} parent=11 // pred_check
        %p149 = pneg %p79
      $region18: #{double_conv_forward.3} parent=11 // pred_check_branch
        %151 = sbr.rel (%p149) target = $region20
      $region19: #{double_conv_forward.3} parent=11 // pred_region
        _
      $region20: #{double_conv_forward.3} parent=11 // pred_fallthru
        _
    $region12: #{double_conv_forward.3} parent=5 // pred_fallthru
      _
    %p152 = scmp.lt.s32.totalorder %s11, 2
    // Predicated region
    $region21: #{double_conv_forward.3} parent=5 // pred_check
      %p153 = pneg %p152
    $region22: #{double_conv_forward.3} parent=5 // pred_check_branch
      %155 = sbr.rel (%p153) target = $region24
    $region23: #{double_conv_forward.3} parent=5 // pred_region
      // Predicated region
      $region25: #{double_conv_forward.3} parent=23 // pred_check
        %p156 = pneg %p31
      $region26: #{double_conv_forward.3} parent=23 // pred_check_branch
        %158 = sbr.rel (%p156) target = $region28
      $region27: #{double_conv_forward.3} parent=23 // pred_region
        %p159 = scmp.lt.s32.totalorder %s11, 1
        %s160 = scalar_select %p159, %s11, 1
        %s161 = smul.addr %s160, 51
        %s162 = smul.addr %s161, 4
        %s163 = scalar_lea.vmem %s0, %s162
      $region28: #{double_conv_forward.3} parent=23 // pred_fallthru
        _
    $region24: #{double_conv_forward.3} parent=5 // pred_fallthru
      _
    %p164 = scmp.le.s32.totalorder 1, %s11
    %p165 = scmp.lt.s32.totalorder %s11, 3
    %p166 = pnand %p164, %p165
    %p167 = pneg %p166
    // Predicated region
    $region29: #{double_conv_forward.3} parent=5 // pred_check
      _
    $region30: #{double_conv_forward.3} parent=5 // pred_check_branch
      %169 = sbr.rel (%p166) target = $region32
    $region31: #{double_conv_forward.3} parent=5 // pred_region
      %s170 = ssub.s32 %s11, 1
      %p171 = scmp.lt.s32.totalorder %s16, 1
      %s172 = scalar_select %p171, %s16, 1
      %s173 = smul.addr %s172, 51
      %s174 = smul.addr %s173, 4
      %s175 = scalar_lea.vmem %s0, %s174
      %p176 = pneg %p37
      %p177 = pneg %p34
      %p178 = pneg %p58
      %p179 = pneg %p55
      %p180 = pneg %p79
      %p181 = pneg %p76
      %p182 = pneg %p105
      %p183 = pneg %p102
      %p184 = scmp.lt.s32.totalorder %s16, 1
      %s185 = scalar_select %p184, %s16, 1
      %s186 = smul.addr %s185, 46
      %s187 = smul.addr %s186, 4
      %s188 = scalar_lea.vmem %s3, %s187
      %p189 = pneg %p131
      %p190 = pneg %p128
      %p191 = scmp.lt.s32.totalorder %s16, 1
      %s192 = scalar_select %p191, %s16, 1
      %s193 = smul.addr %s192, 2
      %s194 = scalar_lea.vmem %s4, %s193
      %p195 = scmp.lt.s32.totalorder %s16, 1
      %s196 = scalar_select %p195, %s16, 1
      %s197 = smul.addr %s196, 51
      %s198 = smul.addr %s197, 4
      %s199 = scalar_lea.vmem %s0, %s198
      %p200 = scmp.lt.s32.totalorder %s16, 1
      %s201 = scalar_select %p200, %s16, 1
      %s202 = smul.addr %s201, 46
      %s203 = smul.addr %s202, 4
      %s204 = scalar_lea.vmem %s3, %s203
      %p205 = scmp.lt.s32.totalorder %s16, 1
      %s206 = scalar_select %p205, %s16, 1
      %s207 = smul.addr %s206, 2
      %s208 = scalar_lea.vmem %s4, %s207
      %v210 = vld [vmem:[%s199] sm:$0xf]
      %v211 = vld [vmem:[%s199 + $0x4] sm:$0xf]
      %v212 = vld [vmem:[%s199 + $0x8] sm:$0xf]
      %v213 = vld [vmem:[%s199 + $0xc] sm:$0xf]
      %v214 = vld [vmem:[%s199 + $0x10] sm:$0xf]
      %v215 = vld [vmem:[%s199 + $0x14] sm:$0xf]
      %v216 = vld [vmem:[%s199 + $0x18] sm:$0xf]
      %v217 = vld [vmem:[%s199 + $0x1c] sm:$0xf]
      %v218 = vld [vmem:[%s199 + $0x20] sm:$0xf]
      %v219 = vld [vmem:[%s199 + $0x24] sm:$0xf]
      %v220 = vld [vmem:[%s199 + $0x28] sm:$0xf]
      %v221 = vld [vmem:[%s199 + $0x2c] sm:$0xf]
      %v222 = vld [vmem:[%s199 + $0x30] sm:$0xf]
      %v223 = vld [vmem:[%s199 + $0x34] sm:$0xf]
      %v224 = vld [vmem:[%s199 + $0x38] sm:$0xf]
      %v225 = vld [vmem:[%s199 + $0x3c] sm:$0xf]
      %v226 = vld [vmem:[%s199 + $0x40] sm:$0xf]
      %v227 = vld [vmem:[%s199 + $0x44] sm:$0xf]
      %v228 = vld [vmem:[%s199 + $0x48] sm:$0xf]
      %v229 = vld [vmem:[%s199 + $0x4c] sm:$0xf]
      %v230 = vld [vmem:[%s199 + $0x50] sm:$0xf]
      %v231 = vld [vmem:[%s199 + $0x54] sm:$0xf]
      %v232 = vld [vmem:[%s199 + $0x58] sm:$0xf]
      %v233 = vld [vmem:[%s199 + $0x5c] sm:$0xf]
      %v234 = vld [vmem:[%s199 + $0x60] sm:$0xf]
      %v235 = vld [vmem:[%s199 + $0x64] sm:$0xf]
      %v236 = vld [vmem:[%s199 + $0x68] sm:$0xf]
      %v237 = vld [vmem:[%s199 + $0x6c] sm:$0xf]
      %v238 = vld [vmem:[%s199 + $0x70] sm:$0xf]
      %v239 = vld [vmem:[%s199 + $0x74] sm:$0xf]
      %v240 = vld [vmem:[%s199 + $0x78] sm:$0xf]
      %v241 = vld [vmem:[%s199 + $0x7c] sm:$0xf]
      %v242 = vld [vmem:[%s199 + $0x80] sm:$0xf]
      %v243 = vld [vmem:[%s199 + $0x84] sm:$0xf]
      %v244 = vld [vmem:[%s199 + $0x88] sm:$0xf]
      %v245 = vld [vmem:[%s199 + $0x8c] sm:$0xf]
      %v246 = vld [vmem:[%s199 + $0x90] sm:$0xf]
      %v247 = vld [vmem:[%s199 + $0x94] sm:$0xf]
      %v248 = vld [vmem:[%s199 + $0x98] sm:$0xf]
      %v249 = vld [vmem:[%s199 + $0x9c] sm:$0xf]
      %v250 = vld [vmem:[%s199 + $0xa0] sm:$0xf]
      %v251 = vld [vmem:[%s199 + $0xa4] sm:$0xf]
      %v252 = vld [vmem:[%s199 + $0xa8] sm:$0xf]
      %v253 = vld [vmem:[%s199 + $0xac] sm:$0xf]
      %v254 = vld [vmem:[%s199 + $0xb0] sm:$0xf]
      %v255 = vld [vmem:[%s199 + $0xb4] sm:$0xf]
      %v256 = vld [vmem:[%s199 + $0xb8] sm:$0xf]
      %v257 = vld [vmem:[%s199 + $0xbc] sm:$0xf]
      %v258 = vld [vmem:[%s199 + $0xc0] sm:$0xf]
      %v259 = vld [vmem:[%s199 + $0xc4] sm:$0xf]
      %v260 = vld [vmem:[%s199 + $0xc8] sm:$0x1]
      %v306 = vunpack.c.l.b16 %v210
      %v307 = vunpack.c.l.b16 %v211
      %v308 = vunpack.c.l.b16 %v212
      %v309 = vunpack.c.l.b16 %v213
      %v310 = vunpack.c.l.b16 %v214
      %v311 = vunpack.c.l.b16 %v215
      %v312 = vunpack.c.l.b16 %v216
      %v313 = vunpack.c.l.b16 %v217
      %v314 = vunpack.c.l.b16 %v218
      %v315 = vunpack.c.l.b16 %v219
      %v316 = vunpack.c.l.b16 %v220
      %v317 = vunpack.c.l.b16 %v221
      %v318 = vunpack.c.l.b16 %v222
      %v319 = vunpack.c.l.b16 %v223
      %v320 = vunpack.c.l.b16 %v224
      %v321 = vunpack.c.l.b16 %v225
      %v322 = vunpack.c.l.b16 %v226
      %v323 = vunpack.c.l.b16 %v227
      %v324 = vunpack.c.l.b16 %v228
      %v325 = vunpack.c.l.b16 %v229
      %v326 = vunpack.c.l.b16 %v230
      %v327 = vunpack.c.l.b16 %v231
      %v328 = vunpack.c.l.b16 %v232
      %v329 = vunpack.c.l.b16 %v233
      %v330 = vunpack.c.l.b16 %v234
      %v331 = vunpack.c.l.b16 %v235
      %v332 = vunpack.c.l.b16 %v236
      %v333 = vunpack.c.l.b16 %v237
      %v334 = vunpack.c.l.b16 %v238
      %v335 = vunpack.c.l.b16 %v239
      %v336 = vunpack.c.l.b16 %v240
      %v337 = vunpack.c.l.b16 %v241
      %v338 = vunpack.c.l.b16 %v242
      %v339 = vunpack.c.l.b16 %v243
      %v340 = vunpack.c.l.b16 %v244
      %v341 = vunpack.c.l.b16 %v245
      %v342 = vunpack.c.l.b16 %v246
      %v343 = vunpack.c.l.b16 %v247
      %v344 = vunpack.c.l.b16 %v248
      %v345 = vunpack.c.l.b16 %v249
      %v346 = vunpack.c.l.b16 %v250
      %v347 = vunpack.c.l.b16 %v251
      %v348 = vunpack.c.l.b16 %v252
      %v349 = vunpack.c.l.b16 %v253
      %v350 = vunpack.c.l.b16 %v254
      %v351 = vpack.c.b16 %v307, %v306
      %v352 = vpack.c.b16 %v309, %v308
      %v353 = vpack.c.b16 %v311, %v310
      %v354 = vpack.c.b16 %v313, %v312
      %v355 = vpack.c.b16 %v315, %v314
      %v356 = vpack.c.b16 %v317, %v316
      %v357 = vpack.c.b16 %v319, %v318
      %v358 = vpack.c.b16 %v321, %v320
      %v359 = vpack.c.b16 %v323, %v322
      %v360 = vpack.c.b16 %v325, %v324
      %v361 = vpack.c.b16 %v327, %v326
      %v362 = vpack.c.b16 %v329, %v328
      %v363 = vpack.c.b16 %v331, %v330
      %v364 = vpack.c.b16 %v333, %v332
      %v365 = vpack.c.b16 %v335, %v334
      %v366 = vpack.c.b16 %v337, %v336
      %v367 = vpack.c.b16 %v339, %v338
      %v368 = vpack.c.b16 %v341, %v340
      %v369 = vpack.c.b16 %v343, %v342
      %v370 = vpack.c.b16 %v345, %v344
      %v371 = vpack.c.b16 %v347, %v346
      %v372 = vpack.c.b16 %v349, %v348
      %v373 = vpack.c.b16 %v350, %v350
      %v375 = vunpack.c.l.b16 %v255
      %v376 = vpack.c.b16 %v375, %v350
      %vm377 = vsmask.f32 7424
      %v379 = vshrl.u32 %v351, 16
      %v381 = vshll.u32 %v351, 16
      %v383 = vrot.slane %v381, 1
      %v384 = vor.u32 %v379, %v383
      %v386 = vshll.u32 %v352, 16
      %v388 = vrot.slane %v386, 1
      %v389 = vsel %vm377, %v384, %v388
      %v390 = vshrl.u32 %v352, 16
      %v392 = vor.u32 %v390, %v388
      %v394 = vshll.u32 %v353, 16
      %v396 = vrot.slane %v394, 1
      %v397 = vsel %vm377, %v392, %v396
      %v398 = vshrl.u32 %v353, 16
      %v400 = vor.u32 %v398, %v396
      %v402 = vshll.u32 %v354, 16
      %v404 = vrot.slane %v402, 1
      %v405 = vsel %vm377, %v400, %v404
      %v406 = vshrl.u32 %v354, 16
      %v408 = vor.u32 %v406, %v404
      %v410 = vshll.u32 %v355, 16
      %v412 = vrot.slane %v410, 1
      %v413 = vsel %vm377, %v408, %v412
      %v414 = vshrl.u32 %v355, 16
      %v416 = vor.u32 %v414, %v412
      %v418 = vshll.u32 %v356, 16
      %v420 = vrot.slane %v418, 1
      %v421 = vsel %vm377, %v416, %v420
      %v422 = vshrl.u32 %v356, 16
      %v424 = vor.u32 %v422, %v420
      %v426 = vshll.u32 %v357, 16
      %v428 = vrot.slane %v426, 1
      %v429 = vsel %vm377, %v424, %v428
      %v430 = vshrl.u32 %v357, 16
      %v432 = vor.u32 %v430, %v428
      %v434 = vshll.u32 %v358, 16
      %v436 = vrot.slane %v434, 1
      %v437 = vsel %vm377, %v432, %v436
      %v438 = vshrl.u32 %v358, 16
      %v440 = vor.u32 %v438, %v436
      %v442 = vshll.u32 %v359, 16
      %v444 = vrot.slane %v442, 1
      %v445 = vsel %vm377, %v440, %v444
      %v446 = vshrl.u32 %v359, 16
      %v448 = vor.u32 %v446, %v444
      %v450 = vshll.u32 %v360, 16
      %v452 = vrot.slane %v450, 1
      %v453 = vsel %vm377, %v448, %v452
      %v454 = vshrl.u32 %v360, 16
      %v456 = vor.u32 %v454, %v452
      %v458 = vshll.u32 %v361, 16
      %v460 = vrot.slane %v458, 1
      %v461 = vsel %vm377, %v456, %v460
      %v462 = vshrl.u32 %v361, 16
      %v464 = vor.u32 %v462, %v460
      %v466 = vshll.u32 %v362, 16
      %v468 = vrot.slane %v466, 1
      %v469 = vsel %vm377, %v464, %v468
      %v470 = vshrl.u32 %v362, 16
      %v472 = vor.u32 %v470, %v468
      %v474 = vshll.u32 %v363, 16
      %v476 = vrot.slane %v474, 1
      %v477 = vsel %vm377, %v472, %v476
      %v478 = vshrl.u32 %v363, 16
      %v480 = vor.u32 %v478, %v476
      %v482 = vshll.u32 %v364, 16
      %v484 = vrot.slane %v482, 1
      %v485 = vsel %vm377, %v480, %v484
      %v486 = vshrl.u32 %v364, 16
      %v488 = vor.u32 %v486, %v484
      %v490 = vshll.u32 %v365, 16
      %v492 = vrot.slane %v490, 1
      %v493 = vsel %vm377, %v488, %v492
      %v494 = vshrl.u32 %v365, 16
      %v496 = vor.u32 %v494, %v492
      %v498 = vshll.u32 %v366, 16
      %v500 = vrot.slane %v498, 1
      %v501 = vsel %vm377, %v496, %v500
      %v502 = vshrl.u32 %v366, 16
      %v504 = vor.u32 %v502, %v500
      %v506 = vshll.u32 %v367, 16
      %v508 = vrot.slane %v506, 1
      %v509 = vsel %vm377, %v504, %v508
      %v510 = vshrl.u32 %v367, 16
      %v512 = vor.u32 %v510, %v508
      %v514 = vshll.u32 %v368, 16
      %v516 = vrot.slane %v514, 1
      %v517 = vsel %vm377, %v512, %v516
      %v518 = vshrl.u32 %v368, 16
      %v520 = vor.u32 %v518, %v516
      %v522 = vshll.u32 %v369, 16
      %v524 = vrot.slane %v522, 1
      %v525 = vsel %vm377, %v520, %v524
      %v526 = vshrl.u32 %v369, 16
      %v528 = vor.u32 %v526, %v524
      %v530 = vshll.u32 %v370, 16
      %v532 = vrot.slane %v530, 1
      %v533 = vsel %vm377, %v528, %v532
      %v534 = vshrl.u32 %v370, 16
      %v536 = vor.u32 %v534, %v532
      %v538 = vshll.u32 %v371, 16
      %v540 = vrot.slane %v538, 1
      %v541 = vsel %vm377, %v536, %v540
      %v542 = vshrl.u32 %v371, 16
      %v544 = vor.u32 %v542, %v540
      %v546 = vshll.u32 %v372, 16
      %v548 = vrot.slane %v546, 1
      %v549 = vsel %vm377, %v544, %v548
      %v550 = vshrl.u32 %v372, 16
      %v552 = vor.u32 %v550, %v548
      %v554 = vshll.u32 %v376, 16
      %v556 = vrot.slane %v554, 1
      %v557 = vsel %vm377, %v552, %v556
      %v558 = vshrl.u32 %v376, 16
      %v560 = vor.u32 %v558, %v556
      %561 = vrot.lane.b32.xlu0 %v389, 4
      %v562 = vpop.permute.xlu0 %561
      %563 = vrot.lane.b32.xlu0 %v397, 4
      %v564 = vpop.permute.xlu0 %563
      %565 = vrot.lane.b32.xlu0 %v405, 4
      %v566 = vpop.permute.xlu0 %565
      %567 = vrot.lane.b32.xlu0 %v413, 4
      %v568 = vpop.permute.xlu0 %567
      %569 = vrot.lane.b32.xlu0 %v421, 4
      %v570 = vpop.permute.xlu0 %569
      %571 = vrot.lane.b32.xlu0 %v429, 4
      %v572 = vpop.permute.xlu0 %571
      %573 = vrot.lane.b32.xlu0 %v437, 4
      %v574 = vpop.permute.xlu0 %573
      %575 = vrot.lane.b32.xlu0 %v445, 4
      %v576 = vpop.permute.xlu0 %575
      %577 = vrot.lane.b32.xlu0 %v453, 4
      %v578 = vpop.permute.xlu0 %577
      %579 = vrot.lane.b32.xlu0 %v461, 4
      %v580 = vpop.permute.xlu0 %579
      %581 = vrot.lane.b32.xlu0 %v469, 4
      %v582 = vpop.permute.xlu0 %581
      %583 = vrot.lane.b32.xlu0 %v477, 4
      %v584 = vpop.permute.xlu0 %583
      %585 = vrot.lane.b32.xlu0 %v485, 4
      %v586 = vpop.permute.xlu0 %585
      %587 = vrot.lane.b32.xlu0 %v493, 4
      %v588 = vpop.permute.xlu0 %587
      %589 = vrot.lane.b32.xlu0 %v501, 4
      %v590 = vpop.permute.xlu0 %589
      %591 = vrot.lane.b32.xlu0 %v509, 4
      %v592 = vpop.permute.xlu0 %591
      %593 = vrot.lane.b32.xlu0 %v517, 4
      %v594 = vpop.permute.xlu0 %593
      %595 = vrot.lane.b32.xlu0 %v525, 4
      %v596 = vpop.permute.xlu0 %595
      %597 = vrot.lane.b32.xlu0 %v533, 4
      %v598 = vpop.permute.xlu0 %597
      %599 = vrot.lane.b32.xlu0 %v541, 4
      %v600 = vpop.permute.xlu0 %599
      %601 = vrot.lane.b32.xlu0 %v549, 4
      %v602 = vpop.permute.xlu0 %601
      %603 = vrot.lane.b32.xlu0 %v557, 4
      %v604 = vpop.permute.xlu0 %603
      %605 = vrot.lane.b32.xlu0 %v560, 4
      %v606 = vpop.permute.xlu0 %605
      %vm607 = vcmask 1046528
      %v608 = vrot.slane %v351, 1
      %v609 = vrot.slane %v352, 1
      %v610 = vsel %vm607, %v608, %v609
      %v611 = vrot.slane %v353, 1
      %v612 = vsel %vm607, %v609, %v611
      %v613 = vrot.slane %v354, 1
      %v614 = vsel %vm607, %v611, %v613
      %v615 = vrot.slane %v355, 1
      %v616 = vsel %vm607, %v613, %v615
      %v617 = vrot.slane %v356, 1
      %v618 = vsel %vm607, %v615, %v617
      %v619 = vrot.slane %v357, 1
      %v620 = vsel %vm607, %v617, %v619
      %v621 = vrot.slane %v358, 1
      %v622 = vsel %vm607, %v619, %v621
      %v623 = vrot.slane %v359, 1
      %v624 = vsel %vm607, %v621, %v623
      %v625 = vrot.slane %v360, 1
      %v626 = vsel %vm607, %v623, %v625
      %v627 = vrot.slane %v361, 1
      %v628 = vsel %vm607, %v625, %v627
      %v629 = vrot.slane %v362, 1
      %v630 = vsel %vm607, %v627, %v629
      %v631 = vrot.slane %v363, 1
      %v632 = vsel %vm607, %v629, %v631
      %v633 = vrot.slane %v364, 1
      %v634 = vsel %vm607, %v631, %v633
      %v635 = vrot.slane %v365, 1
      %v636 = vsel %vm607, %v633, %v635
      %v637 = vrot.slane %v366, 1
      %v638 = vsel %vm607, %v635, %v637
      %v639 = vrot.slane %v367, 1
      %v640 = vsel %vm607, %v637, %v639
      %v641 = vrot.slane %v368, 1
      %v642 = vsel %vm607, %v639, %v641
      %v643 = vrot.slane %v369, 1
      %v644 = vsel %vm607, %v641, %v643
      %v645 = vrot.slane %v370, 1
      %v646 = vsel %vm607, %v643, %v645
      %v647 = vrot.slane %v371, 1
      %v648 = vsel %vm607, %v645, %v647
      %v649 = vrot.slane %v372, 1
      %v650 = vsel %vm607, %v647, %v649
      %v651 = vrot.slane %v376, 1
      %v652 = vsel %vm607, %v649, %v651
      %653 = vrot.lane.b32.xlu0 %v610, 8
      %v654 = vpop.permute.xlu0 %653
      %655 = vrot.lane.b32.xlu0 %v612, 8
      %v656 = vpop.permute.xlu0 %655
      %657 = vrot.lane.b32.xlu0 %v614, 8
      %v658 = vpop.permute.xlu0 %657
      %659 = vrot.lane.b32.xlu0 %v616, 8
      %v660 = vpop.permute.xlu0 %659
      %661 = vrot.lane.b32.xlu0 %v618, 8
      %v662 = vpop.permute.xlu0 %661
      %663 = vrot.lane.b32.xlu0 %v620, 8
      %v664 = vpop.permute.xlu0 %663
      %665 = vrot.lane.b32.xlu0 %v622, 8
      %v666 = vpop.permute.xlu0 %665
      %667 = vrot.lane.b32.xlu0 %v624, 8
      %v668 = vpop.permute.xlu0 %667
      %669 = vrot.lane.b32.xlu0 %v626, 8
      %v670 = vpop.permute.xlu0 %669
      %671 = vrot.lane.b32.xlu0 %v628, 8
      %v672 = vpop.permute.xlu0 %671
      %673 = vrot.lane.b32.xlu0 %v630, 8
      %v674 = vpop.permute.xlu0 %673
      %675 = vrot.lane.b32.xlu0 %v632, 8
      %v676 = vpop.permute.xlu0 %675
      %677 = vrot.lane.b32.xlu0 %v634, 8
      %v678 = vpop.permute.xlu0 %677
      %679 = vrot.lane.b32.xlu0 %v636, 8
      %v680 = vpop.permute.xlu0 %679
      %681 = vrot.lane.b32.xlu0 %v638, 8
      %v682 = vpop.permute.xlu0 %681
      %683 = vrot.lane.b32.xlu0 %v640, 8
      %v684 = vpop.permute.xlu0 %683
      %685 = vrot.lane.b32.xlu0 %v642, 8
      %v686 = vpop.permute.xlu0 %685
      %687 = vrot.lane.b32.xlu0 %v644, 8
      %v688 = vpop.permute.xlu0 %687
      %689 = vrot.lane.b32.xlu0 %v646, 8
      %v690 = vpop.permute.xlu0 %689
      %691 = vrot.lane.b32.xlu0 %v648, 8
      %v692 = vpop.permute.xlu0 %691
      %693 = vrot.lane.b32.xlu0 %v650, 8
      %v694 = vpop.permute.xlu0 %693
      %695 = vrot.lane.b32.xlu0 %v652, 8
      %v696 = vpop.permute.xlu0 %695
      %697 = vrot.lane.b32.xlu0 %v651, 8
      %v698 = vpop.permute.xlu0 %697
      %v701 = vunpack.c.l.b16 %v256
      %v702 = vunpack.c.l.b16 %v257
      %v703 = vpack.c.b16 %v702, %v701
      %vm704 = vcmask 1045504
      %v705 = vrot.slane %v352, 2
      %v706 = vrot.slane %v353, 2
      %v707 = vsel %vm704, %v705, %v706
      %v708 = vrot.slane %v354, 2
      %v709 = vsel %vm704, %v706, %v708
      %v710 = vrot.slane %v355, 2
      %v711 = vsel %vm704, %v708, %v710
      %v712 = vrot.slane %v356, 2
      %v713 = vsel %vm704, %v710, %v712
      %v714 = vrot.slane %v357, 2
      %v715 = vsel %vm704, %v712, %v714
      %v716 = vrot.slane %v358, 2
      %v717 = vsel %vm704, %v714, %v716
      %v718 = vrot.slane %v359, 2
      %v719 = vsel %vm704, %v716, %v718
      %v720 = vrot.slane %v360, 2
      %v721 = vsel %vm704, %v718, %v720
      %v722 = vrot.slane %v361, 2
      %v723 = vsel %vm704, %v720, %v722
      %v724 = vrot.slane %v362, 2
      %v725 = vsel %vm704, %v722, %v724
      %v726 = vrot.slane %v363, 2
      %v727 = vsel %vm704, %v724, %v726
      %v728 = vrot.slane %v364, 2
      %v729 = vsel %vm704, %v726, %v728
      %v730 = vrot.slane %v365, 2
      %v731 = vsel %vm704, %v728, %v730
      %v732 = vrot.slane %v366, 2
      %v733 = vsel %vm704, %v730, %v732
      %v734 = vrot.slane %v367, 2
      %v735 = vsel %vm704, %v732, %v734
      %v736 = vrot.slane %v368, 2
      %v737 = vsel %vm704, %v734, %v736
      %v738 = vrot.slane %v369, 2
      %v739 = vsel %vm704, %v736, %v738
      %v740 = vrot.slane %v370, 2
      %v741 = vsel %vm704, %v738, %v740
      %v742 = vrot.slane %v371, 2
      %v743 = vsel %vm704, %v740, %v742
      %v744 = vrot.slane %v372, 2
      %v745 = vsel %vm704, %v742, %v744
      %v746 = vrot.slane %v376, 2
      %v747 = vsel %vm704, %v744, %v746
      %v748 = vrot.slane %v703, 2
      %v749 = vsel %vm704, %v746, %v748
      %750 = vrot.lane.b32.xlu0 %v707, 12
      %v751 = vpop.permute.xlu0 %750
      %752 = vrot.lane.b32.xlu0 %v709, 12
      %v753 = vpop.permute.xlu0 %752
      %754 = vrot.lane.b32.xlu0 %v711, 12
      %v755 = vpop.permute.xlu0 %754
      %756 = vrot.lane.b32.xlu0 %v713, 12
      %v757 = vpop.permute.xlu0 %756
      %758 = vrot.lane.b32.xlu0 %v715, 12
      %v759 = vpop.permute.xlu0 %758
      %760 = vrot.lane.b32.xlu0 %v717, 12
      %v761 = vpop.permute.xlu0 %760
      %762 = vrot.lane.b32.xlu0 %v719, 12
      %v763 = vpop.permute.xlu0 %762
      %764 = vrot.lane.b32.xlu0 %v721, 12
      %v765 = vpop.permute.xlu0 %764
      %766 = vrot.lane.b32.xlu0 %v723, 12
      %v767 = vpop.permute.xlu0 %766
      %768 = vrot.lane.b32.xlu0 %v725, 12
      %v769 = vpop.permute.xlu0 %768
      %770 = vrot.lane.b32.xlu0 %v727, 12
      %v771 = vpop.permute.xlu0 %770
      %772 = vrot.lane.b32.xlu0 %v729, 12
      %v773 = vpop.permute.xlu0 %772
      %774 = vrot.lane.b32.xlu0 %v731, 12
      %v775 = vpop.permute.xlu0 %774
      %776 = vrot.lane.b32.xlu0 %v733, 12
      %v777 = vpop.permute.xlu0 %776
      %778 = vrot.lane.b32.xlu0 %v735, 12
      %v779 = vpop.permute.xlu0 %778
      %780 = vrot.lane.b32.xlu0 %v737, 12
      %v781 = vpop.permute.xlu0 %780
      %782 = vrot.lane.b32.xlu0 %v739, 12
      %v783 = vpop.permute.xlu0 %782
      %784 = vrot.lane.b32.xlu0 %v741, 12
      %v785 = vpop.permute.xlu0 %784
      %786 = vrot.lane.b32.xlu0 %v743, 12
      %v787 = vpop.permute.xlu0 %786
      %788 = vrot.lane.b32.xlu0 %v745, 12
      %v789 = vpop.permute.xlu0 %788
      %790 = vrot.lane.b32.xlu0 %v747, 12
      %v791 = vpop.permute.xlu0 %790
      %792 = vrot.lane.b32.xlu0 %v749, 12
      %v793 = vpop.permute.xlu0 %792
      %794 = vrot.lane.b32.xlu0 %v748, 12
      %v795 = vpop.permute.xlu0 %794
      %vm796 = vsmask.f32 5376
      %v797 = vrot.slane %v390, 2
      %v798 = vrot.slane %v386, 3
      %v799 = vor.u32 %v797, %v798
      %v800 = vrot.slane %v398, 2
      %v801 = vrot.slane %v394, 3
      %v802 = vor.u32 %v800, %v801
      %v803 = vsel %vm796, %v799, %v802
      %v804 = vrot.slane %v406, 2
      %v805 = vrot.slane %v402, 3
      %v806 = vor.u32 %v804, %v805
      %v807 = vsel %vm796, %v802, %v806
      %v808 = vrot.slane %v414, 2
      %v809 = vrot.slane %v410, 3
      %v810 = vor.u32 %v808, %v809
      %v811 = vsel %vm796, %v806, %v810
      %v812 = vrot.slane %v422, 2
      %v813 = vrot.slane %v418, 3
      %v814 = vor.u32 %v812, %v813
      %v815 = vsel %vm796, %v810, %v814
      %v816 = vrot.slane %v430, 2
      %v817 = vrot.slane %v426, 3
      %v818 = vor.u32 %v816, %v817
      %v819 = vsel %vm796, %v814, %v818
      %v820 = vrot.slane %v438, 2
      %v821 = vrot.slane %v434, 3
      %v822 = vor.u32 %v820, %v821
      %v823 = vsel %vm796, %v818, %v822
      %v824 = vrot.slane %v446, 2
      %v825 = vrot.slane %v442, 3
      %v826 = vor.u32 %v824, %v825
      %v827 = vsel %vm796, %v822, %v826
      %v828 = vrot.slane %v454, 2
      %v829 = vrot.slane %v450, 3
      %v830 = vor.u32 %v828, %v829
      %v831 = vsel %vm796, %v826, %v830
      %v832 = vrot.slane %v462, 2
      %v833 = vrot.slane %v458, 3
      %v834 = vor.u32 %v832, %v833
      %v835 = vsel %vm796, %v830, %v834
      %v836 = vrot.slane %v470, 2
      %v837 = vrot.slane %v466, 3
      %v838 = vor.u32 %v836, %v837
      %v839 = vsel %vm796, %v834, %v838
      %v840 = vrot.slane %v478, 2
      %v841 = vrot.slane %v474, 3
      %v842 = vor.u32 %v840, %v841
      %v843 = vsel %vm796, %v838, %v842
      %v844 = vrot.slane %v486, 2
      %v845 = vrot.slane %v482, 3
      %v846 = vor.u32 %v844, %v845
      %v847 = vsel %vm796, %v842, %v846
      %v848 = vrot.slane %v494, 2
      %v849 = vrot.slane %v490, 3
      %v850 = vor.u32 %v848, %v849
      %v851 = vsel %vm796, %v846, %v850
      %v852 = vrot.slane %v502, 2
      %v853 = vrot.slane %v498, 3
      %v854 = vor.u32 %v852, %v853
      %v855 = vsel %vm796, %v850, %v854
      %v856 = vrot.slane %v510, 2
      %v857 = vrot.slane %v506, 3
      %v858 = vor.u32 %v856, %v857
      %v859 = vsel %vm796, %v854, %v858
      %v860 = vrot.slane %v518, 2
      %v861 = vrot.slane %v514, 3
      %v862 = vor.u32 %v860, %v861
      %v863 = vsel %vm796, %v858, %v862
      %v864 = vrot.slane %v526, 2
      %v865 = vrot.slane %v522, 3
      %v866 = vor.u32 %v864, %v865
      %v867 = vsel %vm796, %v862, %v866
      %v868 = vrot.slane %v534, 2
      %v869 = vrot.slane %v530, 3
      %v870 = vor.u32 %v868, %v869
      %v871 = vsel %vm796, %v866, %v870
      %v872 = vrot.slane %v542, 2
      %v873 = vrot.slane %v538, 3
      %v874 = vor.u32 %v872, %v873
      %v875 = vsel %vm796, %v870, %v874
      %v876 = vrot.slane %v550, 2
      %v877 = vrot.slane %v546, 3
      %v878 = vor.u32 %v876, %v877
      %v879 = vsel %vm796, %v874, %v878
      %v880 = vrot.slane %v558, 2
      %v881 = vrot.slane %v554, 3
      %v882 = vor.u32 %v880, %v881
      %v883 = vsel %vm796, %v878, %v882
      %v885 = vshrl.u32 %v703, 16
      %v887 = vrot.slane %v885, 2
      %v888 = vshll.u32 %v703, 16
      %v890 = vrot.slane %v888, 3
      %v891 = vor.u32 %v887, %v890
      %v892 = vsel %vm796, %v882, %v891
      %893 = vrot.lane.b32.xlu0 %v803, 16
      %v894 = vpop.permute.xlu0 %893
      %895 = vrot.lane.b32.xlu0 %v807, 16
      %v896 = vpop.permute.xlu0 %895
      %897 = vrot.lane.b32.xlu0 %v811, 16
      %v898 = vpop.permute.xlu0 %897
      %899 = vrot.lane.b32.xlu0 %v815, 16
      %v900 = vpop.permute.xlu0 %899
      %901 = vrot.lane.b32.xlu0 %v819, 16
      %v902 = vpop.permute.xlu0 %901
      %903 = vrot.lane.b32.xlu0 %v823, 16
      %v904 = vpop.permute.xlu0 %903
      %905 = vrot.lane.b32.xlu0 %v827, 16
      %v906 = vpop.permute.xlu0 %905
      %907 = vrot.lane.b32.xlu0 %v831, 16
      %v908 = vpop.permute.xlu0 %907
      %909 = vrot.lane.b32.xlu0 %v835, 16
      %v910 = vpop.permute.xlu0 %909
      %911 = vrot.lane.b32.xlu0 %v839, 16
      %v912 = vpop.permute.xlu0 %911
      %913 = vrot.lane.b32.xlu0 %v843, 16
      %v914 = vpop.permute.xlu0 %913
      %915 = vrot.lane.b32.xlu0 %v847, 16
      %v916 = vpop.permute.xlu0 %915
      %917 = vrot.lane.b32.xlu0 %v851, 16
      %v918 = vpop.permute.xlu0 %917
      %919 = vrot.lane.b32.xlu0 %v855, 16
      %v920 = vpop.permute.xlu0 %919
      %921 = vrot.lane.b32.xlu0 %v859, 16
      %v922 = vpop.permute.xlu0 %921
      %923 = vrot.lane.b32.xlu0 %v863, 16
      %v924 = vpop.permute.xlu0 %923
      %925 = vrot.lane.b32.xlu0 %v867, 16
      %v926 = vpop.permute.xlu0 %925
      %927 = vrot.lane.b32.xlu0 %v871, 16
      %v928 = vpop.permute.xlu0 %927
      %929 = vrot.lane.b32.xlu0 %v875, 16
      %v930 = vpop.permute.xlu0 %929
      %931 = vrot.lane.b32.xlu0 %v879, 16
      %v932 = vpop.permute.xlu0 %931
      %933 = vrot.lane.b32.xlu0 %v883, 16
      %v934 = vpop.permute.xlu0 %933
      %935 = vrot.lane.b32.xlu0 %v892, 16
      %v936 = vpop.permute.xlu0 %935
      %937 = vrot.lane.b32.xlu0 %v891, 16
      %v938 = vpop.permute.xlu0 %937
      %vm939 = vcmask 1044480
      %v940 = vrot.slane %v352, 3
      %v941 = vrot.slane %v353, 3
      %v942 = vsel %vm939, %v940, %v941
      %v943 = vrot.slane %v354, 3
      %v944 = vsel %vm939, %v941, %v943
      %v945 = vrot.slane %v355, 3
      %v946 = vsel %vm939, %v943, %v945
      %v947 = vrot.slane %v356, 3
      %v948 = vsel %vm939, %v945, %v947
      %v949 = vrot.slane %v357, 3
      %v950 = vsel %vm939, %v947, %v949
      %v951 = vrot.slane %v358, 3
      %v952 = vsel %vm939, %v949, %v951
      %v953 = vrot.slane %v359, 3
      %v954 = vsel %vm939, %v951, %v953
      %v955 = vrot.slane %v360, 3
      %v956 = vsel %vm939, %v953, %v955
      %v957 = vrot.slane %v361, 3
      %v958 = vsel %vm939, %v955, %v957
      %v959 = vrot.slane %v362, 3
      %v960 = vsel %vm939, %v957, %v959
      %v961 = vrot.slane %v363, 3
      %v962 = vsel %vm939, %v959, %v961
      %v963 = vrot.slane %v364, 3
      %v964 = vsel %vm939, %v961, %v963
      %v965 = vrot.slane %v365, 3
      %v966 = vsel %vm939, %v963, %v965
      %v967 = vrot.slane %v366, 3
      %v968 = vsel %vm939, %v965, %v967
      %v969 = vrot.slane %v367, 3
      %v970 = vsel %vm939, %v967, %v969
      %v971 = vrot.slane %v368, 3
      %v972 = vsel %vm939, %v969, %v971
      %v973 = vrot.slane %v369, 3
      %v974 = vsel %vm939, %v971, %v973
      %v975 = vrot.slane %v370, 3
      %v976 = vsel %vm939, %v973, %v975
      %v977 = vrot.slane %v371, 3
      %v978 = vsel %vm939, %v975, %v977
      %v979 = vrot.slane %v372, 3
      %v980 = vsel %vm939, %v977, %v979
      %v981 = vrot.slane %v376, 3
      %v982 = vsel %vm939, %v979, %v981
      %v983 = vrot.slane %v703, 3
      %v984 = vsel %vm939, %v981, %v983
      %985 = vrot.lane.b32.xlu0 %v942, 20
      %v986 = vpop.permute.xlu0 %985
      %987 = vrot.lane.b32.xlu0 %v944, 20
      %v988 = vpop.permute.xlu0 %987
      %989 = vrot.lane.b32.xlu0 %v946, 20
      %v990 = vpop.permute.xlu0 %989
      %991 = vrot.lane.b32.xlu0 %v948, 20
      %v992 = vpop.permute.xlu0 %991
      %993 = vrot.lane.b32.xlu0 %v950, 20
      %v994 = vpop.permute.xlu0 %993
      %995 = vrot.lane.b32.xlu0 %v952, 20
      %v996 = vpop.permute.xlu0 %995
      %997 = vrot.lane.b32.xlu0 %v954, 20
      %v998 = vpop.permute.xlu0 %997
      %999 = vrot.lane.b32.xlu0 %v956, 20
      %v1000 = vpop.permute.xlu0 %999
      %1001 = vrot.lane.b32.xlu0 %v958, 20
      %v1002 = vpop.permute.xlu0 %1001
      %1003 = vrot.lane.b32.xlu0 %v960, 20
      %v1004 = vpop.permute.xlu0 %1003
      %1005 = vrot.lane.b32.xlu0 %v962, 20
      %v1006 = vpop.permute.xlu0 %1005
      %1007 = vrot.lane.b32.xlu0 %v964, 20
      %v1008 = vpop.permute.xlu0 %1007
      %1009 = vrot.lane.b32.xlu0 %v966, 20
      %v1010 = vpop.permute.xlu0 %1009
      %1011 = vrot.lane.b32.xlu0 %v968, 20
      %v1012 = vpop.permute.xlu0 %1011
      %1013 = vrot.lane.b32.xlu0 %v970, 20
      %v1014 = vpop.permute.xlu0 %1013
      %1015 = vrot.lane.b32.xlu0 %v972, 20
      %v1016 = vpop.permute.xlu0 %1015
      %1017 = vrot.lane.b32.xlu0 %v974, 20
      %v1018 = vpop.permute.xlu0 %1017
      %1019 = vrot.lane.b32.xlu0 %v976, 20
      %v1020 = vpop.permute.xlu0 %1019
      %1021 = vrot.lane.b32.xlu0 %v978, 20
      %v1022 = vpop.permute.xlu0 %1021
      %1023 = vrot.lane.b32.xlu0 %v980, 20
      %v1024 = vpop.permute.xlu0 %1023
      %1025 = vrot.lane.b32.xlu0 %v982, 20
      %v1026 = vpop.permute.xlu0 %1025
      %1027 = vrot.lane.b32.xlu0 %v984, 20
      %v1028 = vpop.permute.xlu0 %1027
      %1029 = vrot.lane.b32.xlu0 %v983, 20
      %v1030 = vpop.permute.xlu0 %1029
      %v1033 = vunpack.c.l.b16 %v258
      %v1034 = vunpack.c.l.b16 %v259
      %v1035 = vpack.c.b16 %v312, %v311
      %v1036 = vpack.c.b16 %v314, %v313
      %v1037 = vpack.c.b16 %v316, %v315
      %v1038 = vpack.c.b16 %v318, %v317
      %v1039 = vpack.c.b16 %v320, %v319
      %v1040 = vpack.c.b16 %v322, %v321
      %v1041 = vpack.c.b16 %v324, %v323
      %v1042 = vpack.c.b16 %v326, %v325
      %v1043 = vpack.c.b16 %v328, %v327
      %v1044 = vpack.c.b16 %v330, %v329
      %v1045 = vpack.c.b16 %v332, %v331
      %v1046 = vpack.c.b16 %v334, %v333
      %v1047 = vpack.c.b16 %v336, %v335
      %v1048 = vpack.c.b16 %v338, %v337
      %v1049 = vpack.c.b16 %v340, %v339
      %v1050 = vpack.c.b16 %v342, %v341
      %v1051 = vpack.c.b16 %v344, %v343
      %v1052 = vpack.c.b16 %v346, %v345
      %v1053 = vpack.c.b16 %v348, %v347
      %v1054 = vpack.c.b16 %v350, %v349
      %v1055 = vpack.c.b16 %v701, %v375
      %v1056 = vpack.c.b16 %v1033, %v702
      %v1057 = vpack.c.b16 %v1034, %v1034
      %1058 = vrot.lane.b32.xlu0 %v1035, 24
      %v1059 = vpop.permute.xlu0 %1058
      %1060 = vrot.lane.b32.xlu0 %v1036, 24
      %v1061 = vpop.permute.xlu0 %1060
      %1062 = vrot.lane.b32.xlu0 %v1037, 24
      %v1063 = vpop.permute.xlu0 %1062
      %1064 = vrot.lane.b32.xlu0 %v1038, 24
      %v1065 = vpop.permute.xlu0 %1064
      %1066 = vrot.lane.b32.xlu0 %v1039, 24
      %v1067 = vpop.permute.xlu0 %1066
      %1068 = vrot.lane.b32.xlu0 %v1040, 24
      %v1069 = vpop.permute.xlu0 %1068
      %1070 = vrot.lane.b32.xlu0 %v1041, 24
      %v1071 = vpop.permute.xlu0 %1070
      %1072 = vrot.lane.b32.xlu0 %v1042, 24
      %v1073 = vpop.permute.xlu0 %1072
      %1074 = vrot.lane.b32.xlu0 %v1043, 24
      %v1075 = vpop.permute.xlu0 %1074
      %1076 = vrot.lane.b32.xlu0 %v1044, 24
      %v1077 = vpop.permute.xlu0 %1076
      %1078 = vrot.lane.b32.xlu0 %v1045, 24
      %v1079 = vpop.permute.xlu0 %1078
      %1080 = vrot.lane.b32.xlu0 %v1046, 24
      %v1081 = vpop.permute.xlu0 %1080
      %1082 = vrot.lane.b32.xlu0 %v1047, 24
      %v1083 = vpop.permute.xlu0 %1082
      %1084 = vrot.lane.b32.xlu0 %v1048, 24
      %v1085 = vpop.permute.xlu0 %1084
      %1086 = vrot.lane.b32.xlu0 %v1049, 24
      %v1087 = vpop.permute.xlu0 %1086
      %1088 = vrot.lane.b32.xlu0 %v1050, 24
      %v1089 = vpop.permute.xlu0 %1088
      %1090 = vrot.lane.b32.xlu0 %v1051, 24
      %v1091 = vpop.permute.xlu0 %1090
      %1092 = vrot.lane.b32.xlu0 %v1052, 24
      %v1093 = vpop.permute.xlu0 %1092
      %1094 = vrot.lane.b32.xlu0 %v1053, 24
      %v1095 = vpop.permute.xlu0 %1094
      %1096 = vrot.lane.b32.xlu0 %v1054, 24
      %v1097 = vpop.permute.xlu0 %1096
      %1098 = vrot.lane.b32.xlu0 %v1055, 24
      %v1099 = vpop.permute.xlu0 %1098
      %1100 = vrot.lane.b32.xlu0 %v1056, 24
      %v1101 = vpop.permute.xlu0 %1100
      %1102 = vrot.lane.b32.xlu0 %v1057, 24
      %v1103 = vpop.permute.xlu0 %1102
      %v1105 = vunpack.c.l.b16 %v260
      %v1106 = vpack.c.b16 %v1105, %v1034
      %v1108 = vshrl.u32 %v1035, 16
      %v1110 = vshll.u32 %v1035, 16
      %v1112 = vrot.slane %v1110, 1
      %v1113 = vor.u32 %v1108, %v1112
      %v1115 = vshll.u32 %v1036, 16
      %v1117 = vrot.slane %v1115, 1
      %v1118 = vsel %vm377, %v1113, %v1117
      %v1119 = vshrl.u32 %v1036, 16
      %v1121 = vor.u32 %v1119, %v1117
      %v1123 = vshll.u32 %v1037, 16
      %v1125 = vrot.slane %v1123, 1
      %v1126 = vsel %vm377, %v1121, %v1125
      %v1127 = vshrl.u32 %v1037, 16
      %v1129 = vor.u32 %v1127, %v1125
      %v1131 = vshll.u32 %v1038, 16
      %v1133 = vrot.slane %v1131, 1
      %v1134 = vsel %vm377, %v1129, %v1133
      %v1135 = vshrl.u32 %v1038, 16
      %v1137 = vor.u32 %v1135, %v1133
      %v1139 = vshll.u32 %v1039, 16
      %v1141 = vrot.slane %v1139, 1
      %v1142 = vsel %vm377, %v1137, %v1141
      %v1143 = vshrl.u32 %v1039, 16
      %v1145 = vor.u32 %v1143, %v1141
      %v1147 = vshll.u32 %v1040, 16
      %v1149 = vrot.slane %v1147, 1
      %v1150 = vsel %vm377, %v1145, %v1149
      %v1151 = vshrl.u32 %v1040, 16
      %v1153 = vor.u32 %v1151, %v1149
      %v1155 = vshll.u32 %v1041, 16
      %v1157 = vrot.slane %v1155, 1
      %v1158 = vsel %vm377, %v1153, %v1157
      %v1159 = vshrl.u32 %v1041, 16
      %v1161 = vor.u32 %v1159, %v1157
      %v1163 = vshll.u32 %v1042, 16
      %v1165 = vrot.slane %v1163, 1
      %v1166 = vsel %vm377, %v1161, %v1165
      %v1167 = vshrl.u32 %v1042, 16
      %v1169 = vor.u32 %v1167, %v1165
      %v1171 = vshll.u32 %v1043, 16
      %v1173 = vrot.slane %v1171, 1
      %v1174 = vsel %vm377, %v1169, %v1173
      %v1175 = vshrl.u32 %v1043, 16
      %v1177 = vor.u32 %v1175, %v1173
      %v1179 = vshll.u32 %v1044, 16
      %v1181 = vrot.slane %v1179, 1
      %v1182 = vsel %vm377, %v1177, %v1181
      %v1183 = vshrl.u32 %v1044, 16
      %v1185 = vor.u32 %v1183, %v1181
      %v1187 = vshll.u32 %v1045, 16
      %v1189 = vrot.slane %v1187, 1
      %v1190 = vsel %vm377, %v1185, %v1189
      %v1191 = vshrl.u32 %v1045, 16
      %v1193 = vor.u32 %v1191, %v1189
      %v1195 = vshll.u32 %v1046, 16
      %v1197 = vrot.slane %v1195, 1
      %v1198 = vsel %vm377, %v1193, %v1197
      %v1199 = vshrl.u32 %v1046, 16
      %v1201 = vor.u32 %v1199, %v1197
      %v1203 = vshll.u32 %v1047, 16
      %v1205 = vrot.slane %v1203, 1
      %v1206 = vsel %vm377, %v1201, %v1205
      %v1207 = vshrl.u32 %v1047, 16
      %v1209 = vor.u32 %v1207, %v1205
      %v1211 = vshll.u32 %v1048, 16
      %v1213 = vrot.slane %v1211, 1
      %v1214 = vsel %vm377, %v1209, %v1213
      %v1215 = vshrl.u32 %v1048, 16
      %v1217 = vor.u32 %v1215, %v1213
      %v1219 = vshll.u32 %v1049, 16
      %v1221 = vrot.slane %v1219, 1
      %v1222 = vsel %vm377, %v1217, %v1221
      %v1223 = vshrl.u32 %v1049, 16
      %v1225 = vor.u32 %v1223, %v1221
      %v1227 = vshll.u32 %v1050, 16
      %v1229 = vrot.slane %v1227, 1
      %v1230 = vsel %vm377, %v1225, %v1229
      %v1231 = vshrl.u32 %v1050, 16
      %v1233 = vor.u32 %v1231, %v1229
      %v1235 = vshll.u32 %v1051, 16
      %v1237 = vrot.slane %v1235, 1
      %v1238 = vsel %vm377, %v1233, %v1237
      %v1239 = vshrl.u32 %v1051, 16
      %v1241 = vor.u32 %v1239, %v1237
      %v1243 = vshll.u32 %v1052, 16
      %v1245 = vrot.slane %v1243, 1
      %v1246 = vsel %vm377, %v1241, %v1245
      %v1247 = vshrl.u32 %v1052, 16
      %v1249 = vor.u32 %v1247, %v1245
      %v1251 = vshll.u32 %v1053, 16
      %v1253 = vrot.slane %v1251, 1
      %v1254 = vsel %vm377, %v1249, %v1253
      %v1255 = vshrl.u32 %v1053, 16
      %v1257 = vor.u32 %v1255, %v1253
      %v1259 = vshll.u32 %v1054, 16
      %v1261 = vrot.slane %v1259, 1
      %v1262 = vsel %vm377, %v1257, %v1261
      %v1263 = vshrl.u32 %v1054, 16
      %v1265 = vor.u32 %v1263, %v1261
      %v1267 = vshll.u32 %v1055, 16
      %v1269 = vrot.slane %v1267, 1
      %v1270 = vsel %vm377, %v1265, %v1269
      %v1271 = vshrl.u32 %v1055, 16
      %v1273 = vor.u32 %v1271, %v1269
      %v1275 = vshll.u32 %v1056, 16
      %v1277 = vrot.slane %v1275, 1
      %v1278 = vsel %vm377, %v1273, %v1277
      %v1279 = vshrl.u32 %v1056, 16
      %v1281 = vor.u32 %v1279, %v1277
      %v1283 = vshll.u32 %v1106, 16
      %v1285 = vrot.slane %v1283, 1
      %v1286 = vsel %vm377, %v1281, %v1285
      %v1287 = vshrl.u32 %v1106, 16
      %v1289 = vor.u32 %v1287, %v1285
      %1290 = vrot.lane.b32.xlu0 %v1118, 28
      %v1291 = vpop.permute.xlu0 %1290
      %1292 = vrot.lane.b32.xlu0 %v1126, 28
      %v1293 = vpop.permute.xlu0 %1292
      %1294 = vrot.lane.b32.xlu0 %v1134, 28
      %v1295 = vpop.permute.xlu0 %1294
      %1296 = vrot.lane.b32.xlu0 %v1142, 28
      %v1297 = vpop.permute.xlu0 %1296
      %1298 = vrot.lane.b32.xlu0 %v1150, 28
      %v1299 = vpop.permute.xlu0 %1298
      %1300 = vrot.lane.b32.xlu0 %v1158, 28
      %v1301 = vpop.permute.xlu0 %1300
      %1302 = vrot.lane.b32.xlu0 %v1166, 28
      %v1303 = vpop.permute.xlu0 %1302
      %1304 = vrot.lane.b32.xlu0 %v1174, 28
      %v1305 = vpop.permute.xlu0 %1304
      %1306 = vrot.lane.b32.xlu0 %v1182, 28
      %v1307 = vpop.permute.xlu0 %1306
      %1308 = vrot.lane.b32.xlu0 %v1190, 28
      %v1309 = vpop.permute.xlu0 %1308
      %1310 = vrot.lane.b32.xlu0 %v1198, 28
      %v1311 = vpop.permute.xlu0 %1310
      %1312 = vrot.lane.b32.xlu0 %v1206, 28
      %v1313 = vpop.permute.xlu0 %1312
      %1314 = vrot.lane.b32.xlu0 %v1214, 28
      %v1315 = vpop.permute.xlu0 %1314
      %1316 = vrot.lane.b32.xlu0 %v1222, 28
      %v1317 = vpop.permute.xlu0 %1316
      %1318 = vrot.lane.b32.xlu0 %v1230, 28
      %v1319 = vpop.permute.xlu0 %1318
      %1320 = vrot.lane.b32.xlu0 %v1238, 28
      %v1321 = vpop.permute.xlu0 %1320
      %1322 = vrot.lane.b32.xlu0 %v1246, 28
      %v1323 = vpop.permute.xlu0 %1322
      %1324 = vrot.lane.b32.xlu0 %v1254, 28
      %v1325 = vpop.permute.xlu0 %1324
      %1326 = vrot.lane.b32.xlu0 %v1262, 28
      %v1327 = vpop.permute.xlu0 %1326
      %1328 = vrot.lane.b32.xlu0 %v1270, 28
      %v1329 = vpop.permute.xlu0 %1328
      %1330 = vrot.lane.b32.xlu0 %v1278, 28
      %v1331 = vpop.permute.xlu0 %1330
      %1332 = vrot.lane.b32.xlu0 %v1286, 28
      %v1333 = vpop.permute.xlu0 %1332
      %1334 = vrot.lane.b32.xlu0 %v1289, 28
      %v1335 = vpop.permute.xlu0 %1334
      %v1336 = vrot.slane %v1035, 1
      %v1337 = vrot.slane %v1036, 1
      %v1338 = vsel %vm607, %v1336, %v1337
      %v1339 = vrot.slane %v1037, 1
      %v1340 = vsel %vm607, %v1337, %v1339
      %v1341 = vrot.slane %v1038, 1
      %v1342 = vsel %vm607, %v1339, %v1341
      %v1343 = vrot.slane %v1039, 1
      %v1344 = vsel %vm607, %v1341, %v1343
      %v1345 = vrot.slane %v1040, 1
      %v1346 = vsel %vm607, %v1343, %v1345
      %v1347 = vrot.slane %v1041, 1
      %v1348 = vsel %vm607, %v1345, %v1347
      %v1349 = vrot.slane %v1042, 1
      %v1350 = vsel %vm607, %v1347, %v1349
      %v1351 = vrot.slane %v1043, 1
      %v1352 = vsel %vm607, %v1349, %v1351
      %v1353 = vrot.slane %v1044, 1
      %v1354 = vsel %vm607, %v1351, %v1353
      %v1355 = vrot.slane %v1045, 1
      %v1356 = vsel %vm607, %v1353, %v1355
      %v1357 = vrot.slane %v1046, 1
      %v1358 = vsel %vm607, %v1355, %v1357
      %v1359 = vrot.slane %v1047, 1
      %v1360 = vsel %vm607, %v1357, %v1359
      %v1361 = vrot.slane %v1048, 1
      %v1362 = vsel %vm607, %v1359, %v1361
      %v1363 = vrot.slane %v1049, 1
      %v1364 = vsel %vm607, %v1361, %v1363
      %v1365 = vrot.slane %v1050, 1
      %v1366 = vsel %vm607, %v1363, %v1365
      %v1367 = vrot.slane %v1051, 1
      %v1368 = vsel %vm607, %v1365, %v1367
      %v1369 = vrot.slane %v1052, 1
      %v1370 = vsel %vm607, %v1367, %v1369
      %v1371 = vrot.slane %v1053, 1
      %v1372 = vsel %vm607, %v1369, %v1371
      %v1373 = vrot.slane %v1054, 1
      %v1374 = vsel %vm607, %v1371, %v1373
      %v1375 = vrot.slane %v1055, 1
      %v1376 = vsel %vm607, %v1373, %v1375
      %v1377 = vrot.slane %v1056, 1
      %v1378 = vsel %vm607, %v1375, %v1377
      %v1379 = vrot.slane %v1106, 1
      %v1380 = vsel %vm607, %v1377, %v1379
      %1381 = vrot.lane.b32.xlu0 %v1338, 32
      %v1382 = vpop.permute.xlu0 %1381
      %1383 = vrot.lane.b32.xlu0 %v1340, 32
      %v1384 = vpop.permute.xlu0 %1383
      %1385 = vrot.lane.b32.xlu0 %v1342, 32
      %v1386 = vpop.permute.xlu0 %1385
      %1387 = vrot.lane.b32.xlu0 %v1344, 32
      %v1388 = vpop.permute.xlu0 %1387
      %1389 = vrot.lane.b32.xlu0 %v1346, 32
      %v1390 = vpop.permute.xlu0 %1389
      %1391 = vrot.lane.b32.xlu0 %v1348, 32
      %v1392 = vpop.permute.xlu0 %1391
      %1393 = vrot.lane.b32.xlu0 %v1350, 32
      %v1394 = vpop.permute.xlu0 %1393
      %1395 = vrot.lane.b32.xlu0 %v1352, 32
      %v1396 = vpop.permute.xlu0 %1395
      %1397 = vrot.lane.b32.xlu0 %v1354, 32
      %v1398 = vpop.permute.xlu0 %1397
      %1399 = vrot.lane.b32.xlu0 %v1356, 32
      %v1400 = vpop.permute.xlu0 %1399
      %1401 = vrot.lane.b32.xlu0 %v1358, 32
      %v1402 = vpop.permute.xlu0 %1401
      %1403 = vrot.lane.b32.xlu0 %v1360, 32
      %v1404 = vpop.permute.xlu0 %1403
      %1405 = vrot.lane.b32.xlu0 %v1362, 32
      %v1406 = vpop.permute.xlu0 %1405
      %1407 = vrot.lane.b32.xlu0 %v1364, 32
      %v1408 = vpop.permute.xlu0 %1407
      %1409 = vrot.lane.b32.xlu0 %v1366, 32
      %v1410 = vpop.permute.xlu0 %1409
      %1411 = vrot.lane.b32.xlu0 %v1368, 32
      %v1412 = vpop.permute.xlu0 %1411
      %1413 = vrot.lane.b32.xlu0 %v1370, 32
      %v1414 = vpop.permute.xlu0 %1413
      %1415 = vrot.lane.b32.xlu0 %v1372, 32
      %v1416 = vpop.permute.xlu0 %1415
      %1417 = vrot.lane.b32.xlu0 %v1374, 32
      %v1418 = vpop.permute.xlu0 %1417
      %1419 = vrot.lane.b32.xlu0 %v1376, 32
      %v1420 = vpop.permute.xlu0 %1419
      %1421 = vrot.lane.b32.xlu0 %v1378, 32
      %v1422 = vpop.permute.xlu0 %1421
      %1423 = vrot.lane.b32.xlu0 %v1380, 32
      %v1424 = vpop.permute.xlu0 %1423
      %1425 = vrot.lane.b32.xlu0 %v1379, 32
      %v1426 = vpop.permute.xlu0 %1425
      %vm1427 = vcmask 31744
      %v1429 = vsel %vm1427, %v351, %v562
      %v1431 = vsel %vm1427, %v352, %v564
      %v1433 = vsel %vm1427, %v353, %v566
      %v1435 = vsel %vm1427, %v354, %v568
      %v1437 = vsel %vm1427, %v355, %v570
      %v1439 = vsel %vm1427, %v356, %v572
      %v1441 = vsel %vm1427, %v357, %v574
      %v1443 = vsel %vm1427, %v358, %v576
      %v1445 = vsel %vm1427, %v359, %v578
      %v1447 = vsel %vm1427, %v360, %v580
      %v1449 = vsel %vm1427, %v361, %v582
      %v1451 = vsel %vm1427, %v362, %v584
      %v1453 = vsel %vm1427, %v363, %v586
      %v1455 = vsel %vm1427, %v364, %v588
      %v1457 = vsel %vm1427, %v365, %v590
      %v1459 = vsel %vm1427, %v366, %v592
      %v1461 = vsel %vm1427, %v367, %v594
      %v1463 = vsel %vm1427, %v368, %v596
      %v1465 = vsel %vm1427, %v369, %v598
      %v1467 = vsel %vm1427, %v370, %v600
      %v1469 = vsel %vm1427, %v371, %v602
      %v1471 = vsel %vm1427, %v372, %v604
      %v1474 = vsel %vm1427, %v373, %v606
      %vm1475 = vcmask 64512
      %v1477 = vsel %vm1475, %v1429, %v654
      %v1479 = vsel %vm1475, %v1431, %v656
      %v1481 = vsel %vm1475, %v1433, %v658
      %v1483 = vsel %vm1475, %v1435, %v660
      %v1485 = vsel %vm1475, %v1437, %v662
      %v1487 = vsel %vm1475, %v1439, %v664
      %v1489 = vsel %vm1475, %v1441, %v666
      %v1491 = vsel %vm1475, %v1443, %v668
      %v1493 = vsel %vm1475, %v1445, %v670
      %v1495 = vsel %vm1475, %v1447, %v672
      %v1497 = vsel %vm1475, %v1449, %v674
      %v1499 = vsel %vm1475, %v1451, %v676
      %v1501 = vsel %vm1475, %v1453, %v678
      %v1503 = vsel %vm1475, %v1455, %v680
      %v1505 = vsel %vm1475, %v1457, %v682
      %v1507 = vsel %vm1475, %v1459, %v684
      %v1509 = vsel %vm1475, %v1461, %v686
      %v1511 = vsel %vm1475, %v1463, %v688
      %v1513 = vsel %vm1475, %v1465, %v690
      %v1515 = vsel %vm1475, %v1467, %v692
      %v1517 = vsel %vm1475, %v1469, %v694
      %v1519 = vsel %vm1475, %v1471, %v696
      %v1521 = vsel %vm1475, %v1474, %v698
      %vm1522 = vcmask 97280
      %v1524 = vsel %vm1522, %v1477, %v751
      %v1526 = vsel %vm1522, %v1479, %v753
      %v1528 = vsel %vm1522, %v1481, %v755
      %v1530 = vsel %vm1522, %v1483, %v757
      %v1532 = vsel %vm1522, %v1485, %v759
      %v1534 = vsel %vm1522, %v1487, %v761
      %v1536 = vsel %vm1522, %v1489, %v763
      %v1538 = vsel %vm1522, %v1491, %v765
      %v1540 = vsel %vm1522, %v1493, %v767
      %v1542 = vsel %vm1522, %v1495, %v769
      %v1544 = vsel %vm1522, %v1497, %v771
      %v1546 = vsel %vm1522, %v1499, %v773
      %v1548 = vsel %vm1522, %v1501, %v775
      %v1550 = vsel %vm1522, %v1503, %v777
      %v1552 = vsel %vm1522, %v1505, %v779
      %v1554 = vsel %vm1522, %v1507, %v781
      %v1556 = vsel %vm1522, %v1509, %v783
      %v1558 = vsel %vm1522, %v1511, %v785
      %v1560 = vsel %vm1522, %v1513, %v787
      %v1562 = vsel %vm1522, %v1515, %v789
      %v1564 = vsel %vm1522, %v1517, %v791
      %v1566 = vsel %vm1522, %v1519, %v793
      %v1568 = vsel %vm1522, %v1521, %v795
      %vm1569 = vcmask 130048
      %v1571 = vsel %vm1569, %v1524, %v894
      %v1573 = vsel %vm1569, %v1526, %v896
      %v1575 = vsel %vm1569, %v1528, %v898
      %v1577 = vsel %vm1569, %v1530, %v900
      %v1579 = vsel %vm1569, %v1532, %v902
      %v1581 = vsel %vm1569, %v1534, %v904
      %v1583 = vsel %vm1569, %v1536, %v906
      %v1585 = vsel %vm1569, %v1538, %v908
      %v1587 = vsel %vm1569, %v1540, %v910
      %v1589 = vsel %vm1569, %v1542, %v912
      %v1591 = vsel %vm1569, %v1544, %v914
      %v1593 = vsel %vm1569, %v1546, %v916
      %v1595 = vsel %vm1569, %v1548, %v918
      %v1597 = vsel %vm1569, %v1550, %v920
      %v1599 = vsel %vm1569, %v1552, %v922
      %v1601 = vsel %vm1569, %v1554, %v924
      %v1603 = vsel %vm1569, %v1556, %v926
      %v1605 = vsel %vm1569, %v1558, %v928
      %v1607 = vsel %vm1569, %v1560, %v930
      %v1609 = vsel %vm1569, %v1562, %v932
      %v1611 = vsel %vm1569, %v1564, %v934
      %v1613 = vsel %vm1569, %v1566, %v936
      %v1615 = vsel %vm1569, %v1568, %v938
      %vm1616 = vcmask 162816
      %v1618 = vsel %vm1616, %v1571, %v986
      %v1620 = vsel %vm1616, %v1573, %v988
      %v1622 = vsel %vm1616, %v1575, %v990
      %v1624 = vsel %vm1616, %v1577, %v992
      %v1626 = vsel %vm1616, %v1579, %v994
      %v1628 = vsel %vm1616, %v1581, %v996
      %v1630 = vsel %vm1616, %v1583, %v998
      %v1632 = vsel %vm1616, %v1585, %v1000
      %v1634 = vsel %vm1616, %v1587, %v1002
      %v1636 = vsel %vm1616, %v1589, %v1004
      %v1638 = vsel %vm1616, %v1591, %v1006
      %v1640 = vsel %vm1616, %v1593, %v1008
      %v1642 = vsel %vm1616, %v1595, %v1010
      %v1644 = vsel %vm1616, %v1597, %v1012
      %v1646 = vsel %vm1616, %v1599, %v1014
      %v1648 = vsel %vm1616, %v1601, %v1016
      %v1650 = vsel %vm1616, %v1603, %v1018
      %v1652 = vsel %vm1616, %v1605, %v1020
      %v1654 = vsel %vm1616, %v1607, %v1022
      %v1656 = vsel %vm1616, %v1609, %v1024
      %v1658 = vsel %vm1616, %v1611, %v1026
      %v1660 = vsel %vm1616, %v1613, %v1028
      %v1662 = vsel %vm1616, %v1615, %v1030
      %vm1663 = vcmask 195584
      %v1665 = vsel %vm1663, %v1618, %v1059
      %v1667 = vsel %vm1663, %v1620, %v1061
      %v1669 = vsel %vm1663, %v1622, %v1063
      %v1671 = vsel %vm1663, %v1624, %v1065
      %v1673 = vsel %vm1663, %v1626, %v1067
      %v1675 = vsel %vm1663, %v1628, %v1069
      %v1677 = vsel %vm1663, %v1630, %v1071
      %v1679 = vsel %vm1663, %v1632, %v1073
      %v1681 = vsel %vm1663, %v1634, %v1075
      %v1683 = vsel %vm1663, %v1636, %v1077
      %v1685 = vsel %vm1663, %v1638, %v1079
      %v1687 = vsel %vm1663, %v1640, %v1081
      %v1689 = vsel %vm1663, %v1642, %v1083
      %v1691 = vsel %vm1663, %v1644, %v1085
      %v1693 = vsel %vm1663, %v1646, %v1087
      %v1695 = vsel %vm1663, %v1648, %v1089
      %v1697 = vsel %vm1663, %v1650, %v1091
      %v1699 = vsel %vm1663, %v1652, %v1093
      %v1701 = vsel %vm1663, %v1654, %v1095
      %v1703 = vsel %vm1663, %v1656, %v1097
      %v1705 = vsel %vm1663, %v1658, %v1099
      %v1707 = vsel %vm1663, %v1660, %v1101
      %v1709 = vsel %vm1663, %v1662, %v1103
      %vm1710 = vcmask 228352
      %v1712 = vsel %vm1710, %v1665, %v1291
      %v1714 = vsel %vm1710, %v1667, %v1293
      %v1716 = vsel %vm1710, %v1669, %v1295
      %v1718 = vsel %vm1710, %v1671, %v1297
      %v1720 = vsel %vm1710, %v1673, %v1299
      %v1722 = vsel %vm1710, %v1675, %v1301
      %v1724 = vsel %vm1710, %v1677, %v1303
      %v1726 = vsel %vm1710, %v1679, %v1305
      %v1728 = vsel %vm1710, %v1681, %v1307
      %v1730 = vsel %vm1710, %v1683, %v1309
      %v1732 = vsel %vm1710, %v1685, %v1311
      %v1734 = vsel %vm1710, %v1687, %v1313
      %v1736 = vsel %vm1710, %v1689, %v1315
      %v1738 = vsel %vm1710, %v1691, %v1317
      %v1740 = vsel %vm1710, %v1693, %v1319
      %v1742 = vsel %vm1710, %v1695, %v1321
      %v1744 = vsel %vm1710, %v1697, %v1323
      %v1746 = vsel %vm1710, %v1699, %v1325
      %v1748 = vsel %vm1710, %v1701, %v1327
      %v1750 = vsel %vm1710, %v1703, %v1329
      %v1752 = vsel %vm1710, %v1705, %v1331
      %v1754 = vsel %vm1710, %v1707, %v1333
      %v1756 = vsel %vm1710, %v1709, %v1335
      %vm1757 = vcmask 261120
      %v1759 = vsel %vm1757, %v1712, %v1382
      %v1761 = vsel %vm1757, %v1714, %v1384
      %v1763 = vsel %vm1757, %v1716, %v1386
      %v1765 = vsel %vm1757, %v1718, %v1388
      %v1767 = vsel %vm1757, %v1720, %v1390
      %v1769 = vsel %vm1757, %v1722, %v1392
      %v1771 = vsel %vm1757, %v1724, %v1394
      %v1773 = vsel %vm1757, %v1726, %v1396
      %v1775 = vsel %vm1757, %v1728, %v1398
      %v1777 = vsel %vm1757, %v1730, %v1400
      %v1779 = vsel %vm1757, %v1732, %v1402
      %v1781 = vsel %vm1757, %v1734, %v1404
      %v1783 = vsel %vm1757, %v1736, %v1406
      %v1785 = vsel %vm1757, %v1738, %v1408
      %v1787 = vsel %vm1757, %v1740, %v1410
      %v1789 = vsel %vm1757, %v1742, %v1412
      %v1791 = vsel %vm1757, %v1744, %v1414
      %v1793 = vsel %vm1757, %v1746, %v1416
      %v1795 = vsel %vm1757, %v1748, %v1418
      %v1797 = vsel %vm1757, %v1750, %v1420
      %v1799 = vsel %vm1757, %v1752, %v1422
      %v1801 = vsel %vm1757, %v1754, %v1424
      %v1803 = vsel %vm1757, %v1756, %v1426
      %v1804 = vld [vmem:[%s1] sm:$0xf]
      %v1805 = vld [vmem:[%s1 + $0x4] sm:$0xf]
      %v1806 = vld [vmem:[%s1 + $0x8] sm:$0xf]
      %v1807 = vld [vmem:[%s1 + $0xc] sm:$0xf]
      %v1808 = vld [vmem:[%s1 + $0x10] sm:$0x3]
      %v1814 = vunpack.c.l.b16 %v1804
      %v1815 = vunpack.c.l.b16 %v1805
      %v1816 = vunpack.c.l.b16 %v1806
      %v1817 = vunpack.c.l.b16 %v1807
      %v1818 = vunpack.c.l.b16 %v1808
      %v1819 = vpack.c.b16 %v1815, %v1814
      %v1820 = vpack.c.b16 %v1817, %v1816
      %v1821 = vpack.c.b16 %v1818, %v1818
      %vm1824 = vcmask 293888
      %v1825 = vsel %vm1824, %v1759, 0
      %v1827 = vsel %vm1824, %v1761, 0
      %v1829 = vsel %vm1824, %v1763, 0
      %v1831 = vsel %vm1824, %v1765, 0
      %v1833 = vsel %vm1824, %v1767, 0
      %v1835 = vsel %vm1824, %v1769, 0
      %v1837 = vsel %vm1824, %v1771, 0
      %v1839 = vsel %vm1824, %v1773, 0
      %v1841 = vsel %vm1824, %v1775, 0
      %v1843 = vsel %vm1824, %v1777, 0
      %v1845 = vsel %vm1824, %v1779, 0
      %v1847 = vsel %vm1824, %v1781, 0
      %v1849 = vsel %vm1824, %v1783, 0
      %v1851 = vsel %vm1824, %v1785, 0
      %v1853 = vsel %vm1824, %v1787, 0
      %v1855 = vsel %vm1824, %v1789, 0
      %v1857 = vsel %vm1824, %v1791, 0
      %v1859 = vsel %vm1824, %v1793, 0
      %v1861 = vsel %vm1824, %v1795, 0
      %v1863 = vsel %vm1824, %v1797, 0
      %v1865 = vsel %vm1824, %v1799, 0
      %v1867 = vsel %vm1824, %v1801, 0
      %v1869 = vsel %vm1824, %v1803, 0
      %vm1871 = vcmask 1041408
      %v1873 = vsel %vm1871, %v1821, 0
      %1875 = vmatprep.subr.bf16.mxu0 0
      %1876 = vmatpush1.bf16.msra.mxu0 %v1819
      %1877 = vmatprep.subr.bf16.mxu0 0
      %1878 = vmatpush1.bf16.msra.mxu0 %v1820
      %1879 = vmatprep.subr.bf16.mxu0 0
      %1880 = vmatpush1.bf16.msra.mxu0 %v1873
      %1881 = vmatprep.subr.bf16.mxu0 0
      %1882 = vmatpush1.bf16.msra.mxu0 0
      %1883 = vmatprep.subr.bf16.mxu0 0
      %1884 = vmatpush1.bf16.msra.mxu0 0
      %1885 = vmatprep.subr.bf16.mxu0 0
      %1886 = vmatpush1.bf16.msra.mxu0 0
      %1887 = vmatprep.subr.bf16.mxu0 0
      %1888 = vmatpush1.bf16.msra.mxu0 0
      %1889 = vmatprep.subr.bf16.mxu0 0
      %1890 = vmatpush1.bf16.msra.mxu0 0
      %1891 = vmatprep.subr.bf16.mxu0 0
      %1892 = vmatpush1.bf16.msra.mxu0 0
      %1893 = vmatprep.subr.bf16.mxu0 0
      %1894 = vmatpush1.bf16.msra.mxu0 0
      %1895 = vmatprep.subr.bf16.mxu0 0
      %1896 = vmatpush1.bf16.msra.mxu0 0
      %1897 = vmatprep.subr.bf16.mxu0 0
      %1898 = vmatpush1.bf16.msra.mxu0 0
      %1899 = vmatprep.subr.bf16.mxu0 0
      %1900 = vmatpush1.bf16.msra.mxu0 0
      %1901 = vmatprep.subr.bf16.mxu0 0
      %1902 = vmatpush1.bf16.msra.mxu0 0
      %1903 = vmatprep.subr.bf16.mxu0 0
      %1904 = vmatpush1.bf16.msra.mxu0 0
      %1905 = vmatprep.subr.bf16.mxu0 0
      %1906 = vmatpush1.bf16.msra.mxu0 0
      %1907 = vmatprep.mubr.bf16.mxu0 0
      %1908 = vmatmul.mubr.bf16.gmra.mrb[0].mxu0 %v1825
      %v1909 = vpop.f32.mrb[0].mxu0
      %v1910 = vadd.f32 0.0, %v1909
      %v1911 = vpop.f32.mrb[0].mxu0
      %v1912 = vpop.f32.mrb[0].mxu0
      %v1913 = vadd.f32 0.0, %v1912
      %v1914 = vpop.f32.mrb[0].mxu0
      %1915 = vmatprep.mubr.bf16.mxu0 0
      %1916 = vmatmul.mubr.bf16.gmra.mrb[0].mxu0 %v1827
      %v1917 = vpop.f32.mrb[0].mxu0
      %v1918 = vadd.f32 0.0, %v1917
      %v1919 = vpop.f32.mrb[0].mxu0
      %v1920 = vpop.f32.mrb[0].mxu0
      %v1921 = vadd.f32 0.0, %v1920
      %v1922 = vpop.f32.mrb[0].mxu0
      %1923 = vmatprep.mubr.bf16.mxu0 0
      %1924 = vmatmul.mubr.bf16.gmra.mrb[0].mxu0 %v1829
      %v1925 = vpop.f32.mrb[0].mxu0
      %v1926 = vadd.f32 0.0, %v1925
      %v1927 = vpop.f32.mrb[0].mxu0
      %v1928 = vpop.f32.mrb[0].mxu0
      %v1929 = vadd.f32 0.0, %v1928
      %v1930 = vpop.f32.mrb[0].mxu0
      %1931 = vmatprep.mubr.bf16.mxu0 0
      %1932 = vmatmul.mubr.bf16.gmra.mrb[0].mxu0 %v1831
      %v1933 = vpop.f32.mrb[0].mxu0
      %v1934 = vadd.f32 0.0, %v1933
      %v1935 = vpop.f32.mrb[0].mxu0
      %v1936 = vpop.f32.mrb[0].mxu0
      %v1937 = vadd.f32 0.0, %v1936
      %v1938 = vpop.f32.mrb[0].mxu0
      %1939 = vmatprep.mubr.bf16.mxu0 0
      %1940 = vmatmul.mubr.bf16.gmra.mrb[0].mxu0 %v1833
      %v1941 = vpop.f32.mrb[0].mxu0
      %v1942 = vadd.f32 0.0, %v1941
      %v1943 = vpop.f32.mrb[0].mxu0
      %v1944 = vpop.f32.mrb[0].mxu0
      %v1945 = vadd.f32 0.0, %v1944
      %v1946 = vpop.f32.mrb[0].mxu0
      %1947 = vmatprep.mubr.bf16.mxu0 0
      %1948 = vmatmul.mubr.bf16.gmra.mrb[0].mxu0 %v1835
      %v1949 = vpop.f32.mrb[0].mxu0
      %v1950 = vadd.f32 0.0, %v1949
      %v1951 = vpop.f32.mrb[0].mxu0
      %v1952 = vpop.f32.mrb[0].mxu0
      %v1953 = vadd.f32 0.0, %v1952
      %v1954 = vpop.f32.mrb[0].mxu0
      %1955 = vmatprep.mubr.bf16.mxu0 0
      %1956 = vmatmul.mubr.bf16.gmra.mrb[0].mxu0 %v1837
      %v1957 = vpop.f32.mrb[0].mxu0
      %v1958 = vadd.f32 0.0, %v1957
      %v1959 = vpop.f32.mrb[0].mxu0
      %v1960 = vpop.f32.mrb[0].mxu0
      %v1961 = vadd.f32 0.0, %v1960
      %v1962 = vpop.f32.mrb[0].mxu0
      %1963 = vmatprep.mubr.bf16.mxu0 0
      %1964 = vmatmul.mubr.bf16.gmra.mrb[0].mxu0 %v1839
      %v1965 = vpop.f32.mrb[0].mxu0
      %v1966 = vadd.f32 0.0, %v1965
      %v1967 = vpop.f32.mrb[0].mxu0
      %v1968 = vpop.f32.mrb[0].mxu0
      %v1969 = vadd.f32 0.0, %v1968
      %v1970 = vpop.f32.mrb[0].mxu0
      %1971 = vmatprep.mubr.bf16.mxu0 0
      %1972 = vmatmul.mubr.bf16.gmra.mrb[0].mxu0 %v1841
      %v1973 = vpop.f32.mrb[0].mxu0
      %v1974 = vadd.f32 0.0, %v1973
      %v1975 = vpop.f32.mrb[0].mxu0
      %v1976 = vpop.f32.mrb[0].mxu0
      %v1977 = vadd.f32 0.0, %v1976
      %v1978 = vpop.f32.mrb[0].mxu0
      %1979 = vmatprep.mubr.bf16.mxu0 0
      %1980 = vmatmul.mubr.bf16.gmra.mrb[0].mxu0 %v1843
      %v1981 = vpop.f32.mrb[0].mxu0
      %v1982 = vadd.f32 0.0, %v1981
      %v1983 = vpop.f32.mrb[0].mxu0
      %v1984 = vpop.f32.mrb[0].mxu0
      %v1985 = vadd.f32 0.0, %v1984
      %v1986 = vpop.f32.mrb[0].mxu0
      %1987 = vmatprep.mubr.bf16.mxu0 0
      %1988 = vmatmul.mubr.bf16.gmra.mrb[0].mxu0 %v1845
      %v1989 = vpop.f32.mrb[0].mxu0
      %v1990 = vadd.f32 0.0, %v1989
      %v1991 = vpop.f32.mrb[0].mxu0
      %v1992 = vpop.f32.mrb[0].mxu0
      %v1993 = vadd.f32 0.0, %v1992
      %v1994 = vpop.f32.mrb[0].mxu0
      %1995 = vmatprep.mubr.bf16.mxu0 0
      %1996 = vmatmul.mubr.bf16.gmra.mrb[0].mxu0 %v1847
      %v1997 = vpop.f32.mrb[0].mxu0
      %v1998 = vadd.f32 0.0, %v1997
      %v1999 = vpop.f32.mrb[0].mxu0
      %v2000 = vpop.f32.mrb[0].mxu0
      %v2001 = vadd.f32 0.0, %v2000
      %v2002 = vpop.f32.mrb[0].mxu0
      %2003 = vmatprep.mubr.bf16.mxu0 0
      %2004 = vmatmul.mubr.bf16.gmra.mrb[0].mxu0 %v1849
      %v2005 = vpop.f32.mrb[0].mxu0
      %v2006 = vadd.f32 0.0, %v2005
      %v2007 = vpop.f32.mrb[0].mxu0
      %v2008 = vpop.f32.mrb[0].mxu0
      %v2009 = vadd.f32 0.0, %v2008
      %v2010 = vpop.f32.mrb[0].mxu0
      %2011 = vmatprep.mubr.bf16.mxu0 0
      %2012 = vmatmul.mubr.bf16.gmra.mrb[0].mxu0 %v1851
      %v2013 = vpop.f32.mrb[0].mxu0
      %v2014 = vadd.f32 0.0, %v2013
      %v2015 = vpop.f32.mrb[0].mxu0
      %v2016 = vpop.f32.mrb[0].mxu0
      %v2017 = vadd.f32 0.0, %v2016
      %v2018 = vpop.f32.mrb[0].mxu0
      %2019 = vmatprep.mubr.bf16.mxu0 0
      %2020 = vmatmul.mubr.bf16.gmra.mrb[0].mxu0 %v1853
      %v2021 = vpop.f32.mrb[0].mxu0
      %v2022 = vadd.f32 0.0, %v2021
      %v2023 = vpop.f32.mrb[0].mxu0
      %v2024 = vpop.f32.mrb[0].mxu0
      %v2025 = vadd.f32 0.0, %v2024
      %v2026 = vpop.f32.mrb[0].mxu0
      %2027 = vmatprep.mubr.bf16.mxu0 0
      %2028 = vmatmul.mubr.bf16.gmra.mrb[0].mxu0 %v1855
      %v2029 = vpop.f32.mrb[0].mxu0
      %v2030 = vadd.f32 0.0, %v2029
      %v2031 = vpop.f32.mrb[0].mxu0
      %v2032 = vpop.f32.mrb[0].mxu0
      %v2033 = vadd.f32 0.0, %v2032
      %v2034 = vpop.f32.mrb[0].mxu0
      %2035 = vmatprep.mubr.bf16.mxu0 0
      %2036 = vmatmul.mubr.bf16.gmra.mrb[0].mxu0 %v1857
      %v2037 = vpop.f32.mrb[0].mxu0
      %v2038 = vadd.f32 0.0, %v2037
      %v2039 = vpop.f32.mrb[0].mxu0
      %v2040 = vpop.f32.mrb[0].mxu0
      %v2041 = vadd.f32 0.0, %v2040
      %v2042 = vpop.f32.mrb[0].mxu0
      %2043 = vmatprep.mubr.bf16.mxu0 0
      %2044 = vmatmul.mubr.bf16.gmra.mrb[0].mxu0 %v1859
      %v2045 = vpop.f32.mrb[0].mxu0
      %v2046 = vadd.f32 0.0, %v2045
      %v2047 = vpop.f32.mrb[0].mxu0
      %v2048 = vpop.f32.mrb[0].mxu0
      %v2049 = vadd.f32 0.0, %v2048
      %v2050 = vpop.f32.mrb[0].mxu0
      %2051 = vmatprep.mubr.bf16.mxu0 0
      %2052 = vmatmul.mubr.bf16.gmra.mrb[0].mxu0 %v1861
      %v2053 = vpop.f32.mrb[0].mxu0
      %v2054 = vadd.f32 0.0, %v2053
      %v2055 = vpop.f32.mrb[0].mxu0
      %v2056 = vpop.f32.mrb[0].mxu0
      %v2057 = vadd.f32 0.0, %v2056
      %v2058 = vpop.f32.mrb[0].mxu0
      %2059 = vmatprep.mubr.bf16.mxu0 0
      %2060 = vmatmul.mubr.bf16.gmra.mrb[0].mxu0 %v1863
      %v2061 = vpop.f32.mrb[0].mxu0
      %v2062 = vadd.f32 0.0, %v2061
      %v2063 = vpop.f32.mrb[0].mxu0
      %v2064 = vpop.f32.mrb[0].mxu0
      %v2065 = vadd.f32 0.0, %v2064
      %v2066 = vpop.f32.mrb[0].mxu0
      %2067 = vmatprep.mubr.bf16.mxu0 0
      %2068 = vmatmul.mubr.bf16.gmra.mrb[0].mxu0 %v1865
      %v2069 = vpop.f32.mrb[0].mxu0
      %v2070 = vadd.f32 0.0, %v2069
      %v2071 = vpop.f32.mrb[0].mxu0
      %v2072 = vpop.f32.mrb[0].mxu0
      %v2073 = vadd.f32 0.0, %v2072
      %v2074 = vpop.f32.mrb[0].mxu0
      %2075 = vmatprep.mubr.bf16.mxu0 0
      %2076 = vmatmul.mubr.bf16.gmra.mrb[0].mxu0 %v1867
      %v2077 = vpop.f32.mrb[0].mxu0
      %v2078 = vadd.f32 0.0, %v2077
      %v2079 = vpop.f32.mrb[0].mxu0
      %v2080 = vpop.f32.mrb[0].mxu0
      %v2081 = vadd.f32 0.0, %v2080
      %v2082 = vpop.f32.mrb[0].mxu0
      %2083 = vmatprep.mubr.bf16.mxu0 0
      %2084 = vmatmul.mubr.bf16.gmra.mrb[0].mxu0 %v1869
      %v2085 = vpop.f32.mrb[0].mxu0
      %v2086 = vadd.f32 0.0, %v2085
      %v2087 = vpop.f32.mrb[0].mxu0
      %v2088 = vpop.f32.mrb[0].mxu0
      %v2089 = vpop.f32.mrb[0].mxu0
      %2090 = vdwg.mxu0
      %v2091 = vpack.c.bf16 %v1913, %v1910
      %v2092 = vpack.c.bf16 %v1921, %v1918
      %v2093 = vpack.c.bf16 %v1929, %v1926
      %v2094 = vpack.c.bf16 %v1937, %v1934
      %v2095 = vpack.c.bf16 %v1945, %v1942
      %v2096 = vpack.c.bf16 %v1953, %v1950
      %v2097 = vpack.c.bf16 %v1961, %v1958
      %v2098 = vpack.c.bf16 %v1969, %v1966
      %v2099 = vpack.c.bf16 %v1977, %v1974
      %v2100 = vpack.c.bf16 %v1985, %v1982
      %v2101 = vpack.c.bf16 %v1993, %v1990
      %v2102 = vpack.c.bf16 %v2001, %v1998
      %v2103 = vpack.c.bf16 %v2009, %v2006
      %v2104 = vpack.c.bf16 %v2017, %v2014
      %v2105 = vpack.c.bf16 %v2025, %v2022
      %v2106 = vpack.c.bf16 %v2033, %v2030
      %v2107 = vpack.c.bf16 %v2041, %v2038
      %v2108 = vpack.c.bf16 %v2049, %v2046
      %v2109 = vpack.c.bf16 %v2057, %v2054
      %v2110 = vpack.c.bf16 %v2065, %v2062
      %v2111 = vpack.c.bf16 %v2073, %v2070
      %v2112 = vpack.c.bf16 %v2081, %v2078
      %v2113 = vpack.c.bf16 %v2086, %v2086
      %v2137 = vunpack.c.l.b16 %v2091
      %v2138 = vunpack.c.h.b16 %v2091
      %v2139 = vunpack.c.l.b16 %v2092
      %v2140 = vunpack.c.h.b16 %v2092
      %v2141 = vunpack.c.l.b16 %v2093
      %v2142 = vunpack.c.h.b16 %v2093
      %v2143 = vunpack.c.l.b16 %v2094
      %v2144 = vunpack.c.h.b16 %v2094
      %v2145 = vunpack.c.l.b16 %v2095
      %v2146 = vunpack.c.h.b16 %v2095
      %v2147 = vunpack.c.l.b16 %v2096
      %v2148 = vunpack.c.h.b16 %v2096
      %v2149 = vunpack.c.l.b16 %v2097
      %v2150 = vunpack.c.h.b16 %v2097
      %v2151 = vunpack.c.l.b16 %v2098
      %v2152 = vunpack.c.h.b16 %v2098
      %v2153 = vunpack.c.l.b16 %v2099
      %v2154 = vunpack.c.h.b16 %v2099
      %v2155 = vunpack.c.l.b16 %v2100
      %v2156 = vunpack.c.h.b16 %v2100
      %v2157 = vunpack.c.l.b16 %v2101
      %v2158 = vunpack.c.h.b16 %v2101
      %v2159 = vunpack.c.l.b16 %v2102
      %v2160 = vunpack.c.h.b16 %v2102
      %v2161 = vunpack.c.l.b16 %v2103
      %v2162 = vunpack.c.h.b16 %v2103
      %v2163 = vunpack.c.l.b16 %v2104
      %v2164 = vunpack.c.h.b16 %v2104
      %v2165 = vunpack.c.l.b16 %v2105
      %v2166 = vunpack.c.h.b16 %v2105
      %v2167 = vunpack.c.l.b16 %v2106
      %v2168 = vunpack.c.h.b16 %v2106
      %v2169 = vunpack.c.l.b16 %v2107
      %v2170 = vunpack.c.h.b16 %v2107
      %v2171 = vunpack.c.l.b16 %v2108
      %v2172 = vunpack.c.h.b16 %v2108
      %v2173 = vunpack.c.l.b16 %v2109
      %v2174 = vunpack.c.h.b16 %v2109
      %v2175 = vunpack.c.l.b16 %v2110
      %v2176 = vunpack.c.h.b16 %v2110
      %v2177 = vunpack.c.l.b16 %v2111
      %v2178 = vunpack.c.h.b16 %v2111
      %v2179 = vunpack.c.l.b16 %v2112
      %v2180 = vunpack.c.h.b16 %v2112
      %v2181 = vunpack.c.l.b16 %v2113
      %v2182 = vpack.c.b16 %v2137, %v2137
      %v2183 = vpack.c.b16 %v2138, %v2138
      %v2184 = vpack.c.b16 %v2139, %v2139
      %v2185 = vpack.c.b16 %v2140, %v2140
      %v2186 = vpack.c.b16 %v2141, %v2141
      %v2187 = vpack.c.b16 %v2142, %v2142
      %v2188 = vpack.c.b16 %v2143, %v2143
      %v2189 = vpack.c.b16 %v2144, %v2144
      %v2190 = vpack.c.b16 %v2145, %v2145
      %v2191 = vpack.c.b16 %v2146, %v2146
      %v2192 = vpack.c.b16 %v2147, %v2147
      %v2193 = vpack.c.b16 %v2148, %v2148
      %v2194 = vpack.c.b16 %v2149, %v2149
      %v2195 = vpack.c.b16 %v2150, %v2150
      %v2196 = vpack.c.b16 %v2151, %v2151
      %v2197 = vpack.c.b16 %v2152, %v2152
      %v2198 = vpack.c.b16 %v2153, %v2153
      %v2199 = vpack.c.b16 %v2154, %v2154
      %v2200 = vpack.c.b16 %v2155, %v2155
      %v2201 = vpack.c.b16 %v2156, %v2156
      %v2202 = vpack.c.b16 %v2157, %v2157
      %v2203 = vpack.c.b16 %v2158, %v2158
      %v2204 = vpack.c.b16 %v2159, %v2159
      %v2205 = vpack.c.b16 %v2160, %v2160
      %v2206 = vpack.c.b16 %v2161, %v2161
      %v2207 = vpack.c.b16 %v2162, %v2162
      %v2208 = vpack.c.b16 %v2163, %v2163
      %v2209 = vpack.c.b16 %v2164, %v2164
      %v2210 = vpack.c.b16 %v2165, %v2165
      %v2211 = vpack.c.b16 %v2166, %v2166
      %v2212 = vpack.c.b16 %v2167, %v2167
      %v2213 = vpack.c.b16 %v2168, %v2168
      %v2214 = vpack.c.b16 %v2169, %v2169
      %v2215 = vpack.c.b16 %v2170, %v2170
      %v2216 = vpack.c.b16 %v2171, %v2171
      %v2217 = vpack.c.b16 %v2172, %v2172
      %v2218 = vpack.c.b16 %v2173, %v2173
      %v2219 = vpack.c.b16 %v2174, %v2174
      %v2220 = vpack.c.b16 %v2175, %v2175
      %v2221 = vpack.c.b16 %v2176, %v2176
      %v2222 = vpack.c.b16 %v2177, %v2177
      %v2223 = vpack.c.b16 %v2178, %v2178
      %v2224 = vpack.c.b16 %v2179, %v2179
      %v2225 = vpack.c.b16 %v2180, %v2180
      %v2226 = vpack.c.b16 %v2181, %v2181
      %2272 = vst [vmem:[%s204] sm:$0xf] %v2182
      %2273 = vst [vmem:[%s204 + $0x4] sm:$0xf] %v2183
      %2274 = vst [vmem:[%s204 + $0x8] sm:$0xf] %v2184
      %2275 = vst [vmem:[%s204 + $0xc] sm:$0xf] %v2185
      %2276 = vst [vmem:[%s204 + $0x10] sm:$0xf] %v2186
      %2277 = vst [vmem:[%s204 + $0x14] sm:$0xf] %v2187
      %2278 = vst [vmem:[%s204 + $0x18] sm:$0xf] %v2188
      %2279 = vst [vmem:[%s204 + $0x1c] sm:$0xf] %v2189
      %2280 = vst [vmem:[%s204 + $0x20] sm:$0xf] %v2190
      %2281 = vst [vmem:[%s204 + $0x24] sm:$0xf] %v2191
      %2282 = vst [vmem:[%s204 + $0x28] sm:$0xf] %v2192
      %2283 = vst [vmem:[%s204 + $0x2c] sm:$0xf] %v2193
      %2284 = vst [vmem:[%s204 + $0x30] sm:$0xf] %v2194
      %2285 = vst [vmem:[%s204 + $0x34] sm:$0xf] %v2195
      %2286 = vst [vmem:[%s204 + $0x38] sm:$0xf] %v2196
      %2287 = vst [vmem:[%s204 + $0x3c] sm:$0xf] %v2197
      %2288 = vst [vmem:[%s204 + $0x40] sm:$0xf] %v2198
      %2289 = vst [vmem:[%s204 + $0x44] sm:$0xf] %v2199
      %2290 = vst [vmem:[%s204 + $0x48] sm:$0xf] %v2200
      %2291 = vst [vmem:[%s204 + $0x4c] sm:$0xf] %v2201
      %2292 = vst [vmem:[%s204 + $0x50] sm:$0xf] %v2202
      %2293 = vst [vmem:[%s204 + $0x54] sm:$0xf] %v2203
      %2294 = vst [vmem:[%s204 + $0x58] sm:$0xf] %v2204
      %2295 = vst [vmem:[%s204 + $0x5c] sm:$0xf] %v2205
      %2296 = vst [vmem:[%s204 + $0x60] sm:$0xf] %v2206
      %2297 = vst [vmem:[%s204 + $0x64] sm:$0xf] %v2207
      %2298 = vst [vmem:[%s204 + $0x68] sm:$0xf] %v2208
      %2299 = vst [vmem:[%s204 + $0x6c] sm:$0xf] %v2209
      %2300 = vst [vmem:[%s204 + $0x70] sm:$0xf] %v2210
      %2301 = vst [vmem:[%s204 + $0x74] sm:$0xf] %v2211
      %2302 = vst [vmem:[%s204 + $0x78] sm:$0xf] %v2212
      %2303 = vst [vmem:[%s204 + $0x7c] sm:$0xf] %v2213
      %2304 = vst [vmem:[%s204 + $0x80] sm:$0xf] %v2214
      %2305 = vst [vmem:[%s204 + $0x84] sm:$0xf] %v2215
      %2306 = vst [vmem:[%s204 + $0x88] sm:$0xf] %v2216
      %2307 = vst [vmem:[%s204 + $0x8c] sm:$0xf] %v2217
      %2308 = vst [vmem:[%s204 + $0x90] sm:$0xf] %v2218
      %2309 = vst [vmem:[%s204 + $0x94] sm:$0xf] %v2219
      %2310 = vst [vmem:[%s204 + $0x98] sm:$0xf] %v2220
      %2311 = vst [vmem:[%s204 + $0x9c] sm:$0xf] %v2221
      %2312 = vst [vmem:[%s204 + $0xa0] sm:$0xf] %v2222
      %2313 = vst [vmem:[%s204 + $0xa4] sm:$0xf] %v2223
      %2314 = vst [vmem:[%s204 + $0xa8] sm:$0xf] %v2224
      %2315 = vst [vmem:[%s204 + $0xac] sm:$0xf] %v2225
      %2316 = vst [vmem:[%s204 + $0xb0] sm:$0xf] %v2226
      %2317 = vst [vmem:[%s204 + $0xb4] sm:$0x1] 0
      %v2318 = vld [vmem:[%s2] sm:$0xff]
      %v2319 = vld [vmem:[%s2 + $0x8] sm:$0xff]
      %v2320 = vld [vmem:[%s2 + $0x10] sm:$0xff]
      %v2321 = vld [vmem:[%s2 + $0x18] sm:$0xff]
      %v2322 = vld [vmem:[%s2 + $0x20] sm:$0xff]
      %v2323 = vld [vmem:[%s2 + $0x28] sm:$0xff]
      %v2324 = vld [vmem:[%s2 + $0x30] sm:$0xff]
      %v2325 = vld [vmem:[%s2 + $0x38] sm:$0xff]
      %v2326 = vld [vmem:[%s2 + $0x40] sm:$0xff]
      %v2327 = vld [vmem:[%s2 + $0x48] sm:$0xff]
      %v2328 = vld [vmem:[%s2 + $0x50] sm:$0xff]
      %v2329 = vld [vmem:[%s2 + $0x58] sm:$0xff]
      %v2330 = vld [vmem:[%s2 + $0x60] sm:$0xff]
      %v2331 = vld [vmem:[%s2 + $0x68] sm:$0xff]
      %v2332 = vld [vmem:[%s2 + $0x70] sm:$0xff]
      %v2333 = vld [vmem:[%s2 + $0x78] sm:$0xff]
      %v2334 = vld [vmem:[%s2 + $0x80] sm:$0xff]
      %v2335 = vld [vmem:[%s2 + $0x88] sm:$0xff]
      %v2336 = vld [vmem:[%s2 + $0x90] sm:$0xff]
      %v2337 = vld [vmem:[%s2 + $0x98] sm:$0xff]
      %v2338 = vld [vmem:[%s2 + $0xa0] sm:$0xff]
      %v2339 = vld [vmem:[%s2 + $0xa8] sm:$0xff]
      %v2340 = vld [vmem:[%s2 + $0xb0] sm:$0xff]
      %v2341 = vld [vmem:[%s2 + $0xb8] sm:$0xff]
      %v2342 = vld [vmem:[%s2 + $0xc0] sm:$0xff]
      %v2343 = vld [vmem:[%s2 + $0xc8] sm:$0xff]
      %v2344 = vld [vmem:[%s2 + $0xd0] sm:$0xff]
      %v2345 = vld [vmem:[%s2 + $0xd8] sm:$0xff]
      %v2346 = vld [vmem:[%s2 + $0xe0] sm:$0xff]
      %v2347 = vld [vmem:[%s2 + $0xe8] sm:$0xff]
      %v2348 = vld [vmem:[%s2 + $0xf0] sm:$0xff]
      %v2349 = vld [vmem:[%s2 + $0xf8] sm:$0xff]
      %v2350 = vld [vmem:[%s2 + $0x100] sm:$0xff]
      %v2351 = vld [vmem:[%s2 + $0x108] sm:$0xff]
      %v2352 = vld [vmem:[%s2 + $0x110] sm:$0xff]
      %v2353 = vld [vmem:[%s2 + $0x118] sm:$0xff]
      %v2354 = vld [vmem:[%s2 + $0x120] sm:$0xff]
      %v2355 = vld [vmem:[%s2 + $0x128] sm:$0xff]
      %v2356 = vld [vmem:[%s2 + $0x130] sm:$0xff]
      %v2357 = vld [vmem:[%s2 + $0x138] sm:$0xff]
      %v2358 = vld [vmem:[%s2 + $0x140] sm:$0xff]
      %v2359 = vld [vmem:[%s2 + $0x148] sm:$0xff]
      %v2360 = vld [vmem:[%s2 + $0x150] sm:$0xff]
      %v2361 = vld [vmem:[%s2 + $0x158] sm:$0xff]
      %v2362 = vld [vmem:[%s2 + $0x160] sm:$0xff]
      %2364 = vset.pattern.permute.xlu0 0
      %2365 = vperm.xlu0 %2364, %v2318
      %v2366 = vpop.permute.xlu0 %2365
      %2369 = vset.pattern.permute.xlu0 0
      %2370 = vperm.xlu0 %2369, %v2319
      %v2371 = vpop.permute.xlu0 %2370
      %2374 = vset.pattern.permute.xlu0 0
      %2375 = vperm.xlu0 %2374, %v2320
      %v2376 = vpop.permute.xlu0 %2375
      %2379 = vset.pattern.permute.xlu0 0
      %2380 = vperm.xlu0 %2379, %v2321
      %v2381 = vpop.permute.xlu0 %2380
      %2384 = vset.pattern.permute.xlu0 0
      %2385 = vperm.xlu0 %2384, %v2322
      %v2386 = vpop.permute.xlu0 %2385
      %2389 = vset.pattern.permute.xlu0 0
      %2390 = vperm.xlu0 %2389, %v2323
      %v2391 = vpop.permute.xlu0 %2390
      %2394 = vset.pattern.permute.xlu0 0
      %2395 = vperm.xlu0 %2394, %v2324
      %v2396 = vpop.permute.xlu0 %2395
      %2399 = vset.pattern.permute.xlu0 0
      %2400 = vperm.xlu0 %2399, %v2325
      %v2401 = vpop.permute.xlu0 %2400
      %2404 = vset.pattern.permute.xlu0 0
      %2405 = vperm.xlu0 %2404, %v2326
      %v2406 = vpop.permute.xlu0 %2405
      %2409 = vset.pattern.permute.xlu0 0
      %2410 = vperm.xlu0 %2409, %v2327
      %v2411 = vpop.permute.xlu0 %2410
      %2414 = vset.pattern.permute.xlu0 0
      %2415 = vperm.xlu0 %2414, %v2328
      %v2416 = vpop.permute.xlu0 %2415
      %2419 = vset.pattern.permute.xlu0 0
      %2420 = vperm.xlu0 %2419, %v2329
      %v2421 = vpop.permute.xlu0 %2420
      %2424 = vset.pattern.permute.xlu0 0
      %2425 = vperm.xlu0 %2424, %v2330
      %v2426 = vpop.permute.xlu0 %2425
      %2429 = vset.pattern.permute.xlu0 0
      %2430 = vperm.xlu0 %2429, %v2331
      %v2431 = vpop.permute.xlu0 %2430
      %2434 = vset.pattern.permute.xlu0 0
      %2435 = vperm.xlu0 %2434, %v2332
      %v2436 = vpop.permute.xlu0 %2435
      %2439 = vset.pattern.permute.xlu0 0
      %2440 = vperm.xlu0 %2439, %v2333
      %v2441 = vpop.permute.xlu0 %2440
      %2444 = vset.pattern.permute.xlu0 0
      %2445 = vperm.xlu0 %2444, %v2334
      %v2446 = vpop.permute.xlu0 %2445
      %2449 = vset.pattern.permute.xlu0 0
      %2450 = vperm.xlu0 %2449, %v2335
      %v2451 = vpop.permute.xlu0 %2450
      %2454 = vset.pattern.permute.xlu0 0
      %2455 = vperm.xlu0 %2454, %v2336
      %v2456 = vpop.permute.xlu0 %2455
      %2459 = vset.pattern.permute.xlu0 0
      %2460 = vperm.xlu0 %2459, %v2337
      %v2461 = vpop.permute.xlu0 %2460
      %2464 = vset.pattern.permute.xlu0 0
      %2465 = vperm.xlu0 %2464, %v2338
      %v2466 = vpop.permute.xlu0 %2465
      %2469 = vset.pattern.permute.xlu0 0
      %2470 = vperm.xlu0 %2469, %v2339
      %v2471 = vpop.permute.xlu0 %2470
      %2474 = vset.pattern.permute.xlu0 0
      %2475 = vperm.xlu0 %2474, %v2340
      %v2476 = vpop.permute.xlu0 %2475
      %2479 = vset.pattern.permute.xlu0 0
      %2480 = vperm.xlu0 %2479, %v2341
      %v2481 = vpop.permute.xlu0 %2480
      %2484 = vset.pattern.permute.xlu0 0
      %2485 = vperm.xlu0 %2484, %v2342
      %v2486 = vpop.permute.xlu0 %2485
      %2489 = vset.pattern.permute.xlu0 0
      %2490 = vperm.xlu0 %2489, %v2343
      %v2491 = vpop.permute.xlu0 %2490
      %2494 = vset.pattern.permute.xlu0 0
      %2495 = vperm.xlu0 %2494, %v2344
      %v2496 = vpop.permute.xlu0 %2495
      %2499 = vset.pattern.permute.xlu0 0
      %2500 = vperm.xlu0 %2499, %v2345
      %v2501 = vpop.permute.xlu0 %2500
      %2504 = vset.pattern.permute.xlu0 0
      %2505 = vperm.xlu0 %2504, %v2346
      %v2506 = vpop.permute.xlu0 %2505
      %2509 = vset.pattern.permute.xlu0 0
      %2510 = vperm.xlu0 %2509, %v2347
      %v2511 = vpop.permute.xlu0 %2510
      %2514 = vset.pattern.permute.xlu0 0
      %2515 = vperm.xlu0 %2514, %v2348
      %v2516 = vpop.permute.xlu0 %2515
      %2519 = vset.pattern.permute.xlu0 0
      %2520 = vperm.xlu0 %2519, %v2349
      %v2521 = vpop.permute.xlu0 %2520
      %2524 = vset.pattern.permute.xlu0 0
      %2525 = vperm.xlu0 %2524, %v2350
      %v2526 = vpop.permute.xlu0 %2525
      %2529 = vset.pattern.permute.xlu0 0
      %2530 = vperm.xlu0 %2529, %v2351
      %v2531 = vpop.permute.xlu0 %2530
      %2534 = vset.pattern.permute.xlu0 0
      %2535 = vperm.xlu0 %2534, %v2352
      %v2536 = vpop.permute.xlu0 %2535
      %2539 = vset.pattern.permute.xlu0 0
      %2540 = vperm.xlu0 %2539, %v2353
      %v2541 = vpop.permute.xlu0 %2540
      %2544 = vset.pattern.permute.xlu0 0
      %2545 = vperm.xlu0 %2544, %v2354
      %v2546 = vpop.permute.xlu0 %2545
      %2549 = vset.pattern.permute.xlu0 0
      %2550 = vperm.xlu0 %2549, %v2355
      %v2551 = vpop.permute.xlu0 %2550
      %2554 = vset.pattern.permute.xlu0 0
      %2555 = vperm.xlu0 %2554, %v2356
      %v2556 = vpop.permute.xlu0 %2555
      %2559 = vset.pattern.permute.xlu0 0
      %2560 = vperm.xlu0 %2559, %v2357
      %v2561 = vpop.permute.xlu0 %2560
      %2564 = vset.pattern.permute.xlu0 0
      %2565 = vperm.xlu0 %2564, %v2358
      %v2566 = vpop.permute.xlu0 %2565
      %2569 = vset.pattern.permute.xlu0 0
      %2570 = vperm.xlu0 %2569, %v2359
      %v2571 = vpop.permute.xlu0 %2570
      %2574 = vset.pattern.permute.xlu0 0
      %2575 = vperm.xlu0 %2574, %v2360
      %v2576 = vpop.permute.xlu0 %2575
      %2579 = vset.pattern.permute.xlu0 0
      %2580 = vperm.xlu0 %2579, %v2361
      %v2581 = vpop.permute.xlu0 %2580
      %2584 = vset.pattern.permute.xlu0 0
      %2585 = vperm.xlu0 %2584, %v2362
      %v2586 = vpop.permute.xlu0 %2585
      %v2588 = vmul.f32 %v1910, %v2366
      %v2589 = vmul.f32 %v1913, %v2371
      %v2590 = vmul.f32 %v1918, %v2376
      %v2591 = vmul.f32 %v1921, %v2381
      %v2592 = vmul.f32 %v1926, %v2386
      %v2593 = vmul.f32 %v1929, %v2391
      %v2594 = vmul.f32 %v1934, %v2396
      %v2595 = vmul.f32 %v1937, %v2401
      %v2596 = vmul.f32 %v1942, %v2406
      %v2597 = vmul.f32 %v1945, %v2411
      %v2598 = vmul.f32 %v1950, %v2416
      %v2599 = vmul.f32 %v1953, %v2421
      %v2600 = vmul.f32 %v1958, %v2426
      %v2601 = vmul.f32 %v1961, %v2431
      %v2602 = vmul.f32 %v1966, %v2436
      %v2603 = vmul.f32 %v1969, %v2441
      %v2604 = vmul.f32 %v1974, %v2446
      %v2605 = vmul.f32 %v1977, %v2451
      %v2606 = vmul.f32 %v1982, %v2456
      %v2607 = vmul.f32 %v1985, %v2461
      %v2608 = vmul.f32 %v1990, %v2466
      %v2609 = vmul.f32 %v1993, %v2471
      %v2610 = vmul.f32 %v1998, %v2476
      %v2611 = vmul.f32 %v2001, %v2481
      %v2612 = vmul.f32 %v2006, %v2486
      %v2613 = vmul.f32 %v2009, %v2491
      %v2614 = vmul.f32 %v2014, %v2496
      %v2615 = vmul.f32 %v2017, %v2501
      %v2616 = vmul.f32 %v2022, %v2506
      %v2617 = vmul.f32 %v2025, %v2511
      %v2618 = vmul.f32 %v2030, %v2516
      %v2619 = vmul.f32 %v2033, %v2521
      %v2620 = vmul.f32 %v2038, %v2526
      %v2621 = vmul.f32 %v2041, %v2531
      %v2622 = vmul.f32 %v2046, %v2536
      %v2623 = vmul.f32 %v2049, %v2541
      %v2624 = vmul.f32 %v2054, %v2546
      %v2625 = vmul.f32 %v2057, %v2551
      %v2626 = vmul.f32 %v2062, %v2556
      %v2627 = vmul.f32 %v2065, %v2561
      %v2628 = vmul.f32 %v2070, %v2566
      %v2629 = vmul.f32 %v2073, %v2571
      %v2630 = vmul.f32 %v2078, %v2576
      %v2631 = vmul.f32 %v2081, %v2581
      %v2632 = vmul.f32 %v2086, %v2586
      %v2633 = vadd.f32 %v2588, %v2589
      %v2634 = vadd.f32 %v2633, %v2590
      %v2635 = vadd.f32 %v2634, %v2591
      %v2636 = vadd.f32 %v2635, %v2592
      %v2637 = vadd.f32 %v2636, %v2593
      %v2638 = vadd.f32 %v2637, %v2594
      %v2639 = vadd.f32 %v2638, %v2595
      %v2640 = vadd.f32 %v2639, %v2596
      %v2641 = vadd.f32 %v2640, %v2597
      %v2642 = vadd.f32 %v2641, %v2598
      %v2643 = vadd.f32 %v2642, %v2599
      %v2644 = vadd.f32 %v2643, %v2600
      %v2645 = vadd.f32 %v2644, %v2601
      %v2646 = vadd.f32 %v2645, %v2602
      %v2647 = vadd.f32 %v2646, %v2603
      %v2648 = vadd.f32 %v2647, %v2604
      %v2649 = vadd.f32 %v2648, %v2605
      %v2650 = vadd.f32 %v2649, %v2606
      %v2651 = vadd.f32 %v2650, %v2607
      %v2652 = vadd.f32 %v2651, %v2608
      %v2653 = vadd.f32 %v2652, %v2609
      %v2654 = vadd.f32 %v2653, %v2610
      %v2655 = vadd.f32 %v2654, %v2611
      %v2656 = vadd.f32 %v2655, %v2612
      %v2657 = vadd.f32 %v2656, %v2613
      %v2658 = vadd.f32 %v2657, %v2614
      %v2659 = vadd.f32 %v2658, %v2615
      %v2660 = vadd.f32 %v2659, %v2616
      %v2661 = vadd.f32 %v2660, %v2617
      %v2662 = vadd.f32 %v2661, %v2618
      %v2663 = vadd.f32 %v2662, %v2619
      %v2664 = vadd.f32 %v2663, %v2620
      %v2665 = vadd.f32 %v2664, %v2621
      %v2666 = vadd.f32 %v2665, %v2622
      %v2667 = vadd.f32 %v2666, %v2623
      %v2668 = vadd.f32 %v2667, %v2624
      %v2669 = vadd.f32 %v2668, %v2625
      %v2670 = vadd.f32 %v2669, %v2626
      %v2671 = vadd.f32 %v2670, %v2627
      %v2672 = vadd.f32 %v2671, %v2628
      %v2673 = vadd.f32 %v2672, %v2629
      %v2674 = vadd.f32 %v2673, %v2630
      %v2675 = vadd.f32 %v2674, %v2631
      %v2676 = vadd.f32 %v2675, %v2632
      %v2677 = vrot.slane %v2676, 4
      %v2678 = vadd.f32 %v2676, %v2677
      %v2679 = vrot.slane %v2678, 2
      %v2680 = vadd.f32 %v2678, %v2679
      %v2681 = vrot.slane %v2680, 1
      %v2682 = vadd.f32 %v2680, %v2681
      %v2683 = vlaneseq
      %vm2684 = vcmp.ge.s32.totalorder %v2683, 0
      %vm2685 = vcmp.lt.s32.totalorder %v2683, 128
      %vm2686 = vmand %vm2684, %vm2685
      %2687 = vst.msk [vmem:[%s208] sm:$0x1] %vm2686, %v2682
      %v2688 = vmul.f32 %v2588, %v1910
      %v2689 = vmul.f32 %v2589, %v1913
      %v2690 = vmul.f32 %v2590, %v1918
      %v2691 = vmul.f32 %v2591, %v1921
      %v2692 = vmul.f32 %v2592, %v1926
      %v2693 = vmul.f32 %v2593, %v1929
      %v2694 = vmul.f32 %v2594, %v1934
      %v2695 = vmul.f32 %v2595, %v1937
      %v2696 = vmul.f32 %v2596, %v1942
      %v2697 = vmul.f32 %v2597, %v1945
      %v2698 = vmul.f32 %v2598, %v1950
      %v2699 = vmul.f32 %v2599, %v1953
      %v2700 = vmul.f32 %v2600, %v1958
      %v2701 = vmul.f32 %v2601, %v1961
      %v2702 = vmul.f32 %v2602, %v1966
      %v2703 = vmul.f32 %v2603, %v1969
      %v2704 = vmul.f32 %v2604, %v1974
      %v2705 = vmul.f32 %v2605, %v1977
      %v2706 = vmul.f32 %v2606, %v1982
      %v2707 = vmul.f32 %v2607, %v1985
      %v2708 = vmul.f32 %v2608, %v1990
      %v2709 = vmul.f32 %v2609, %v1993
      %v2710 = vmul.f32 %v2610, %v1998
      %v2711 = vmul.f32 %v2611, %v2001
      %v2712 = vmul.f32 %v2612, %v2006
      %v2713 = vmul.f32 %v2613, %v2009
      %v2714 = vmul.f32 %v2614, %v2014
      %v2715 = vmul.f32 %v2615, %v2017
      %v2716 = vmul.f32 %v2616, %v2022
      %v2717 = vmul.f32 %v2617, %v2025
      %v2718 = vmul.f32 %v2618, %v2030
      %v2719 = vmul.f32 %v2619, %v2033
      %v2720 = vmul.f32 %v2620, %v2038
      %v2721 = vmul.f32 %v2621, %v2041
      %v2722 = vmul.f32 %v2622, %v2046
      %v2723 = vmul.f32 %v2623, %v2049
      %v2724 = vmul.f32 %v2624, %v2054
      %v2725 = vmul.f32 %v2625, %v2057
      %v2726 = vmul.f32 %v2626, %v2062
      %v2727 = vmul.f32 %v2627, %v2065
      %v2728 = vmul.f32 %v2628, %v2070
      %v2729 = vmul.f32 %v2629, %v2073
      %v2730 = vmul.f32 %v2630, %v2078
      %v2731 = vmul.f32 %v2631, %v2081
      %v2732 = vmul.f32 %v2632, %v2086
      %v2733 = vadd.f32 %v2688, %v2689
      %v2734 = vadd.f32 %v2733, %v2690
      %v2735 = vadd.f32 %v2734, %v2691
      %v2736 = vadd.f32 %v2735, %v2692
      %v2737 = vadd.f32 %v2736, %v2693
      %v2738 = vadd.f32 %v2737, %v2694
      %v2739 = vadd.f32 %v2738, %v2695
      %v2740 = vadd.f32 %v2739, %v2696
      %v2741 = vadd.f32 %v2740, %v2697
      %v2742 = vadd.f32 %v2741, %v2698
      %v2743 = vadd.f32 %v2742, %v2699
      %v2744 = vadd.f32 %v2743, %v2700
      %v2745 = vadd.f32 %v2744, %v2701
      %v2746 = vadd.f32 %v2745, %v2702
      %v2747 = vadd.f32 %v2746, %v2703
      %v2748 = vadd.f32 %v2747, %v2704
      %v2749 = vadd.f32 %v2748, %v2705
      %v2750 = vadd.f32 %v2749, %v2706
      %v2751 = vadd.f32 %v2750, %v2707
      %v2752 = vadd.f32 %v2751, %v2708
      %v2753 = vadd.f32 %v2752, %v2709
      %v2754 = vadd.f32 %v2753, %v2710
      %v2755 = vadd.f32 %v2754, %v2711
      %v2756 = vadd.f32 %v2755, %v2712
      %v2757 = vadd.f32 %v2756, %v2713
      %v2758 = vadd.f32 %v2757, %v2714
      %v2759 = vadd.f32 %v2758, %v2715
      %v2760 = vadd.f32 %v2759, %v2716
      %v2761 = vadd.f32 %v2760, %v2717
      %v2762 = vadd.f32 %v2761, %v2718
      %v2763 = vadd.f32 %v2762, %v2719
      %v2764 = vadd.f32 %v2763, %v2720
      %v2765 = vadd.f32 %v2764, %v2721
      %v2766 = vadd.f32 %v2765, %v2722
      %v2767 = vadd.f32 %v2766, %v2723
      %v2768 = vadd.f32 %v2767, %v2724
      %v2769 = vadd.f32 %v2768, %v2725
      %v2770 = vadd.f32 %v2769, %v2726
      %v2771 = vadd.f32 %v2770, %v2727
      %v2772 = vadd.f32 %v2771, %v2728
      %v2773 = vadd.f32 %v2772, %v2729
      %v2774 = vadd.f32 %v2773, %v2730
      %v2775 = vadd.f32 %v2774, %v2731
      %v2776 = vadd.f32 %v2775, %v2732
      %v2777 = vrot.slane %v2776, 4
      %v2778 = vadd.f32 %v2776, %v2777
      %v2779 = vrot.slane %v2778, 2
      %v2780 = vadd.f32 %v2778, %v2779
      %v2781 = vrot.slane %v2780, 1
      %v2782 = vadd.f32 %v2780, %v2781
      %2783 = vst.msk [vmem:[%s208 + $0x1] sm:$0x1] %vm2686, %v2782
      %p2784 = scmp.lt.s32.totalorder %s16, 1
      %s2785 = scalar_select %p2784, %s16, 1
      %s2786 = smul.addr %s2785, 46
      %s2787 = smul.addr %s2786, 4
      %s2788 = scalar_lea.vmem %s3, %s2787
      %p2789 = scmp.lt.s32.totalorder %s16, 1
      %s2790 = scalar_select %p2789, %s16, 1
      %s2791 = smul.addr %s2790, 2
      %s2792 = scalar_lea.vmem %s4, %s2791
      // Predicated region
      $region33: #{double_conv_forward.3} parent=31 // pred_check
        %p2793 = pneg %p102
      $region34: #{double_conv_forward.3} parent=31 // pred_check_branch
        %2795 = sbr.rel (%p2793) target = $region36
      $region35: #{double_conv_forward.3} parent=31 // pred_region
        _
      $region36: #{double_conv_forward.3} parent=31 // pred_fallthru
        _
      // Predicated region
      $region37: #{double_conv_forward.3} parent=31 // pred_check
        %p2796 = pneg %p128
      $region38: #{double_conv_forward.3} parent=31 // pred_check_branch
        %2798 = sbr.rel (%p2796) target = $region40
      $region39: #{double_conv_forward.3} parent=31 // pred_region
        _
      $region40: #{double_conv_forward.3} parent=31 // pred_fallthru
        _
    $region32: #{double_conv_forward.3} parent=5 // pred_fallthru
      _
    %p2799 = scmp.le.s32.totalorder 2, %s11
    // Predicated region
    $region41: #{double_conv_forward.3} parent=5 // pred_check
      %p2800 = pneg %p2799
    $region42: #{double_conv_forward.3} parent=5 // pred_check_branch
      %2802 = sbr.rel (%p2800) target = $region44
    $region43: #{double_conv_forward.3} parent=5 // pred_region
      %s2803 = ssub.s32 %s11, 2
      // Predicated region
      $region45: #{double_conv_forward.3} parent=43 // pred_check
        %p2804 = pneg %p108
      $region46: #{double_conv_forward.3} parent=43 // pred_check_branch
        %2806 = sbr.rel (%p2804) target = $region48
      $region47: #{double_conv_forward.3} parent=43 // pred_region
        %p2807 = scmp.lt.s32.totalorder %s17, 1
        %s2808 = scalar_select %p2807, %s17, 1
        %s2809 = smul.addr %s2808, 46
        %s2810 = smul.addr %s2809, 4
        %s2811 = scalar_lea.vmem %s3, %s2810
      $region48: #{double_conv_forward.3} parent=43 // pred_fallthru
        _
      // Predicated region
      $region49: #{double_conv_forward.3} parent=43 // pred_check
        %p2812 = pneg %p134
      $region50: #{double_conv_forward.3} parent=43 // pred_check_branch
        %2814 = sbr.rel (%p2812) target = $region52
      $region51: #{double_conv_forward.3} parent=43 // pred_region
        %p2815 = scmp.lt.s32.totalorder %s17, 1
        %s2816 = scalar_select %p2815, %s17, 1
        %s2817 = smul.addr %s2816, 2
        %s2818 = scalar_lea.vmem %s4, %s2817
      $region52: #{double_conv_forward.3} parent=43 // pred_fallthru
        _
    $region44: #{double_conv_forward.3} parent=5 // pred_fallthru
      _
  $region6: #{double_conv_forward.3} parent=0 // loop_footer
    %s15 = sadd.s32 1, %s11
  $region7: #{double_conv_forward.3} parent=0 // loop_footer_branch
    %10 = sbr.rel target = $region3
  $region8: #{double_conv_forward.3} parent=0 // loop_exit
    _

// kernel: double_conv_forward.4
$region0: #{double_conv_forward.4}
  #allocation0 [shape = 'u32[]', space=smem, size = 0x4, offset = 0x4, fixed_abs, tag = 'smem constant byte address 0x4 - core index']
  #allocation1 [shape = 'u32[144,128]{1,0:T(1,128)}', space=vmem, size = 0x12000, scoped, tag = 'internal scratch']
  %s0 = inlined_call_operand.vmem [shape: bf16[2,362,128], index: 0, kind: input, shape index: {}]
  %s1 = inlined_call_operand.vmem [shape: bf16[1152,128], index: 1, kind: input, shape index: {}]
  %s2 = inlined_call_operand.vmem [shape: f32[320,1], index: 2, kind: input, shape index: {}]
  %s3 = inlined_call_operand.vmem [shape: f32[1,128], index: 3, kind: input, shape index: {}]
  %s4 = inlined_call_operand.vmem [shape: f32[1,128], index: 4, kind: input, shape index: {}]
  %s5 = inlined_call_operand.vmem [shape: bf16[2,320,128], index: 5, kind: output, shape index: {0}]
  %s6 = inlined_call_operand.vmem [shape: f32[2,1,256], index: 6, kind: output, shape index: {1}]
  %7 = xla_tuple %s5, %s6
  %s8 = sld [smem:[#allocation0]]
  $region61: #{double_conv_forward.4} parent=0
    _
  %s10 = ssub.s32 1, %s8
  %s11 = scalar_select 0, %s10, %s8
  loop: start=0, step=1, limit=4
  $region2: #{double_conv_forward.4} parent=0 // loop_pre_header
    _
  $region3: #{double_conv_forward.4} parent=0 // loop_header
    %s13 = sphi 0, %s17
    %p14 = scmp.ge.s32.totalorder %s13, 4
    %s23 = sphi 0, %s25
    %s26 = sphi 0, %s23
    %s27 = sphi 0, %s26
    %s43 = sphi 0, %s27
    %s47 = sphi 0, %s47
    %s49 = sphi 0, %s47
    %s50 = sphi 0, %s49
    %s64 = sphi 0, %s50
    %s68 = sphi 0, %s68
    %s70 = sphi 0, %s68
    %s71 = sphi 0, %s70
    %s85 = sphi 0, %s71
    %s89 = sphi 0, %s89
    %s91 = sphi 0, %s89
    %s92 = sphi 0, %s91
    %s106 = sphi 0, %s92
    %s110 = sphi 0, %s110
    %s112 = sphi 0, %s110
    %s113 = sphi 0, %s112
    %s127 = sphi 0, %s113
    %s133 = sphi 0, %s135
    %s136 = sphi 0, %s133
    %s137 = sphi 0, %s136
    %s153 = sphi 0, %s137
    %s159 = sphi 0, %s161
    %s162 = sphi 0, %s159
    %s163 = sphi 0, %s162
    %s179 = sphi 0, %s163
  $region4: #{double_conv_forward.4} parent=0 // loop_header_branch
    %16 = sbr.rel (%p14) target = $region8
  $region5: #{double_conv_forward.4} parent=0 // loop_body
    %s18 = ssub.s32 %s13, 1
    %s19 = ssub.s32 %s13, 2
    %s20 = sadd.s32 %s13, 1
    %s21 = ssub.s32 %s13, %s20
    %p22 = scmp.eq.s32.totalorder %s21, 0
    %s24 = sadd.s32 %s23, 1
    %s25 = scalar_select %p22, %s23, %s24
    %p28 = pneg %p22
    %p29 = scmp.eq.s32.totalorder %s13, 1
    %p30 = por %p28, %p29
    %p31 = scmp.ne.s32.totalorder %s23, %s26
    %p32 = scmp.eq.s32.totalorder %s13, 0
    %p33 = por %p31, %p32
    %p34 = scmp.ne.s32.totalorder %s23, %s26
    %p35 = scmp.eq.s32.totalorder %s18, 1
    %p36 = por %p34, %p35
    %p37 = scmp.ne.s32.totalorder %s26, %s27
    %p38 = scmp.eq.s32.totalorder %s18, 0
    %p39 = por %p37, %p38
    %p40 = scmp.ne.s32.totalorder %s26, %s27
    %p41 = scmp.eq.s32.totalorder %s19, 1
    %p42 = por %p40, %p41
    %p44 = scmp.ne.s32.totalorder %s27, %s43
    %p45 = scmp.eq.s32.totalorder %s19, 0
    %p46 = por %p44, %p45
    %s48 = sadd.s32 %s47, 1
    %p51 = scmp.eq.s32.totalorder %s13, 1
    %p52 = scmp.ne.s32.totalorder %s47, %s49
    %p53 = scmp.eq.s32.totalorder %s13, 0
    %p54 = por %p52, %p53
    %p55 = scmp.ne.s32.totalorder %s47, %s49
    %p56 = scmp.eq.s32.totalorder %s18, 1
    %p57 = por %p55, %p56
    %p58 = scmp.ne.s32.totalorder %s49, %s50
    %p59 = scmp.eq.s32.totalorder %s18, 0
    %p60 = por %p58, %p59
    %p61 = scmp.ne.s32.totalorder %s49, %s50
    %p62 = scmp.eq.s32.totalorder %s19, 1
    %p63 = por %p61, %p62
    %p65 = scmp.ne.s32.totalorder %s50, %s64
    %p66 = scmp.eq.s32.totalorder %s19, 0
    %p67 = por %p65, %p66
    %s69 = sadd.s32 %s68, 1
    %p72 = scmp.eq.s32.totalorder %s13, 1
    %p73 = scmp.ne.s32.totalorder %s68, %s70
    %p74 = scmp.eq.s32.totalorder %s13, 0
    %p75 = por %p73, %p74
    %p76 = scmp.ne.s32.totalorder %s68, %s70
    %p77 = scmp.eq.s32.totalorder %s18, 1
    %p78 = por %p76, %p77
    %p79 = scmp.ne.s32.totalorder %s70, %s71
    %p80 = scmp.eq.s32.totalorder %s18, 0
    %p81 = por %p79, %p80
    %p82 = scmp.ne.s32.totalorder %s70, %s71
    %p83 = scmp.eq.s32.totalorder %s19, 1
    %p84 = por %p82, %p83
    %p86 = scmp.ne.s32.totalorder %s71, %s85
    %p87 = scmp.eq.s32.totalorder %s19, 0
    %p88 = por %p86, %p87
    %s90 = sadd.s32 %s89, 1
    %p93 = scmp.eq.s32.totalorder %s13, 1
    %p94 = scmp.ne.s32.totalorder %s89, %s91
    %p95 = scmp.eq.s32.totalorder %s13, 0
    %p96 = por %p94, %p95
    %p97 = scmp.ne.s32.totalorder %s89, %s91
    %p98 = scmp.eq.s32.totalorder %s18, 1
    %p99 = por %p97, %p98
    %p100 = scmp.ne.s32.totalorder %s91, %s92
    %p101 = scmp.eq.s32.totalorder %s18, 0
    %p102 = por %p100, %p101
    %p103 = scmp.ne.s32.totalorder %s91, %s92
    %p104 = scmp.eq.s32.totalorder %s19, 1
    %p105 = por %p103, %p104
    %p107 = scmp.ne.s32.totalorder %s92, %s106
    %p108 = scmp.eq.s32.totalorder %s19, 0
    %p109 = por %p107, %p108
    %s111 = sadd.s32 %s110, 1
    %p114 = scmp.eq.s32.totalorder %s13, 1
    %p115 = scmp.ne.s32.totalorder %s110, %s112
    %p116 = scmp.eq.s32.totalorder %s13, 0
    %p117 = por %p115, %p116
    %p118 = scmp.ne.s32.totalorder %s110, %s112
    %p119 = scmp.eq.s32.totalorder %s18, 1
    %p120 = por %p118, %p119
    %p121 = scmp.ne.s32.totalorder %s112, %s113
    %p122 = scmp.eq.s32.totalorder %s18, 0
    %p123 = por %p121, %p122
    %p124 = scmp.ne.s32.totalorder %s112, %s113
    %p125 = scmp.eq.s32.totalorder %s19, 1
    %p126 = por %p124, %p125
    %p128 = scmp.ne.s32.totalorder %s113, %s127
    %p129 = scmp.eq.s32.totalorder %s19, 0
    %p130 = por %p128, %p129
    %s131 = ssub.s32 %s13, %s20
    %p132 = scmp.eq.s32.totalorder %s131, 0
    %s134 = sadd.s32 %s133, 1
    %s135 = scalar_select %p132, %s133, %s134
    %p138 = pneg %p132
    %p139 = scmp.eq.s32.totalorder %s13, 1
    %p140 = por %p138, %p139
    %p141 = scmp.ne.s32.totalorder %s133, %s136
    %p142 = scmp.eq.s32.totalorder %s13, 0
    %p143 = por %p141, %p142
    %p144 = scmp.ne.s32.totalorder %s133, %s136
    %p145 = scmp.eq.s32.totalorder %s18, 1
    %p146 = por %p144, %p145
    %p147 = scmp.ne.s32.totalorder %s136, %s137
    %p148 = scmp.eq.s32.totalorder %s18, 0
    %p149 = por %p147, %p148
    %p150 = scmp.ne.s32.totalorder %s136, %s137
    %p151 = scmp.eq.s32.totalorder %s19, 1
    %p152 = por %p150, %p151
    %p154 = scmp.ne.s32.totalorder %s137, %s153
    %p155 = scmp.eq.s32.totalorder %s19, 0
    %p156 = por %p154, %p155
    %s157 = ssub.s32 %s13, %s20
    %p158 = scmp.eq.s32.totalorder %s157, 0
    %s160 = sadd.s32 %s159, 1
    %s161 = scalar_select %p158, %s159, %s160
    %p164 = pneg %p158
    %p165 = scmp.eq.s32.totalorder %s13, 1
    %p166 = por %p164, %p165
    %p167 = scmp.ne.s32.totalorder %s159, %s162
    %p168 = scmp.eq.s32.totalorder %s13, 0
    %p169 = por %p167, %p168
    %p170 = scmp.ne.s32.totalorder %s159, %s162
    %p171 = scmp.eq.s32.totalorder %s18, 1
    %p172 = por %p170, %p171
    %p173 = scmp.ne.s32.totalorder %s162, %s163
    %p174 = scmp.eq.s32.totalorder %s18, 0
    %p175 = por %p173, %p174
    %p176 = scmp.ne.s32.totalorder %s162, %s163
    %p177 = scmp.eq.s32.totalorder %s19, 1
    %p178 = por %p176, %p177
    %p180 = scmp.ne.s32.totalorder %s163, %s179
    %p181 = scmp.eq.s32.totalorder %s19, 0
    %p182 = por %p180, %p181
    %p183 = scmp.le.s32.totalorder 1, %s13
    %p184 = scmp.lt.s32.totalorder %s13, 3
    %p185 = pnand %p183, %p184
    %p186 = pneg %p185
    // Predicated region
    $region9: #{double_conv_forward.4} parent=5 // pred_check
      _
    $region10: #{double_conv_forward.4} parent=5 // pred_check_branch
      %188 = sbr.rel (%p185) target = $region12
    $region11: #{double_conv_forward.4} parent=5 // pred_region
      %s189 = ssub.s32 %s13, 1
      // Predicated region
      $region13: #{double_conv_forward.4} parent=11 // pred_check
        %p190 = pneg %p60
      $region14: #{double_conv_forward.4} parent=11 // pred_check_branch
        %192 = sbr.rel (%p190) target = $region16
      $region15: #{double_conv_forward.4} parent=11 // pred_region
        _
      $region16: #{double_conv_forward.4} parent=11 // pred_fallthru
        _
      // Predicated region
      $region17: #{double_conv_forward.4} parent=11 // pred_check
        %p193 = pneg %p81
      $region18: #{double_conv_forward.4} parent=11 // pred_check_branch
        %195 = sbr.rel (%p193) target = $region20
      $region19: #{double_conv_forward.4} parent=11 // pred_region
        _
      $region20: #{double_conv_forward.4} parent=11 // pred_fallthru
        _
      // Predicated region
      $region21: #{double_conv_forward.4} parent=11 // pred_check
        %p196 = pneg %p102
      $region22: #{double_conv_forward.4} parent=11 // pred_check_branch
        %198 = sbr.rel (%p196) target = $region24
      $region23: #{double_conv_forward.4} parent=11 // pred_region
        _
      $region24: #{double_conv_forward.4} parent=11 // pred_fallthru
        _
      // Predicated region
      $region25: #{double_conv_forward.4} parent=11 // pred_check
        %p199 = pneg %p123
      $region26: #{double_conv_forward.4} parent=11 // pred_check_branch
        %201 = sbr.rel (%p199) target = $region28
      $region27: #{double_conv_forward.4} parent=11 // pred_region
        _
      $region28: #{double_conv_forward.4} parent=11 // pred_fallthru
        _
    $region12: #{double_conv_forward.4} parent=5 // pred_fallthru
      _
    %p202 = scmp.lt.s32.totalorder %s13, 2
    // Predicated region
    $region29: #{double_conv_forward.4} parent=5 // pred_check
      %p203 = pneg %p202
    $region30: #{double_conv_forward.4} parent=5 // pred_check_branch
      %205 = sbr.rel (%p203) target = $region32
    $region31: #{double_conv_forward.4} parent=5 // pred_region
      // Predicated region
      $region33: #{double_conv_forward.4} parent=31 // pred_check
        %p206 = pneg %p33
      $region34: #{double_conv_forward.4} parent=31 // pred_check_branch
        %208 = sbr.rel (%p206) target = $region36
      $region35: #{double_conv_forward.4} parent=31 // pred_region
        %p209 = scmp.lt.s32.totalorder %s13, 1
        %s210 = scalar_select %p209, %s13, 1
        %s211 = smul.addr %s210, 46
        %s212 = smul.addr %s211, 4
        %s213 = scalar_lea.vmem %s0, %s212
      $region36: #{double_conv_forward.4} parent=31 // pred_fallthru
        _
    $region32: #{double_conv_forward.4} parent=5 // pred_fallthru
      _
    %p214 = scmp.le.s32.totalorder 1, %s13
    %p215 = scmp.lt.s32.totalorder %s13, 3
    %p216 = pnand %p214, %p215
    %p217 = pneg %p216
    // Predicated region
    $region37: #{double_conv_forward.4} parent=5 // pred_check
      _
    $region38: #{double_conv_forward.4} parent=5 // pred_check_branch
      %219 = sbr.rel (%p216) target = $region40
    $region39: #{double_conv_forward.4} parent=5 // pred_region
      %s220 = ssub.s32 %s13, 1
      %p221 = scmp.lt.s32.totalorder %s18, 1
      %s222 = scalar_select %p221, %s18, 1
      %s223 = smul.addr %s222, 46
      %s224 = smul.addr %s223, 4
      %s225 = scalar_lea.vmem %s0, %s224
      %p226 = pneg %p39
      %p227 = pneg %p36
      %p228 = pneg %p60
      %p229 = pneg %p57
      %p230 = pneg %p81
      %p231 = pneg %p78
      %p232 = pneg %p102
      %p233 = pneg %p99
      %p234 = pneg %p123
      %p235 = pneg %p120
      %p236 = pneg %p149
      %p237 = pneg %p146
      %p238 = scmp.lt.s32.totalorder %s18, 1
      %s239 = scalar_select %p238, %s18, 1
      %s240 = smul.addr %s239, 40
      %s241 = smul.addr %s240, 4
      %s242 = scalar_lea.vmem %s5, %s241
      %p243 = pneg %p175
      %p244 = pneg %p172
      %p245 = scmp.lt.s32.totalorder %s18, 1
      %s246 = scalar_select %p245, %s18, 1
      %s247 = smul.addr %s246, 2
      %s248 = scalar_lea.vmem %s6, %s247
      %p249 = scmp.lt.s32.totalorder %s18, 1
      %s250 = scalar_select %p249, %s18, 1
      %s251 = smul.addr %s250, 46
      %s252 = smul.addr %s251, 4
      %s253 = scalar_lea.vmem %s0, %s252
      %p254 = scmp.lt.s32.totalorder %s18, 1
      %s255 = scalar_select %p254, %s18, 1
      %s256 = smul.addr %s255, 40
      %s257 = smul.addr %s256, 4
      %s258 = scalar_lea.vmem %s5, %s257
      %p259 = scmp.lt.s32.totalorder %s18, 1
      %s260 = scalar_select %p259, %s18, 1
      %s261 = smul.addr %s260, 2
      %s262 = scalar_lea.vmem %s6, %s261
      %v264 = vld [vmem:[%s253] sm:$0xf]
      %v265 = vld [vmem:[%s253 + $0x4] sm:$0xf]
      %v266 = vld [vmem:[%s253 + $0x8] sm:$0xf]
      %v267 = vld [vmem:[%s253 + $0xc] sm:$0xf]
      %v268 = vld [vmem:[%s253 + $0x10] sm:$0xf]
      %v269 = vld [vmem:[%s253 + $0x14] sm:$0xf]
      %v270 = vld [vmem:[%s253 + $0x18] sm:$0xf]
      %v271 = vld [vmem:[%s253 + $0x1c] sm:$0xf]
      %v272 = vld [vmem:[%s253 + $0x20] sm:$0xf]
      %v273 = vld [vmem:[%s253 + $0x24] sm:$0xf]
      %v274 = vld [vmem:[%s253 + $0x28] sm:$0xf]
      %v275 = vld [vmem:[%s253 + $0x2c] sm:$0xf]
      %v276 = vld [vmem:[%s253 + $0x30] sm:$0xf]
      %v277 = vld [vmem:[%s253 + $0x34] sm:$0xf]
      %v278 = vld [vmem:[%s253 + $0x38] sm:$0xf]
      %v279 = vld [vmem:[%s253 + $0x3c] sm:$0xf]
      %v280 = vld [vmem:[%s253 + $0x40] sm:$0xf]
      %v281 = vld [vmem:[%s253 + $0x44] sm:$0xf]
      %v282 = vld [vmem:[%s253 + $0x48] sm:$0xf]
      %v283 = vld [vmem:[%s253 + $0x4c] sm:$0xf]
      %v284 = vld [vmem:[%s253 + $0x50] sm:$0xf]
      %v285 = vld [vmem:[%s253 + $0x54] sm:$0xf]
      %v286 = vld [vmem:[%s253 + $0x58] sm:$0xf]
      %v287 = vld [vmem:[%s253 + $0x5c] sm:$0xf]
      %v288 = vld [vmem:[%s253 + $0x60] sm:$0xf]
      %v289 = vld [vmem:[%s253 + $0x64] sm:$0xf]
      %v290 = vld [vmem:[%s253 + $0x68] sm:$0xf]
      %v291 = vld [vmem:[%s253 + $0x6c] sm:$0xf]
      %v292 = vld [vmem:[%s253 + $0x70] sm:$0xf]
      %v293 = vld [vmem:[%s253 + $0x74] sm:$0xf]
      %v294 = vld [vmem:[%s253 + $0x78] sm:$0xf]
      %v295 = vld [vmem:[%s253 + $0x7c] sm:$0xf]
      %v296 = vld [vmem:[%s253 + $0x80] sm:$0xf]
      %v297 = vld [vmem:[%s253 + $0x84] sm:$0xf]
      %v298 = vld [vmem:[%s253 + $0x88] sm:$0xf]
      %v299 = vld [vmem:[%s253 + $0x8c] sm:$0xf]
      %v300 = vld [vmem:[%s253 + $0x90] sm:$0xf]
      %v301 = vld [vmem:[%s253 + $0x94] sm:$0xf]
      %v302 = vld [vmem:[%s253 + $0x98] sm:$0xf]
      %v303 = vld [vmem:[%s253 + $0x9c] sm:$0xf]
      %v304 = vld [vmem:[%s253 + $0xa0] sm:$0xf]
      %v305 = vld [vmem:[%s253 + $0xa4] sm:$0xf]
      %v306 = vld [vmem:[%s253 + $0xa8] sm:$0xf]
      %v307 = vld [vmem:[%s253 + $0xac] sm:$0xf]
      %v308 = vld [vmem:[%s253 + $0xb0] sm:$0xf]
      %v309 = vld [vmem:[%s253 + $0xb4] sm:$0x1]
      %v310 = vunpack.c.l.bf16 %v264
      %v311 = vunpack.c.l.bf16 %v265
      %v312 = vunpack.c.l.bf16 %v266
      %v313 = vunpack.c.l.bf16 %v267
      %v314 = vunpack.c.l.bf16 %v268
      %v315 = vunpack.c.l.bf16 %v269
      %v316 = vunpack.c.l.bf16 %v270
      %v317 = vunpack.c.l.bf16 %v271
      %v318 = vunpack.c.l.bf16 %v272
      %v319 = vunpack.c.l.bf16 %v273
      %v320 = vunpack.c.l.bf16 %v274
      %v321 = vunpack.c.l.bf16 %v275
      %v322 = vunpack.c.l.bf16 %v276
      %v323 = vunpack.c.l.bf16 %v277
      %v324 = vunpack.c.l.bf16 %v278
      %v325 = vunpack.c.l.bf16 %v279
      %v326 = vunpack.c.l.bf16 %v280
      %v327 = vunpack.c.l.bf16 %v281
      %v328 = vunpack.c.l.bf16 %v282
      %v329 = vunpack.c.l.bf16 %v283
      %v330 = vunpack.c.l.bf16 %v284
      %v331 = vunpack.c.l.bf16 %v285
      %v332 = vunpack.c.l.bf16 %v286
      %v333 = vunpack.c.l.bf16 %v287
      %v334 = vunpack.c.l.bf16 %v288
      %v335 = vunpack.c.l.bf16 %v289
      %v336 = vunpack.c.l.bf16 %v290
      %v337 = vunpack.c.l.bf16 %v291
      %v338 = vunpack.c.l.bf16 %v292
      %v339 = vunpack.c.l.bf16 %v293
      %v340 = vunpack.c.l.bf16 %v294
      %v341 = vunpack.c.l.bf16 %v295
      %v342 = vunpack.c.l.bf16 %v296
      %v343 = vunpack.c.l.bf16 %v297
      %v344 = vunpack.c.l.bf16 %v298
      %v345 = vunpack.c.l.bf16 %v299
      %v346 = vunpack.c.l.bf16 %v300
      %v347 = vunpack.c.l.bf16 %v301
      %v348 = vunpack.c.l.bf16 %v302
      %v349 = vunpack.c.l.bf16 %v303
      %v350 = vunpack.c.l.bf16 %v304
      %v351 = vunpack.c.l.bf16 %v305
      %v352 = vunpack.c.l.bf16 %v306
      %v353 = vunpack.c.l.bf16 %v307
      %v354 = vunpack.c.l.bf16 %v308
      %v355 = vunpack.c.l.bf16 %v309
      %v356 = vld [vmem:[%s3] sm:$0x1]
      %v358 = vlaneseq
      %v359 = vshrl.u32 %v358, 7
      %v360 = vsub.s32 0, %v359
      %v361 = vrot.slane %v356, %v360
      %v363 = vmul.f32 %v310, %v361
      %v364 = vmul.f32 %v311, %v361
      %v365 = vmul.f32 %v312, %v361
      %v366 = vmul.f32 %v313, %v361
      %v367 = vmul.f32 %v314, %v361
      %v368 = vmul.f32 %v315, %v361
      %v369 = vmul.f32 %v316, %v361
      %v370 = vmul.f32 %v317, %v361
      %v371 = vmul.f32 %v318, %v361
      %v372 = vmul.f32 %v319, %v361
      %v373 = vmul.f32 %v320, %v361
      %v374 = vmul.f32 %v321, %v361
      %v375 = vmul.f32 %v322, %v361
      %v376 = vmul.f32 %v323, %v361
      %v377 = vmul.f32 %v324, %v361
      %v378 = vmul.f32 %v325, %v361
      %v379 = vmul.f32 %v326, %v361
      %v380 = vmul.f32 %v327, %v361
      %v381 = vmul.f32 %v328, %v361
      %v382 = vmul.f32 %v329, %v361
      %v383 = vmul.f32 %v330, %v361
      %v384 = vmul.f32 %v331, %v361
      %v385 = vmul.f32 %v332, %v361
      %v386 = vmul.f32 %v333, %v361
      %v387 = vmul.f32 %v334, %v361
      %v388 = vmul.f32 %v335, %v361
      %v389 = vmul.f32 %v336, %v361
      %v390 = vmul.f32 %v337, %v361
      %v391 = vmul.f32 %v338, %v361
      %v392 = vmul.f32 %v339, %v361
      %v393 = vmul.f32 %v340, %v361
      %v394 = vmul.f32 %v341, %v361
      %v395 = vmul.f32 %v342, %v361
      %v396 = vmul.f32 %v343, %v361
      %v397 = vmul.f32 %v344, %v361
      %v398 = vmul.f32 %v345, %v361
      %v399 = vmul.f32 %v346, %v361
      %v400 = vmul.f32 %v347, %v361
      %v401 = vmul.f32 %v348, %v361
      %v402 = vmul.f32 %v349, %v361
      %v403 = vmul.f32 %v350, %v361
      %v404 = vmul.f32 %v351, %v361
      %v405 = vmul.f32 %v352, %v361
      %v406 = vmul.f32 %v353, %v361
      %v407 = vmul.f32 %v354, %v361
      %v408 = vmul.f32 %v355, %v361
      %v409 = vld [vmem:[%s4] sm:$0x1]
      %v411 = vlaneseq
      %v412 = vshrl.u32 %v411, 7
      %v413 = vsub.s32 0, %v412
      %v414 = vrot.slane %v409, %v413
      %v416 = vadd.f32 %v363, %v414
      %v417 = vadd.f32 %v364, %v414
      %v418 = vadd.f32 %v365, %v414
      %v419 = vadd.f32 %v366, %v414
      %v420 = vadd.f32 %v367, %v414
      %v421 = vadd.f32 %v368, %v414
      %v422 = vadd.f32 %v369, %v414
      %v423 = vadd.f32 %v370, %v414
      %v424 = vadd.f32 %v371, %v414
      %v425 = vadd.f32 %v372, %v414
      %v426 = vadd.f32 %v373, %v414
      %v427 = vadd.f32 %v374, %v414
      %v428 = vadd.f32 %v375, %v414
      %v429 = vadd.f32 %v376, %v414
      %v430 = vadd.f32 %v377, %v414
      %v431 = vadd.f32 %v378, %v414
      %v432 = vadd.f32 %v379, %v414
      %v433 = vadd.f32 %v380, %v414
      %v434 = vadd.f32 %v381, %v414
      %v435 = vadd.f32 %v382, %v414
      %v436 = vadd.f32 %v383, %v414
      %v437 = vadd.f32 %v384, %v414
      %v438 = vadd.f32 %v385, %v414
      %v439 = vadd.f32 %v386, %v414
      %v440 = vadd.f32 %v387, %v414
      %v441 = vadd.f32 %v388, %v414
      %v442 = vadd.f32 %v389, %v414
      %v443 = vadd.f32 %v390, %v414
      %v444 = vadd.f32 %v391, %v414
      %v445 = vadd.f32 %v392, %v414
      %v446 = vadd.f32 %v393, %v414
      %v447 = vadd.f32 %v394, %v414
      %v448 = vadd.f32 %v395, %v414
      %v449 = vadd.f32 %v396, %v414
      %v450 = vadd.f32 %v397, %v414
      %v451 = vadd.f32 %v398, %v414
      %v452 = vadd.f32 %v399, %v414
      %v453 = vadd.f32 %v400, %v414
      %v454 = vadd.f32 %v401, %v414
      %v455 = vadd.f32 %v402, %v414
      %v456 = vadd.f32 %v403, %v414
      %v457 = vadd.f32 %v404, %v414
      %v458 = vadd.f32 %v405, %v414
      %v459 = vadd.f32 %v406, %v414
      %v460 = vadd.f32 %v407, %v414
      %v461 = vadd.f32 %v408, %v414
      %v462 = vmax.f32 %v416, 0.0
      %v463 = vmax.f32 %v417, 0.0
      %v464 = vmax.f32 %v418, 0.0
      %v465 = vmax.f32 %v419, 0.0
      %v466 = vmax.f32 %v420, 0.0
      %v467 = vmax.f32 %v421, 0.0
      %v468 = vmax.f32 %v422, 0.0
      %v469 = vmax.f32 %v423, 0.0
      %v470 = vmax.f32 %v424, 0.0
      %v471 = vmax.f32 %v425, 0.0
      %v472 = vmax.f32 %v426, 0.0
      %v473 = vmax.f32 %v427, 0.0
      %v474 = vmax.f32 %v428, 0.0
      %v475 = vmax.f32 %v429, 0.0
      %v476 = vmax.f32 %v430, 0.0
      %v477 = vmax.f32 %v431, 0.0
      %v478 = vmax.f32 %v432, 0.0
      %v479 = vmax.f32 %v433, 0.0
      %v480 = vmax.f32 %v434, 0.0
      %v481 = vmax.f32 %v435, 0.0
      %v482 = vmax.f32 %v436, 0.0
      %v483 = vmax.f32 %v437, 0.0
      %v484 = vmax.f32 %v438, 0.0
      %v485 = vmax.f32 %v439, 0.0
      %v486 = vmax.f32 %v440, 0.0
      %v487 = vmax.f32 %v441, 0.0
      %v488 = vmax.f32 %v442, 0.0
      %v489 = vmax.f32 %v443, 0.0
      %v490 = vmax.f32 %v444, 0.0
      %v491 = vmax.f32 %v445, 0.0
      %v492 = vmax.f32 %v446, 0.0
      %v493 = vmax.f32 %v447, 0.0
      %v494 = vmax.f32 %v448, 0.0
      %v495 = vmax.f32 %v449, 0.0
      %v496 = vmax.f32 %v450, 0.0
      %v497 = vmax.f32 %v451, 0.0
      %v498 = vmax.f32 %v452, 0.0
      %v499 = vmax.f32 %v453, 0.0
      %v500 = vmax.f32 %v454, 0.0
      %v501 = vmax.f32 %v455, 0.0
      %v502 = vmax.f32 %v456, 0.0
      %v503 = vmax.f32 %v457, 0.0
      %v504 = vmax.f32 %v458, 0.0
      %v505 = vmax.f32 %v459, 0.0
      %v506 = vmax.f32 %v460, 0.0
      %v507 = vmax.f32 %v461, 0.0
      %v508 = vpack.c.bf16 %v463, %v462
      %v509 = vpack.c.bf16 %v465, %v464
      %v510 = vpack.c.bf16 %v467, %v466
      %v511 = vpack.c.bf16 %v469, %v468
      %v512 = vpack.c.bf16 %v471, %v470
      %v513 = vpack.c.bf16 %v473, %v472
      %v514 = vpack.c.bf16 %v475, %v474
      %v515 = vpack.c.bf16 %v477, %v476
      %v516 = vpack.c.bf16 %v479, %v478
      %v517 = vpack.c.bf16 %v481, %v480
      %v518 = vpack.c.bf16 %v483, %v482
      %v519 = vpack.c.bf16 %v485, %v484
      %v520 = vpack.c.bf16 %v487, %v486
      %v521 = vpack.c.bf16 %v489, %v488
      %v522 = vpack.c.bf16 %v491, %v490
      %v523 = vpack.c.bf16 %v493, %v492
      %v524 = vpack.c.bf16 %v495, %v494
      %v525 = vpack.c.bf16 %v497, %v496
      %v526 = vpack.c.bf16 %v499, %v498
      %v527 = vpack.c.bf16 %v501, %v500
      %v528 = vpack.c.bf16 %v503, %v502
      %v529 = vpack.c.bf16 %v505, %v504
      %v530 = vpack.c.bf16 %v507, %v506
      %vm531 = vsmask.f32 7424
      %v533 = vshrl.u32 %v508, 16
      %v535 = vshll.u32 %v508, 16
      %v537 = vrot.slane %v535, 1
      %v538 = vor.u32 %v533, %v537
      %v540 = vshll.u32 %v509, 16
      %v542 = vrot.slane %v540, 1
      %v543 = vsel %vm531, %v538, %v542
      %v544 = vshrl.u32 %v509, 16
      %v546 = vor.u32 %v544, %v542
      %v548 = vshll.u32 %v510, 16
      %v550 = vrot.slane %v548, 1
      %v551 = vsel %vm531, %v546, %v550
      %v552 = vshrl.u32 %v510, 16
      %v554 = vor.u32 %v552, %v550
      %v556 = vshll.u32 %v511, 16
      %v558 = vrot.slane %v556, 1
      %v559 = vsel %vm531, %v554, %v558
      %v560 = vshrl.u32 %v511, 16
      %v562 = vor.u32 %v560, %v558
      %v564 = vshll.u32 %v512, 16
      %v566 = vrot.slane %v564, 1
      %v567 = vsel %vm531, %v562, %v566
      %v568 = vshrl.u32 %v512, 16
      %v570 = vor.u32 %v568, %v566
      %v572 = vshll.u32 %v513, 16
      %v574 = vrot.slane %v572, 1
      %v575 = vsel %vm531, %v570, %v574
      %v576 = vshrl.u32 %v513, 16
      %v578 = vor.u32 %v576, %v574
      %v580 = vshll.u32 %v514, 16
      %v582 = vrot.slane %v580, 1
      %v583 = vsel %vm531, %v578, %v582
      %v584 = vshrl.u32 %v514, 16
      %v586 = vor.u32 %v584, %v582
      %v588 = vshll.u32 %v515, 16
      %v590 = vrot.slane %v588, 1
      %v591 = vsel %vm531, %v586, %v590
      %v592 = vshrl.u32 %v515, 16
      %v594 = vor.u32 %v592, %v590
      %v596 = vshll.u32 %v516, 16
      %v598 = vrot.slane %v596, 1
      %v599 = vsel %vm531, %v594, %v598
      %v600 = vshrl.u32 %v516, 16
      %v602 = vor.u32 %v600, %v598
      %v604 = vshll.u32 %v517, 16
      %v606 = vrot.slane %v604, 1
      %v607 = vsel %vm531, %v602, %v606
      %v608 = vshrl.u32 %v517, 16
      %v610 = vor.u32 %v608, %v606
      %v612 = vshll.u32 %v518, 16
      %v614 = vrot.slane %v612, 1
      %v615 = vsel %vm531, %v610, %v614
      %v616 = vshrl.u32 %v518, 16
      %v618 = vor.u32 %v616, %v614
      %v620 = vshll.u32 %v519, 16
      %v622 = vrot.slane %v620, 1
      %v623 = vsel %vm531, %v618, %v622
      %v624 = vshrl.u32 %v519, 16
      %v626 = vor.u32 %v624, %v622
      %v628 = vshll.u32 %v520, 16
      %v630 = vrot.slane %v628, 1
      %v631 = vsel %vm531, %v626, %v630
      %v632 = vshrl.u32 %v520, 16
      %v634 = vor.u32 %v632, %v630
      %v636 = vshll.u32 %v521, 16
      %v638 = vrot.slane %v636, 1
      %v639 = vsel %vm531, %v634, %v638
      %v640 = vshrl.u32 %v521, 16
      %v642 = vor.u32 %v640, %v638
      %v644 = vshll.u32 %v522, 16
      %v646 = vrot.slane %v644, 1
      %v647 = vsel %vm531, %v642, %v646
      %v648 = vshrl.u32 %v522, 16
      %v650 = vor.u32 %v648, %v646
      %v652 = vshll.u32 %v523, 16
      %v654 = vrot.slane %v652, 1
      %v655 = vsel %vm531, %v650, %v654
      %v656 = vshrl.u32 %v523, 16
      %v658 = vor.u32 %v656, %v654
      %v660 = vshll.u32 %v524, 16
      %v662 = vrot.slane %v660, 1
      %v663 = vsel %vm531, %v658, %v662
      %v664 = vshrl.u32 %v524, 16
      %v666 = vor.u32 %v664, %v662
      %v668 = vshll.u32 %v525, 16
      %v670 = vrot.slane %v668, 1
      %v671 = vsel %vm531, %v666, %v670
      %v672 = vshrl.u32 %v525, 16
      %v674 = vor.u32 %v672, %v670
      %v676 = vshll.u32 %v526, 16
      %v678 = vrot.slane %v676, 1
      %v679 = vsel %vm531, %v674, %v678
      %v680 = vshrl.u32 %v526, 16
      %v682 = vor.u32 %v680, %v678
      %v684 = vshll.u32 %v527, 16
      %v686 = vrot.slane %v684, 1
      %v687 = vsel %vm531, %v682, %v686
      %v688 = vshrl.u32 %v527, 16
      %v690 = vor.u32 %v688, %v686
      %v692 = vshll.u32 %v528, 16
      %v694 = vrot.slane %v692, 1
      %v695 = vsel %vm531, %v690, %v694
      %vm737 = vcmask 1046528
      %v738 = vrot.slane %v508, 1
      %v739 = vrot.slane %v509, 1
      %v740 = vsel %vm737, %v738, %v739
      %v741 = vrot.slane %v510, 1
      %v742 = vsel %vm737, %v739, %v741
      %v743 = vrot.slane %v511, 1
      %v744 = vsel %vm737, %v741, %v743
      %v745 = vrot.slane %v512, 1
      %v746 = vsel %vm737, %v743, %v745
      %v747 = vrot.slane %v513, 1
      %v748 = vsel %vm737, %v745, %v747
      %v749 = vrot.slane %v514, 1
      %v750 = vsel %vm737, %v747, %v749
      %v751 = vrot.slane %v515, 1
      %v752 = vsel %vm737, %v749, %v751
      %v753 = vrot.slane %v516, 1
      %v754 = vsel %vm737, %v751, %v753
      %v755 = vrot.slane %v517, 1
      %v756 = vsel %vm737, %v753, %v755
      %v757 = vrot.slane %v518, 1
      %v758 = vsel %vm737, %v755, %v757
      %v759 = vrot.slane %v519, 1
      %v760 = vsel %vm737, %v757, %v759
      %v761 = vrot.slane %v520, 1
      %v762 = vsel %vm737, %v759, %v761
      %v763 = vrot.slane %v521, 1
      %v764 = vsel %vm737, %v761, %v763
      %v765 = vrot.slane %v522, 1
      %v766 = vsel %vm737, %v763, %v765
      %v767 = vrot.slane %v523, 1
      %v768 = vsel %vm737, %v765, %v767
      %v769 = vrot.slane %v524, 1
      %v770 = vsel %vm737, %v767, %v769
      %v771 = vrot.slane %v525, 1
      %v772 = vsel %vm737, %v769, %v771
      %v773 = vrot.slane %v526, 1
      %v774 = vsel %vm737, %v771, %v773
      %v775 = vrot.slane %v527, 1
      %v776 = vsel %vm737, %v773, %v775
      %v777 = vrot.slane %v528, 1
      %v778 = vsel %vm737, %v775, %v777
      %vm800 = vcmask 1045504
      %v801 = vrot.slane %v509, 2
      %v802 = vrot.slane %v510, 2
      %v803 = vsel %vm800, %v801, %v802
      %v804 = vrot.slane %v511, 2
      %v805 = vsel %vm800, %v802, %v804
      %v806 = vrot.slane %v512, 2
      %v807 = vsel %vm800, %v804, %v806
      %v808 = vrot.slane %v513, 2
      %v809 = vsel %vm800, %v806, %v808
      %v810 = vrot.slane %v514, 2
      %v811 = vsel %vm800, %v808, %v810
      %v812 = vrot.slane %v515, 2
      %v813 = vsel %vm800, %v810, %v812
      %v814 = vrot.slane %v516, 2
      %v815 = vsel %vm800, %v812, %v814
      %v816 = vrot.slane %v517, 2
      %v817 = vsel %vm800, %v814, %v816
      %v818 = vrot.slane %v518, 2
      %v819 = vsel %vm800, %v816, %v818
      %v820 = vrot.slane %v519, 2
      %v821 = vsel %vm800, %v818, %v820
      %v822 = vrot.slane %v520, 2
      %v823 = vsel %vm800, %v820, %v822
      %v824 = vrot.slane %v521, 2
      %v825 = vsel %vm800, %v822, %v824
      %v826 = vrot.slane %v522, 2
      %v827 = vsel %vm800, %v824, %v826
      %v828 = vrot.slane %v523, 2
      %v829 = vsel %vm800, %v826, %v828
      %v830 = vrot.slane %v524, 2
      %v831 = vsel %vm800, %v828, %v830
      %v832 = vrot.slane %v525, 2
      %v833 = vsel %vm800, %v830, %v832
      %v834 = vrot.slane %v526, 2
      %v835 = vsel %vm800, %v832, %v834
      %v836 = vrot.slane %v527, 2
      %v837 = vsel %vm800, %v834, %v836
      %v838 = vrot.slane %v528, 2
      %v839 = vsel %vm800, %v836, %v838
      %v840 = vrot.slane %v529, 2
      %v841 = vsel %vm800, %v838, %v840
      %vm862 = vsmask.f32 5376
      %v863 = vrot.slane %v544, 2
      %v864 = vrot.slane %v540, 3
      %v865 = vor.u32 %v863, %v864
      %v866 = vrot.slane %v552, 2
      %v867 = vrot.slane %v548, 3
      %v868 = vor.u32 %v866, %v867
      %v869 = vsel %vm862, %v865, %v868
      %v870 = vrot.slane %v560, 2
      %v871 = vrot.slane %v556, 3
      %v872 = vor.u32 %v870, %v871
      %v873 = vsel %vm862, %v868, %v872
      %v874 = vrot.slane %v568, 2
      %v875 = vrot.slane %v564, 3
      %v876 = vor.u32 %v874, %v875
      %v877 = vsel %vm862, %v872, %v876
      %v878 = vrot.slane %v576, 2
      %v879 = vrot.slane %v572, 3
      %v880 = vor.u32 %v878, %v879
      %v881 = vsel %vm862, %v876, %v880
      %v882 = vrot.slane %v584, 2
      %v883 = vrot.slane %v580, 3
      %v884 = vor.u32 %v882, %v883
      %v885 = vsel %vm862, %v880, %v884
      %v886 = vrot.slane %v592, 2
      %v887 = vrot.slane %v588, 3
      %v888 = vor.u32 %v886, %v887
      %v889 = vsel %vm862, %v884, %v888
      %v890 = vrot.slane %v600, 2
      %v891 = vrot.slane %v596, 3
      %v892 = vor.u32 %v890, %v891
      %v893 = vsel %vm862, %v888, %v892
      %v894 = vrot.slane %v608, 2
      %v895 = vrot.slane %v604, 3
      %v896 = vor.u32 %v894, %v895
      %v897 = vsel %vm862, %v892, %v896
      %v898 = vrot.slane %v616, 2
      %v899 = vrot.slane %v612, 3
      %v900 = vor.u32 %v898, %v899
      %v901 = vsel %vm862, %v896, %v900
      %v902 = vrot.slane %v624, 2
      %v903 = vrot.slane %v620, 3
      %v904 = vor.u32 %v902, %v903
      %v905 = vsel %vm862, %v900, %v904
      %v906 = vrot.slane %v632, 2
      %v907 = vrot.slane %v628, 3
      %v908 = vor.u32 %v906, %v907
      %v909 = vsel %vm862, %v904, %v908
      %v910 = vrot.slane %v640, 2
      %v911 = vrot.slane %v636, 3
      %v912 = vor.u32 %v910, %v911
      %v913 = vsel %vm862, %v908, %v912
      %v914 = vrot.slane %v648, 2
      %v915 = vrot.slane %v644, 3
      %v916 = vor.u32 %v914, %v915
      %v917 = vsel %vm862, %v912, %v916
      %v918 = vrot.slane %v656, 2
      %v919 = vrot.slane %v652, 3
      %v920 = vor.u32 %v918, %v919
      %v921 = vsel %vm862, %v916, %v920
      %v922 = vrot.slane %v664, 2
      %v923 = vrot.slane %v660, 3
      %v924 = vor.u32 %v922, %v923
      %v925 = vsel %vm862, %v920, %v924
      %v926 = vrot.slane %v672, 2
      %v927 = vrot.slane %v668, 3
      %v928 = vor.u32 %v926, %v927
      %v929 = vsel %vm862, %v924, %v928
      %v930 = vrot.slane %v680, 2
      %v931 = vrot.slane %v676, 3
      %v932 = vor.u32 %v930, %v931
      %v933 = vsel %vm862, %v928, %v932
      %v934 = vrot.slane %v688, 2
      %v935 = vrot.slane %v684, 3
      %v936 = vor.u32 %v934, %v935
      %v937 = vsel %vm862, %v932, %v936
      %v938 = vshrl.u32 %v528, 16
      %v940 = vrot.slane %v938, 2
      %v941 = vrot.slane %v692, 3
      %v942 = vor.u32 %v940, %v941
      %v943 = vsel %vm862, %v936, %v942
      %v945 = vshrl.u32 %v529, 16
      %v947 = vrot.slane %v945, 2
      %v948 = vshll.u32 %v529, 16
      %v950 = vrot.slane %v948, 3
      %v951 = vor.u32 %v947, %v950
      %v952 = vsel %vm862, %v942, %v951
      %vm973 = vcmask 1044480
      %v974 = vrot.slane %v509, 3
      %v975 = vrot.slane %v510, 3
      %v976 = vsel %vm973, %v974, %v975
      %v977 = vrot.slane %v511, 3
      %v978 = vsel %vm973, %v975, %v977
      %v979 = vrot.slane %v512, 3
      %v980 = vsel %vm973, %v977, %v979
      %v981 = vrot.slane %v513, 3
      %v982 = vsel %vm973, %v979, %v981
      %v983 = vrot.slane %v514, 3
      %v984 = vsel %vm973, %v981, %v983
      %v985 = vrot.slane %v515, 3
      %v986 = vsel %vm973, %v983, %v985
      %v987 = vrot.slane %v516, 3
      %v988 = vsel %vm973, %v985, %v987
      %v989 = vrot.slane %v517, 3
      %v990 = vsel %vm973, %v987, %v989
      %v991 = vrot.slane %v518, 3
      %v992 = vsel %vm973, %v989, %v991
      %v993 = vrot.slane %v519, 3
      %v994 = vsel %vm973, %v991, %v993
      %v995 = vrot.slane %v520, 3
      %v996 = vsel %vm973, %v993, %v995
      %v997 = vrot.slane %v521, 3
      %v998 = vsel %vm973, %v995, %v997
      %v999 = vrot.slane %v522, 3
      %v1000 = vsel %vm973, %v997, %v999
      %v1001 = vrot.slane %v523, 3
      %v1002 = vsel %vm973, %v999, %v1001
      %v1003 = vrot.slane %v524, 3
      %v1004 = vsel %vm973, %v1001, %v1003
      %v1005 = vrot.slane %v525, 3
      %v1006 = vsel %vm973, %v1003, %v1005
      %v1007 = vrot.slane %v526, 3
      %v1008 = vsel %vm973, %v1005, %v1007
      %v1009 = vrot.slane %v527, 3
      %v1010 = vsel %vm973, %v1007, %v1009
      %v1011 = vrot.slane %v528, 3
      %v1012 = vsel %vm973, %v1009, %v1011
      %v1013 = vrot.slane %v529, 3
      %v1014 = vsel %vm973, %v1011, %v1013
      %vm1036 = vcmask 1043456
      %v1037 = vrot.slane %v510, 4
      %v1038 = vrot.slane %v511, 4
      %v1039 = vsel %vm1036, %v1037, %v1038
      %v1040 = vrot.slane %v512, 4
      %v1041 = vsel %vm1036, %v1038, %v1040
      %v1042 = vrot.slane %v513, 4
      %v1043 = vsel %vm1036, %v1040, %v1042
      %v1044 = vrot.slane %v514, 4
      %v1045 = vsel %vm1036, %v1042, %v1044
      %v1046 = vrot.slane %v515, 4
      %v1047 = vsel %vm1036, %v1044, %v1046
      %v1048 = vrot.slane %v516, 4
      %v1049 = vsel %vm1036, %v1046, %v1048
      %v1050 = vrot.slane %v517, 4
      %v1051 = vsel %vm1036, %v1048, %v1050
      %v1052 = vrot.slane %v518, 4
      %v1053 = vsel %vm1036, %v1050, %v1052
      %v1054 = vrot.slane %v519, 4
      %v1055 = vsel %vm1036, %v1052, %v1054
      %v1056 = vrot.slane %v520, 4
      %v1057 = vsel %vm1036, %v1054, %v1056
      %v1058 = vrot.slane %v521, 4
      %v1059 = vsel %vm1036, %v1056, %v1058
      %v1060 = vrot.slane %v522, 4
      %v1061 = vsel %vm1036, %v1058, %v1060
      %v1062 = vrot.slane %v523, 4
      %v1063 = vsel %vm1036, %v1060, %v1062
      %v1064 = vrot.slane %v524, 4
      %v1065 = vsel %vm1036, %v1062, %v1064
      %v1066 = vrot.slane %v525, 4
      %v1067 = vsel %vm1036, %v1064, %v1066
      %v1068 = vrot.slane %v526, 4
      %v1069 = vsel %vm1036, %v1066, %v1068
      %v1070 = vrot.slane %v527, 4
      %v1071 = vsel %vm1036, %v1068, %v1070
      %v1072 = vrot.slane %v528, 4
      %v1073 = vsel %vm1036, %v1070, %v1072
      %v1074 = vrot.slane %v529, 4
      %v1075 = vsel %vm1036, %v1072, %v1074
      %v1076 = vrot.slane %v530, 4
      %v1077 = vsel %vm1036, %v1074, %v1076
      %vm1098 = vsmask.f32 3328
      %v1099 = vrot.slane %v552, 4
      %v1100 = vrot.slane %v548, 5
      %v1101 = vor.u32 %v1099, %v1100
      %v1102 = vrot.slane %v560, 4
      %v1103 = vrot.slane %v556, 5
      %v1104 = vor.u32 %v1102, %v1103
      %v1105 = vsel %vm1098, %v1101, %v1104
      %v1106 = vrot.slane %v568, 4
      %v1107 = vrot.slane %v564, 5
      %v1108 = vor.u32 %v1106, %v1107
      %v1109 = vsel %vm1098, %v1104, %v1108
      %v1110 = vrot.slane %v576, 4
      %v1111 = vrot.slane %v572, 5
      %v1112 = vor.u32 %v1110, %v1111
      %v1113 = vsel %vm1098, %v1108, %v1112
      %v1114 = vrot.slane %v584, 4
      %v1115 = vrot.slane %v580, 5
      %v1116 = vor.u32 %v1114, %v1115
      %v1117 = vsel %vm1098, %v1112, %v1116
      %v1118 = vrot.slane %v592, 4
      %v1119 = vrot.slane %v588, 5
      %v1120 = vor.u32 %v1118, %v1119
      %v1121 = vsel %vm1098, %v1116, %v1120
      %v1122 = vrot.slane %v600, 4
      %v1123 = vrot.slane %v596, 5
      %v1124 = vor.u32 %v1122, %v1123
      %v1125 = vsel %vm1098, %v1120, %v1124
      %v1126 = vrot.slane %v608, 4
      %v1127 = vrot.slane %v604, 5
      %v1128 = vor.u32 %v1126, %v1127
      %v1129 = vsel %vm1098, %v1124, %v1128
      %v1130 = vrot.slane %v616, 4
      %v1131 = vrot.slane %v612, 5
      %v1132 = vor.u32 %v1130, %v1131
      %v1133 = vsel %vm1098, %v1128, %v1132
      %v1134 = vrot.slane %v624, 4
      %v1135 = vrot.slane %v620, 5
      %v1136 = vor.u32 %v1134, %v1135
      %v1137 = vsel %vm1098, %v1132, %v1136
      %v1138 = vrot.slane %v632, 4
      %v1139 = vrot.slane %v628, 5
      %v1140 = vor.u32 %v1138, %v1139
      %v1141 = vsel %vm1098, %v1136, %v1140
      %v1142 = vrot.slane %v640, 4
      %v1143 = vrot.slane %v636, 5
      %v1144 = vor.u32 %v1142, %v1143
      %v1145 = vsel %vm1098, %v1140, %v1144
      %v1146 = vrot.slane %v648, 4
      %v1147 = vrot.slane %v644, 5
      %v1148 = vor.u32 %v1146, %v1147
      %v1149 = vsel %vm1098, %v1144, %v1148
      %v1150 = vrot.slane %v656, 4
      %v1151 = vrot.slane %v652, 5
      %v1152 = vor.u32 %v1150, %v1151
      %v1153 = vsel %vm1098, %v1148, %v1152
      %v1154 = vrot.slane %v664, 4
      %v1155 = vrot.slane %v660, 5
      %v1156 = vor.u32 %v1154, %v1155
      %v1157 = vsel %vm1098, %v1152, %v1156
      %v1158 = vrot.slane %v672, 4
      %v1159 = vrot.slane %v668, 5
      %v1160 = vor.u32 %v1158, %v1159
      %v1161 = vsel %vm1098, %v1156, %v1160
      %v1162 = vrot.slane %v680, 4
      %v1163 = vrot.slane %v676, 5
      %v1164 = vor.u32 %v1162, %v1163
      %v1165 = vsel %vm1098, %v1160, %v1164
      %v1166 = vrot.slane %v688, 4
      %v1167 = vrot.slane %v684, 5
      %v1168 = vor.u32 %v1166, %v1167
      %v1169 = vsel %vm1098, %v1164, %v1168
      %v1170 = vrot.slane %v938, 4
      %v1171 = vrot.slane %v692, 5
      %v1172 = vor.u32 %v1170, %v1171
      %v1173 = vsel %vm1098, %v1168, %v1172
      %v1174 = vrot.slane %v945, 4
      %v1175 = vrot.slane %v948, 5
      %v1176 = vor.u32 %v1174, %v1175
      %v1177 = vsel %vm1098, %v1172, %v1176
      %v1179 = vshrl.u32 %v530, 16
      %v1181 = vrot.slane %v1179, 4
      %v1182 = vshll.u32 %v530, 16
      %v1184 = vrot.slane %v1182, 5
      %v1185 = vor.u32 %v1181, %v1184
      %v1186 = vsel %vm1098, %v1176, %v1185
      %vm1207 = vcmask 1042432
      %v1208 = vrot.slane %v510, 5
      %v1209 = vrot.slane %v511, 5
      %v1210 = vsel %vm1207, %v1208, %v1209
      %v1211 = vrot.slane %v512, 5
      %v1212 = vsel %vm1207, %v1209, %v1211
      %v1213 = vrot.slane %v513, 5
      %v1214 = vsel %vm1207, %v1211, %v1213
      %v1215 = vrot.slane %v514, 5
      %v1216 = vsel %vm1207, %v1213, %v1215
      %v1217 = vrot.slane %v515, 5
      %v1218 = vsel %vm1207, %v1215, %v1217
      %v1219 = vrot.slane %v516, 5
      %v1220 = vsel %vm1207, %v1217, %v1219
      %v1221 = vrot.slane %v517, 5
      %v1222 = vsel %vm1207, %v1219, %v1221
      %v1223 = vrot.slane %v518, 5
      %v1224 = vsel %vm1207, %v1221, %v1223
      %v1225 = vrot.slane %v519, 5
      %v1226 = vsel %vm1207, %v1223, %v1225
      %v1227 = vrot.slane %v520, 5
      %v1228 = vsel %vm1207, %v1225, %v1227
      %v1229 = vrot.slane %v521, 5
      %v1230 = vsel %vm1207, %v1227, %v1229
      %v1231 = vrot.slane %v522, 5
      %v1232 = vsel %vm1207, %v1229, %v1231
      %v1233 = vrot.slane %v523, 5
      %v1234 = vsel %vm1207, %v1231, %v1233
      %v1235 = vrot.slane %v524, 5
      %v1236 = vsel %vm1207, %v1233, %v1235
      %v1237 = vrot.slane %v525, 5
      %v1238 = vsel %vm1207, %v1235, %v1237
      %v1239 = vrot.slane %v526, 5
      %v1240 = vsel %vm1207, %v1237, %v1239
      %v1241 = vrot.slane %v527, 5
      %v1242 = vsel %vm1207, %v1239, %v1241
      %v1243 = vrot.slane %v528, 5
      %v1244 = vsel %vm1207, %v1241, %v1243
      %v1245 = vrot.slane %v529, 5
      %v1246 = vsel %vm1207, %v1243, %v1245
      %v1247 = vrot.slane %v530, 5
      %v1248 = vsel %vm1207, %v1245, %v1247
      %v1269 = vld [vmem:[%s1] sm:$0xf]
      %v1270 = vld [vmem:[%s1 + $0x4] sm:$0xf]
      %v1271 = vld [vmem:[%s1 + $0x8] sm:$0xf]
      %v1272 = vld [vmem:[%s1 + $0xc] sm:$0xf]
      %v1273 = vld [vmem:[%s1 + $0x10] sm:$0xf]
      %v1274 = vld [vmem:[%s1 + $0x14] sm:$0xf]
      %v1275 = vld [vmem:[%s1 + $0x18] sm:$0xf]
      %v1276 = vld [vmem:[%s1 + $0x1c] sm:$0xf]
      %v1277 = vld [vmem:[%s1 + $0x20] sm:$0xf]
      %v1278 = vld [vmem:[%s1 + $0x24] sm:$0xf]
      %v1279 = vld [vmem:[%s1 + $0x28] sm:$0xf]
      %v1280 = vld [vmem:[%s1 + $0x2c] sm:$0xf]
      %v1281 = vld [vmem:[%s1 + $0x30] sm:$0xf]
      %v1282 = vld [vmem:[%s1 + $0x34] sm:$0xf]
      %v1283 = vld [vmem:[%s1 + $0x38] sm:$0xf]
      %v1284 = vld [vmem:[%s1 + $0x3c] sm:$0xf]
      %v1285 = vld [vmem:[%s1 + $0x40] sm:$0xf]
      %v1286 = vld [vmem:[%s1 + $0x44] sm:$0xf]
      %v1287 = vld [vmem:[%s1 + $0x48] sm:$0xf]
      %v1288 = vld [vmem:[%s1 + $0x4c] sm:$0xf]
      %v1289 = vld [vmem:[%s1 + $0x50] sm:$0xf]
      %v1290 = vld [vmem:[%s1 + $0x54] sm:$0xf]
      %v1291 = vld [vmem:[%s1 + $0x58] sm:$0xf]
      %v1292 = vld [vmem:[%s1 + $0x5c] sm:$0xf]
      %v1293 = vld [vmem:[%s1 + $0x60] sm:$0xf]
      %v1294 = vld [vmem:[%s1 + $0x64] sm:$0xf]
      %v1295 = vld [vmem:[%s1 + $0x68] sm:$0xf]
      %v1296 = vld [vmem:[%s1 + $0x6c] sm:$0xf]
      %v1297 = vld [vmem:[%s1 + $0x70] sm:$0xf]
      %v1298 = vld [vmem:[%s1 + $0x74] sm:$0xf]
      %v1299 = vld [vmem:[%s1 + $0x78] sm:$0xf]
      %v1300 = vld [vmem:[%s1 + $0x7c] sm:$0xf]
      %v1301 = vld [vmem:[%s1 + $0x80] sm:$0xf]
      %v1302 = vld [vmem:[%s1 + $0x84] sm:$0xf]
      %v1303 = vld [vmem:[%s1 + $0x88] sm:$0xf]
      %v1304 = vld [vmem:[%s1 + $0x8c] sm:$0xf]
      %v1305 = vld [vmem:[%s1 + $0x90] sm:$0xf]
      %v1306 = vld [vmem:[%s1 + $0x94] sm:$0xf]
      %v1307 = vld [vmem:[%s1 + $0x98] sm:$0xf]
      %v1308 = vld [vmem:[%s1 + $0x9c] sm:$0xf]
      %v1309 = vld [vmem:[%s1 + $0xa0] sm:$0xf]
      %v1310 = vld [vmem:[%s1 + $0xa4] sm:$0xf]
      %v1311 = vld [vmem:[%s1 + $0xa8] sm:$0xf]
      %v1312 = vld [vmem:[%s1 + $0xac] sm:$0xf]
      %v1313 = vld [vmem:[%s1 + $0xb0] sm:$0xf]
      %v1314 = vld [vmem:[%s1 + $0xb4] sm:$0xf]
      %v1315 = vld [vmem:[%s1 + $0xb8] sm:$0xf]
      %v1316 = vld [vmem:[%s1 + $0xbc] sm:$0xf]
      %v1317 = vld [vmem:[%s1 + $0xc0] sm:$0xf]
      %v1318 = vld [vmem:[%s1 + $0xc4] sm:$0xf]
      %v1319 = vld [vmem:[%s1 + $0xc8] sm:$0xf]
      %v1320 = vld [vmem:[%s1 + $0xcc] sm:$0xf]
      %v1321 = vld [vmem:[%s1 + $0xd0] sm:$0xf]
      %v1322 = vld [vmem:[%s1 + $0xd4] sm:$0xf]
      %v1323 = vld [vmem:[%s1 + $0xd8] sm:$0xf]
      %v1324 = vld [vmem:[%s1 + $0xdc] sm:$0xf]
      %v1325 = vld [vmem:[%s1 + $0xe0] sm:$0xf]
      %v1326 = vld [vmem:[%s1 + $0xe4] sm:$0xf]
      %v1327 = vld [vmem:[%s1 + $0xe8] sm:$0xf]
      %v1328 = vld [vmem:[%s1 + $0xec] sm:$0xf]
      %v1329 = vld [vmem:[%s1 + $0xf0] sm:$0xf]
      %v1330 = vld [vmem:[%s1 + $0xf4] sm:$0xf]
      %v1331 = vld [vmem:[%s1 + $0xf8] sm:$0xf]
      %v1332 = vld [vmem:[%s1 + $0xfc] sm:$0xf]
      %v1333 = vld [vmem:[%s1 + $0x100] sm:$0xf]
      %v1334 = vld [vmem:[%s1 + $0x104] sm:$0xf]
      %v1335 = vld [vmem:[%s1 + $0x108] sm:$0xf]
      %v1336 = vld [vmem:[%s1 + $0x10c] sm:$0xf]
      %v1337 = vld [vmem:[%s1 + $0x110] sm:$0xf]
      %v1338 = vld [vmem:[%s1 + $0x114] sm:$0xf]
      %v1339 = vld [vmem:[%s1 + $0x118] sm:$0xf]
      %v1340 = vld [vmem:[%s1 + $0x11c] sm:$0xf]
      %v1341 = vld [vmem:[%s1 + $0x120] sm:$0xf]
      %v1342 = vld [vmem:[%s1 + $0x124] sm:$0xf]
      %v1343 = vld [vmem:[%s1 + $0x128] sm:$0xf]
      %v1344 = vld [vmem:[%s1 + $0x12c] sm:$0xf]
      %v1345 = vld [vmem:[%s1 + $0x130] sm:$0xf]
      %v1346 = vld [vmem:[%s1 + $0x134] sm:$0xf]
      %v1347 = vld [vmem:[%s1 + $0x138] sm:$0xf]
      %v1348 = vld [vmem:[%s1 + $0x13c] sm:$0xf]
      %v1349 = vld [vmem:[%s1 + $0x140] sm:$0xf]
      %v1350 = vld [vmem:[%s1 + $0x144] sm:$0xf]
      %v1351 = vld [vmem:[%s1 + $0x148] sm:$0xf]
      %v1352 = vld [vmem:[%s1 + $0x14c] sm:$0xf]
      %v1353 = vld [vmem:[%s1 + $0x150] sm:$0xf]
      %v1354 = vld [vmem:[%s1 + $0x154] sm:$0xf]
      %v1355 = vld [vmem:[%s1 + $0x158] sm:$0xf]
      %v1356 = vld [vmem:[%s1 + $0x15c] sm:$0xf]
      %v1357 = vld [vmem:[%s1 + $0x160] sm:$0xf]
      %v1358 = vld [vmem:[%s1 + $0x164] sm:$0xf]
      %v1359 = vld [vmem:[%s1 + $0x168] sm:$0xf]
      %v1360 = vld [vmem:[%s1 + $0x16c] sm:$0xf]
      %v1361 = vld [vmem:[%s1 + $0x170] sm:$0xf]
      %v1362 = vld [vmem:[%s1 + $0x174] sm:$0xf]
      %v1363 = vld [vmem:[%s1 + $0x178] sm:$0xf]
      %v1364 = vld [vmem:[%s1 + $0x17c] sm:$0xf]
      %v1365 = vld [vmem:[%s1 + $0x180] sm:$0xf]
      %v1366 = vld [vmem:[%s1 + $0x184] sm:$0xf]
      %v1367 = vld [vmem:[%s1 + $0x188] sm:$0xf]
      %v1368 = vld [vmem:[%s1 + $0x18c] sm:$0xf]
      %v1369 = vld [vmem:[%s1 + $0x190] sm:$0xf]
      %v1370 = vld [vmem:[%s1 + $0x194] sm:$0xf]
      %v1371 = vld [vmem:[%s1 + $0x198] sm:$0xf]
      %v1372 = vld [vmem:[%s1 + $0x19c] sm:$0xf]
      %v1373 = vld [vmem:[%s1 + $0x1a0] sm:$0xf]
      %v1374 = vld [vmem:[%s1 + $0x1a4] sm:$0xf]
      %v1375 = vld [vmem:[%s1 + $0x1a8] sm:$0xf]
      %v1376 = vld [vmem:[%s1 + $0x1ac] sm:$0xf]
      %v1377 = vld [vmem:[%s1 + $0x1b0] sm:$0xf]
      %v1378 = vld [vmem:[%s1 + $0x1b4] sm:$0xf]
      %v1379 = vld [vmem:[%s1 + $0x1b8] sm:$0xf]
      %v1380 = vld [vmem:[%s1 + $0x1bc] sm:$0xf]
      %v1381 = vld [vmem:[%s1 + $0x1c0] sm:$0xf]
      %v1382 = vld [vmem:[%s1 + $0x1c4] sm:$0xf]
      %v1383 = vld [vmem:[%s1 + $0x1c8] sm:$0xf]
      %v1384 = vld [vmem:[%s1 + $0x1cc] sm:$0xf]
      %v1385 = vld [vmem:[%s1 + $0x1d0] sm:$0xf]
      %v1386 = vld [vmem:[%s1 + $0x1d4] sm:$0xf]
      %v1387 = vld [vmem:[%s1 + $0x1d8] sm:$0xf]
      %v1388 = vld [vmem:[%s1 + $0x1dc] sm:$0xf]
      %v1389 = vld [vmem:[%s1 + $0x1e0] sm:$0xf]
      %v1390 = vld [vmem:[%s1 + $0x1e4] sm:$0xf]
      %v1391 = vld [vmem:[%s1 + $0x1e8] sm:$0xf]
      %v1392 = vld [vmem:[%s1 + $0x1ec] sm:$0xf]
      %v1393 = vld [vmem:[%s1 + $0x1f0] sm:$0xf]
      %v1394 = vld [vmem:[%s1 + $0x1f4] sm:$0xf]
      %v1395 = vld [vmem:[%s1 + $0x1f8] sm:$0xf]
      %v1396 = vld [vmem:[%s1 + $0x1fc] sm:$0xf]
      %v1397 = vld [vmem:[%s1 + $0x200] sm:$0xf]
      %v1398 = vld [vmem:[%s1 + $0x204] sm:$0xf]
      %v1399 = vld [vmem:[%s1 + $0x208] sm:$0xf]
      %v1400 = vld [vmem:[%s1 + $0x20c] sm:$0xf]
      %v1401 = vld [vmem:[%s1 + $0x210] sm:$0xf]
      %v1402 = vld [vmem:[%s1 + $0x214] sm:$0xf]
      %v1403 = vld [vmem:[%s1 + $0x218] sm:$0xf]
      %v1404 = vld [vmem:[%s1 + $0x21c] sm:$0xf]
      %v1405 = vld [vmem:[%s1 + $0x220] sm:$0xf]
      %v1406 = vld [vmem:[%s1 + $0x224] sm:$0xf]
      %v1407 = vld [vmem:[%s1 + $0x228] sm:$0xf]
      %v1408 = vld [vmem:[%s1 + $0x22c] sm:$0xf]
      %v1409 = vld [vmem:[%s1 + $0x230] sm:$0xf]
      %v1410 = vld [vmem:[%s1 + $0x234] sm:$0xf]
      %v1411 = vld [vmem:[%s1 + $0x238] sm:$0xf]
      %v1412 = vld [vmem:[%s1 + $0x23c] sm:$0xf]
      %v1557 = vunpack.c.l.b16 %v1269
      %v1558 = vunpack.c.l.b16 %v1270
      %v1559 = vunpack.c.l.b16 %v1271
      %v1560 = vunpack.c.l.b16 %v1272
      %v1561 = vunpack.c.l.b16 %v1273
      %v1562 = vunpack.c.l.b16 %v1274
      %v1563 = vunpack.c.l.b16 %v1275
      %v1564 = vunpack.c.l.b16 %v1276
      %v1565 = vunpack.c.l.b16 %v1277
      %v1566 = vunpack.c.l.b16 %v1278
      %v1567 = vunpack.c.l.b16 %v1279
      %v1568 = vunpack.c.l.b16 %v1280
      %v1569 = vunpack.c.l.b16 %v1281
      %v1570 = vunpack.c.l.b16 %v1282
      %v1571 = vunpack.c.l.b16 %v1283
      %v1572 = vunpack.c.l.b16 %v1284
      %v1573 = vunpack.c.l.b16 %v1285
      %v1574 = vunpack.c.l.b16 %v1286
      %v1575 = vunpack.c.l.b16 %v1287
      %v1576 = vunpack.c.l.b16 %v1288
      %v1577 = vunpack.c.l.b16 %v1289
      %v1578 = vunpack.c.l.b16 %v1290
      %v1579 = vunpack.c.l.b16 %v1291
      %v1580 = vunpack.c.l.b16 %v1292
      %v1581 = vunpack.c.l.b16 %v1293
      %v1582 = vunpack.c.l.b16 %v1294
      %v1583 = vunpack.c.l.b16 %v1295
      %v1584 = vunpack.c.l.b16 %v1296
      %v1585 = vunpack.c.l.b16 %v1297
      %v1586 = vunpack.c.l.b16 %v1298
      %v1587 = vunpack.c.l.b16 %v1299
      %v1588 = vunpack.c.l.b16 %v1300
      %v1589 = vunpack.c.l.b16 %v1301
      %v1590 = vunpack.c.l.b16 %v1302
      %v1591 = vunpack.c.l.b16 %v1303
      %v1592 = vunpack.c.l.b16 %v1304
      %v1593 = vunpack.c.l.b16 %v1305
      %v1594 = vunpack.c.l.b16 %v1306
      %v1595 = vunpack.c.l.b16 %v1307
      %v1596 = vunpack.c.l.b16 %v1308
      %v1597 = vunpack.c.l.b16 %v1309
      %v1598 = vunpack.c.l.b16 %v1310
      %v1599 = vunpack.c.l.b16 %v1311
      %v1600 = vunpack.c.l.b16 %v1312
      %v1601 = vunpack.c.l.b16 %v1313
      %v1602 = vunpack.c.l.b16 %v1314
      %v1603 = vunpack.c.l.b16 %v1315
      %v1604 = vunpack.c.l.b16 %v1316
      %v1605 = vunpack.c.l.b16 %v1317
      %v1606 = vunpack.c.l.b16 %v1318
      %v1607 = vunpack.c.l.b16 %v1319
      %v1608 = vunpack.c.l.b16 %v1320
      %v1609 = vunpack.c.l.b16 %v1321
      %v1610 = vunpack.c.l.b16 %v1322
      %v1611 = vunpack.c.l.b16 %v1323
      %v1612 = vunpack.c.l.b16 %v1324
      %v1613 = vunpack.c.l.b16 %v1325
      %v1614 = vunpack.c.l.b16 %v1326
      %v1615 = vunpack.c.l.b16 %v1327
      %v1616 = vunpack.c.l.b16 %v1328
      %v1617 = vunpack.c.l.b16 %v1329
      %v1618 = vunpack.c.l.b16 %v1330
      %v1619 = vunpack.c.l.b16 %v1331
      %v1620 = vunpack.c.l.b16 %v1332
      %v1621 = vunpack.c.l.b16 %v1333
      %v1622 = vunpack.c.l.b16 %v1334
      %v1623 = vunpack.c.l.b16 %v1335
      %v1624 = vunpack.c.l.b16 %v1336
      %v1625 = vunpack.c.l.b16 %v1337
      %v1626 = vunpack.c.l.b16 %v1338
      %v1627 = vunpack.c.l.b16 %v1339
      %v1628 = vunpack.c.l.b16 %v1340
      %v1629 = vunpack.c.l.b16 %v1341
      %v1630 = vunpack.c.l.b16 %v1342
      %v1631 = vunpack.c.l.b16 %v1343
      %v1632 = vunpack.c.l.b16 %v1344
      %v1633 = vunpack.c.l.b16 %v1345
      %v1634 = vunpack.c.l.b16 %v1346
      %v1635 = vunpack.c.l.b16 %v1347
      %v1636 = vunpack.c.l.b16 %v1348
      %v1637 = vunpack.c.l.b16 %v1349
      %v1638 = vunpack.c.l.b16 %v1350
      %v1639 = vunpack.c.l.b16 %v1351
      %v1640 = vunpack.c.l.b16 %v1352
      %v1641 = vunpack.c.l.b16 %v1353
      %v1642 = vunpack.c.l.b16 %v1354
      %v1643 = vunpack.c.l.b16 %v1355
      %v1644 = vunpack.c.l.b16 %v1356
      %v1645 = vunpack.c.l.b16 %v1357
      %v1646 = vunpack.c.l.b16 %v1358
      %v1647 = vunpack.c.l.b16 %v1359
      %v1648 = vunpack.c.l.b16 %v1360
      %v1649 = vunpack.c.l.b16 %v1361
      %v1650 = vunpack.c.l.b16 %v1362
      %v1651 = vunpack.c.l.b16 %v1363
      %v1652 = vunpack.c.l.b16 %v1364
      %v1653 = vunpack.c.l.b16 %v1365
      %v1654 = vunpack.c.l.b16 %v1366
      %v1655 = vunpack.c.l.b16 %v1367
      %v1656 = vunpack.c.l.b16 %v1368
      %v1657 = vunpack.c.l.b16 %v1369
      %v1658 = vunpack.c.l.b16 %v1370
      %v1659 = vunpack.c.l.b16 %v1371
      %v1660 = vunpack.c.l.b16 %v1372
      %v1661 = vunpack.c.l.b16 %v1373
      %v1662 = vunpack.c.l.b16 %v1374
      %v1663 = vunpack.c.l.b16 %v1375
      %v1664 = vunpack.c.l.b16 %v1376
      %v1665 = vunpack.c.l.b16 %v1377
      %v1666 = vunpack.c.l.b16 %v1378
      %v1667 = vunpack.c.l.b16 %v1379
      %v1668 = vunpack.c.l.b16 %v1380
      %v1669 = vunpack.c.l.b16 %v1381
      %v1670 = vunpack.c.l.b16 %v1382
      %v1671 = vunpack.c.l.b16 %v1383
      %v1672 = vunpack.c.l.b16 %v1384
      %v1673 = vunpack.c.l.b16 %v1385
      %v1674 = vunpack.c.l.b16 %v1386
      %v1675 = vunpack.c.l.b16 %v1387
      %v1676 = vunpack.c.l.b16 %v1388
      %v1677 = vunpack.c.l.b16 %v1389
      %v1678 = vunpack.c.l.b16 %v1390
      %v1679 = vunpack.c.l.b16 %v1391
      %v1680 = vunpack.c.l.b16 %v1392
      %v1681 = vunpack.c.l.b16 %v1393
      %v1682 = vunpack.c.l.b16 %v1394
      %v1683 = vunpack.c.l.b16 %v1395
      %v1684 = vunpack.c.l.b16 %v1396
      %v1685 = vunpack.c.l.b16 %v1397
      %v1686 = vunpack.c.l.b16 %v1398
      %v1687 = vunpack.c.l.b16 %v1399
      %v1688 = vunpack.c.l.b16 %v1400
      %v1689 = vunpack.c.l.b16 %v1401
      %v1690 = vunpack.c.l.b16 %v1402
      %v1691 = vunpack.c.l.b16 %v1403
      %v1692 = vunpack.c.l.b16 %v1404
      %v1693 = vunpack.c.l.b16 %v1405
      %v1694 = vunpack.c.l.b16 %v1406
      %v1695 = vunpack.c.l.b16 %v1407
      %v1696 = vunpack.c.l.b16 %v1408
      %v1697 = vunpack.c.l.b16 %v1409
      %v1698 = vunpack.c.l.b16 %v1410
      %v1699 = vunpack.c.l.b16 %v1411
      %v1700 = vunpack.c.l.b16 %v1412
      %v1701 = vpack.c.b16 %v1558, %v1557
      %v1702 = vpack.c.b16 %v1560, %v1559
      %v1703 = vpack.c.b16 %v1562, %v1561
      %v1704 = vpack.c.b16 %v1564, %v1563
      %v1705 = vpack.c.b16 %v1566, %v1565
      %v1706 = vpack.c.b16 %v1568, %v1567
      %v1707 = vpack.c.b16 %v1570, %v1569
      %v1708 = vpack.c.b16 %v1572, %v1571
      %v1709 = vpack.c.b16 %v1574, %v1573
      %v1710 = vpack.c.b16 %v1576, %v1575
      %v1711 = vpack.c.b16 %v1578, %v1577
      %v1712 = vpack.c.b16 %v1580, %v1579
      %v1713 = vpack.c.b16 %v1582, %v1581
      %v1714 = vpack.c.b16 %v1584, %v1583
      %v1715 = vpack.c.b16 %v1586, %v1585
      %v1716 = vpack.c.b16 %v1588, %v1587
      %v1717 = vpack.c.b16 %v1590, %v1589
      %v1718 = vpack.c.b16 %v1592, %v1591
      %v1719 = vpack.c.b16 %v1594, %v1593
      %v1720 = vpack.c.b16 %v1596, %v1595
      %v1721 = vpack.c.b16 %v1598, %v1597
      %v1722 = vpack.c.b16 %v1600, %v1599
      %v1723 = vpack.c.b16 %v1602, %v1601
      %v1724 = vpack.c.b16 %v1604, %v1603
      %v1725 = vpack.c.b16 %v1606, %v1605
      %v1726 = vpack.c.b16 %v1608, %v1607
      %v1727 = vpack.c.b16 %v1610, %v1609
      %v1728 = vpack.c.b16 %v1612, %v1611
      %v1729 = vpack.c.b16 %v1614, %v1613
      %v1730 = vpack.c.b16 %v1616, %v1615
      %v1731 = vpack.c.b16 %v1618, %v1617
      %v1732 = vpack.c.b16 %v1620, %v1619
      %v1733 = vpack.c.b16 %v1622, %v1621
      %v1734 = vpack.c.b16 %v1624, %v1623
      %v1735 = vpack.c.b16 %v1626, %v1625
      %v1736 = vpack.c.b16 %v1628, %v1627
      %v1737 = vpack.c.b16 %v1630, %v1629
      %v1738 = vpack.c.b16 %v1632, %v1631
      %v1739 = vpack.c.b16 %v1634, %v1633
      %v1740 = vpack.c.b16 %v1636, %v1635
      %v1741 = vpack.c.b16 %v1638, %v1637
      %v1742 = vpack.c.b16 %v1640, %v1639
      %v1743 = vpack.c.b16 %v1642, %v1641
      %v1744 = vpack.c.b16 %v1644, %v1643
      %v1745 = vpack.c.b16 %v1646, %v1645
      %v1746 = vpack.c.b16 %v1648, %v1647
      %v1747 = vpack.c.b16 %v1650, %v1649
      %v1748 = vpack.c.b16 %v1652, %v1651
      %v1749 = vpack.c.b16 %v1654, %v1653
      %v1750 = vpack.c.b16 %v1656, %v1655
      %v1751 = vpack.c.b16 %v1658, %v1657
      %v1752 = vpack.c.b16 %v1660, %v1659
      %v1753 = vpack.c.b16 %v1662, %v1661
      %v1754 = vpack.c.b16 %v1664, %v1663
      %v1755 = vpack.c.b16 %v1666, %v1665
      %v1756 = vpack.c.b16 %v1668, %v1667
      %v1757 = vpack.c.b16 %v1670, %v1669
      %v1758 = vpack.c.b16 %v1672, %v1671
      %v1759 = vpack.c.b16 %v1674, %v1673
      %v1760 = vpack.c.b16 %v1676, %v1675
      %v1761 = vpack.c.b16 %v1678, %v1677
      %v1762 = vpack.c.b16 %v1680, %v1679
      %v1763 = vpack.c.b16 %v1682, %v1681
      %v1764 = vpack.c.b16 %v1684, %v1683
      %v1765 = vpack.c.b16 %v1686, %v1685
      %v1766 = vpack.c.b16 %v1688, %v1687
      %v1767 = vpack.c.b16 %v1690, %v1689
      %v1768 = vpack.c.b16 %v1692, %v1691
      %v1769 = vpack.c.b16 %v1694, %v1693
      %v1770 = vpack.c.b16 %v1696, %v1695
      %v1771 = vpack.c.b16 %v1698, %v1697
      %v1772 = vpack.c.b16 %v1700, %v1699
      %1845 = vmatprep.subr.bf16.mxu0 0
      %1846 = vmatpush1.bf16.msra.mxu0 %v1701
      %1847 = vmatprep.subr.bf16.mxu0 0
      %1848 = vmatpush1.bf16.msra.mxu0 %v1702
      %1849 = vmatprep.subr.bf16.mxu0 0
      %1850 = vmatpush1.bf16.msra.mxu0 %v1703
      %1851 = vmatprep.subr.bf16.mxu0 0
      %1852 = vmatpush1.bf16.msra.mxu0 %v1704
      %1853 = vmatprep.subr.bf16.mxu0 0
      %1854 = vmatpush1.bf16.msra.mxu0 %v1705
      %1855 = vmatprep.subr.bf16.mxu0 0
      %1856 = vmatpush1.bf16.msra.mxu0 %v1706
      %1857 = vmatprep.subr.bf16.mxu0 0
      %1858 = vmatpush1.bf16.msra.mxu0 %v1707
      %1859 = vmatprep.subr.bf16.mxu0 0
      %1860 = vmatpush1.bf16.msra.mxu0 %v1708
      %1861 = vmatprep.subr.bf16.mxu0 0
      %1862 = vmatpush1.bf16.msra.mxu0 %v1709
      %1863 = vmatprep.subr.bf16.mxu0 0
      %1864 = vmatpush1.bf16.msra.mxu0 %v1710
      %1865 = vmatprep.subr.bf16.mxu0 0
      %1866 = vmatpush1.bf16.msra.mxu0 %v1711
      %1867 = vmatprep.subr.bf16.mxu0 0
      %1868 = vmatpush1.bf16.msra.mxu0 %v1712
      %1869 = vmatprep.subr.bf16.mxu0 0
      %1870 = vmatpush1.bf16.msra.mxu0 %v1713
      %1871 = vmatprep.subr.bf16.mxu0 0
      %1872 = vmatpush1.bf16.msra.mxu0 %v1714
      %1873 = vmatprep.subr.bf16.mxu0 0
      %1874 = vmatpush1.bf16.msra.mxu0 %v1715
      %1875 = vmatprep.subr.bf16.mxu0 0
      %1876 = vmatpush1.bf16.msra.mxu0 %v1716
      %1877 = vmatprep.mubr.bf16.mxu0 %v543
      %1878 = vmatmul.mubr.bf16.gmra.mrb[0].mxu0 %v508
      %v1879 = vpop.f32.mrb[0].mxu0
      %v1880 = vadd.f32 0.0, %v1879
      %v1881 = vpop.f32.mrb[0].mxu0
      %v1882 = vpop.f32.mrb[0].mxu0
      %v1883 = vadd.f32 0.0, %v1882
      %v1884 = vpop.f32.mrb[0].mxu0
      %1885 = vmatprep.mubr.bf16.mxu0 %v551
      %1886 = vmatmul.mubr.bf16.gmra.mrb[0].mxu0 %v509
      %v1887 = vpop.f32.mrb[0].mxu0
      %v1888 = vadd.f32 0.0, %v1887
      %v1889 = vpop.f32.mrb[0].mxu0
      %v1890 = vpop.f32.mrb[0].mxu0
      %v1891 = vadd.f32 0.0, %v1890
      %v1892 = vpop.f32.mrb[0].mxu0
      %1893 = vmatprep.mubr.bf16.mxu0 %v559
      %1894 = vmatmul.mubr.bf16.gmra.mrb[0].mxu0 %v510
      %v1895 = vpop.f32.mrb[0].mxu0
      %v1896 = vadd.f32 0.0, %v1895
      %v1897 = vpop.f32.mrb[0].mxu0
      %v1898 = vpop.f32.mrb[0].mxu0
      %v1899 = vadd.f32 0.0, %v1898
      %v1900 = vpop.f32.mrb[0].mxu0
      %1901 = vmatprep.mubr.bf16.mxu0 %v567
      %1902 = vmatmul.mubr.bf16.gmra.mrb[0].mxu0 %v511
      %v1903 = vpop.f32.mrb[0].mxu0
      %v1904 = vadd.f32 0.0, %v1903
      %v1905 = vpop.f32.mrb[0].mxu0
      %v1906 = vpop.f32.mrb[0].mxu0
      %v1907 = vadd.f32 0.0, %v1906
      %v1908 = vpop.f32.mrb[0].mxu0
      %1909 = vmatprep.mubr.bf16.mxu0 %v575
      %1910 = vmatmul.mubr.bf16.gmra.mrb[0].mxu0 %v512
      %v1911 = vpop.f32.mrb[0].mxu0
      %v1912 = vadd.f32 0.0, %v1911
      %v1913 = vpop.f32.mrb[0].mxu0
      %v1914 = vpop.f32.mrb[0].mxu0
      %v1915 = vadd.f32 0.0, %v1914
      %v1916 = vpop.f32.mrb[0].mxu0
      %1917 = vmatprep.mubr.bf16.mxu0 %v583
      %1918 = vmatmul.mubr.bf16.gmra.mrb[0].mxu0 %v513
      %v1919 = vpop.f32.mrb[0].mxu0
      %v1920 = vadd.f32 0.0, %v1919
      %v1921 = vpop.f32.mrb[0].mxu0
      %v1922 = vpop.f32.mrb[0].mxu0
      %v1923 = vadd.f32 0.0, %v1922
      %v1924 = vpop.f32.mrb[0].mxu0
      %1925 = vmatprep.mubr.bf16.mxu0 %v591
      %1926 = vmatmul.mubr.bf16.gmra.mrb[0].mxu0 %v514
      %v1927 = vpop.f32.mrb[0].mxu0
      %v1928 = vadd.f32 0.0, %v1927
      %v1929 = vpop.f32.mrb[0].mxu0
      %v1930 = vpop.f32.mrb[0].mxu0
      %v1931 = vadd.f32 0.0, %v1930
      %v1932 = vpop.f32.mrb[0].mxu0
      %1933 = vmatprep.mubr.bf16.mxu0 %v599
      %1934 = vmatmul.mubr.bf16.gmra.mrb[0].mxu0 %v515
      %v1935 = vpop.f32.mrb[0].mxu0
      %v1936 = vadd.f32 0.0, %v1935
      %v1937 = vpop.f32.mrb[0].mxu0
      %v1938 = vpop.f32.mrb[0].mxu0
      %v1939 = vadd.f32 0.0, %v1938
      %v1940 = vpop.f32.mrb[0].mxu0
      %1941 = vmatprep.mubr.bf16.mxu0 %v607
      %1942 = vmatmul.mubr.bf16.gmra.mrb[0].mxu0 %v516
      %v1943 = vpop.f32.mrb[0].mxu0
      %v1944 = vadd.f32 0.0, %v1943
      %v1945 = vpop.f32.mrb[0].mxu0
      %v1946 = vpop.f32.mrb[0].mxu0
      %v1947 = vadd.f32 0.0, %v1946
      %v1948 = vpop.f32.mrb[0].mxu0
      %1949 = vmatprep.mubr.bf16.mxu0 %v615
      %1950 = vmatmul.mubr.bf16.gmra.mrb[0].mxu0 %v517
      %v1951 = vpop.f32.mrb[0].mxu0
      %v1952 = vadd.f32 0.0, %v1951
      %v1953 = vpop.f32.mrb[0].mxu0
      %v1954 = vpop.f32.mrb[0].mxu0
      %v1955 = vadd.f32 0.0, %v1954
      %v1956 = vpop.f32.mrb[0].mxu0
      %1957 = vmatprep.mubr.bf16.mxu0 %v623
      %1958 = vmatmul.mubr.bf16.gmra.mrb[0].mxu0 %v518
      %v1959 = vpop.f32.mrb[0].mxu0
      %v1960 = vadd.f32 0.0, %v1959
      %v1961 = vpop.f32.mrb[0].mxu0
      %v1962 = vpop.f32.mrb[0].mxu0
      %v1963 = vadd.f32 0.0, %v1962
      %v1964 = vpop.f32.mrb[0].mxu0
      %1965 = vmatprep.mubr.bf16.mxu0 %v631
      %1966 = vmatmul.mubr.bf16.gmra.mrb[0].mxu0 %v519
      %v1967 = vpop.f32.mrb[0].mxu0
      %v1968 = vadd.f32 0.0, %v1967
      %v1969 = vpop.f32.mrb[0].mxu0
      %v1970 = vpop.f32.mrb[0].mxu0
      %v1971 = vadd.f32 0.0, %v1970
      %v1972 = vpop.f32.mrb[0].mxu0
      %1973 = vmatprep.mubr.bf16.mxu0 %v639
      %1974 = vmatmul.mubr.bf16.gmra.mrb[0].mxu0 %v520
      %v1975 = vpop.f32.mrb[0].mxu0
      %v1976 = vadd.f32 0.0, %v1975
      %v1977 = vpop.f32.mrb[0].mxu0
      %v1978 = vpop.f32.mrb[0].mxu0
      %v1979 = vadd.f32 0.0, %v1978
      %v1980 = vpop.f32.mrb[0].mxu0
      %1981 = vmatprep.mubr.bf16.mxu0 %v647
      %1982 = vmatmul.mubr.bf16.gmra.mrb[0].mxu0 %v521
      %v1983 = vpop.f32.mrb[0].mxu0
      %v1984 = vadd.f32 0.0, %v1983
      %v1985 = vpop.f32.mrb[0].mxu0
      %v1986 = vpop.f32.mrb[0].mxu0
      %v1987 = vadd.f32 0.0, %v1986
      %v1988 = vpop.f32.mrb[0].mxu0
      %1989 = vmatprep.mubr.bf16.mxu0 %v655
      %1990 = vmatmul.mubr.bf16.gmra.mrb[0].mxu0 %v522
      %v1991 = vpop.f32.mrb[0].mxu0
      %v1992 = vadd.f32 0.0, %v1991
      %v1993 = vpop.f32.mrb[0].mxu0
      %v1994 = vpop.f32.mrb[0].mxu0
      %v1995 = vadd.f32 0.0, %v1994
      %v1996 = vpop.f32.mrb[0].mxu0
      %1997 = vmatprep.mubr.bf16.mxu0 %v663
      %1998 = vmatmul.mubr.bf16.gmra.mrb[0].mxu0 %v523
      %v1999 = vpop.f32.mrb[0].mxu0
      %v2000 = vadd.f32 0.0, %v1999
      %v2001 = vpop.f32.mrb[0].mxu0
      %v2002 = vpop.f32.mrb[0].mxu0
      %v2003 = vadd.f32 0.0, %v2002
      %v2004 = vpop.f32.mrb[0].mxu0
      %2005 = vmatprep.mubr.bf16.mxu0 %v671
      %2006 = vmatmul.mubr.bf16.gmra.mrb[0].mxu0 %v524
      %v2007 = vpop.f32.mrb[0].mxu0
      %v2008 = vadd.f32 0.0, %v2007
      %v2009 = vpop.f32.mrb[0].mxu0
      %v2010 = vpop.f32.mrb[0].mxu0
      %v2011 = vadd.f32 0.0, %v2010
      %v2012 = vpop.f32.mrb[0].mxu0
      %2013 = vmatprep.mubr.bf16.mxu0 %v679
      %2014 = vmatmul.mubr.bf16.gmra.mrb[0].mxu0 %v525
      %v2015 = vpop.f32.mrb[0].mxu0
      %v2016 = vadd.f32 0.0, %v2015
      %v2017 = vpop.f32.mrb[0].mxu0
      %v2018 = vpop.f32.mrb[0].mxu0
      %v2019 = vadd.f32 0.0, %v2018
      %v2020 = vpop.f32.mrb[0].mxu0
      %2021 = vmatprep.mubr.bf16.mxu0 %v687
      %2022 = vmatmul.mubr.bf16.gmra.mrb[0].mxu0 %v526
      %v2023 = vpop.f32.mrb[0].mxu0
      %v2024 = vadd.f32 0.0, %v2023
      %v2025 = vpop.f32.mrb[0].mxu0
      %v2026 = vpop.f32.mrb[0].mxu0
      %v2027 = vadd.f32 0.0, %v2026
      %v2028 = vpop.f32.mrb[0].mxu0
      %2029 = vmatprep.mubr.bf16.mxu0 %v695
      %2030 = vmatmul.mubr.bf16.gmra.mrb[0].mxu0 %v527
      %v2031 = vpop.f32.mrb[0].mxu0
      %v2032 = vadd.f32 0.0, %v2031
      %v2033 = vpop.f32.mrb[0].mxu0
      %v2034 = vpop.f32.mrb[0].mxu0
      %v2035 = vadd.f32 0.0, %v2034
      %v2036 = vpop.f32.mrb[0].mxu0
      %2037 = vdwg.mxu0
      %2038 = vmatprep.subr.bf16.mxu0 0
      %2039 = vmatpush1.bf16.msra.mxu0 %v1717
      %2040 = vmatprep.subr.bf16.mxu0 0
      %2041 = vmatpush1.bf16.msra.mxu0 %v1718
      %2042 = vmatprep.subr.bf16.mxu0 0
      %2043 = vmatpush1.bf16.msra.mxu0 %v1719
      %2044 = vmatprep.subr.bf16.mxu0 0
      %2045 = vmatpush1.bf16.msra.mxu0 %v1720
      %2046 = vmatprep.subr.bf16.mxu0 0
      %2047 = vmatpush1.bf16.msra.mxu0 %v1721
      %2048 = vmatprep.subr.bf16.mxu0 0
      %2049 = vmatpush1.bf16.msra.mxu0 %v1722
      %2050 = vmatprep.subr.bf16.mxu0 0
      %2051 = vmatpush1.bf16.msra.mxu0 %v1723
      %2052 = vmatprep.subr.bf16.mxu0 0
      %2053 = vmatpush1.bf16.msra.mxu0 %v1724
      %2054 = vmatprep.subr.bf16.mxu0 0
      %2055 = vmatpush1.bf16.msra.mxu0 %v1725
      %2056 = vmatprep.subr.bf16.mxu0 0
      %2057 = vmatpush1.bf16.msra.mxu0 %v1726
      %2058 = vmatprep.subr.bf16.mxu0 0
      %2059 = vmatpush1.bf16.msra.mxu0 %v1727
      %2060 = vmatprep.subr.bf16.mxu0 0
      %2061 = vmatpush1.bf16.msra.mxu0 %v1728
      %2062 = vmatprep.subr.bf16.mxu0 0
      %2063 = vmatpush1.bf16.msra.mxu0 %v1729
      %2064 = vmatprep.subr.bf16.mxu0 0
      %2065 = vmatpush1.bf16.msra.mxu0 %v1730
      %2066 = vmatprep.subr.bf16.mxu0 0
      %2067 = vmatpush1.bf16.msra.mxu0 %v1731
      %2068 = vmatprep.subr.bf16.mxu0 0
      %2069 = vmatpush1.bf16.msra.mxu0 %v1732
      %2070 = vmatprep.mubr.bf16.mxu0 %v803
      %2071 = vmatmul.mubr.bf16.gmra.mrb[0].mxu0 %v740
      %v2072 = vpop.f32.mrb[0].mxu0
      %v2073 = vadd.f32 %v1880, %v2072
      %v2074 = vpop.f32.mrb[0].mxu0
      %v2075 = vpop.f32.mrb[0].mxu0
      %v2076 = vadd.f32 %v1883, %v2075
      %v2077 = vpop.f32.mrb[0].mxu0
      %2078 = vmatprep.mubr.bf16.mxu0 %v805
      %2079 = vmatmul.mubr.bf16.gmra.mrb[0].mxu0 %v742
      %v2080 = vpop.f32.mrb[0].mxu0
      %v2081 = vadd.f32 %v1888, %v2080
      %v2082 = vpop.f32.mrb[0].mxu0
      %v2083 = vpop.f32.mrb[0].mxu0
      %v2084 = vadd.f32 %v1891, %v2083
      %v2085 = vpop.f32.mrb[0].mxu0
      %2086 = vmatprep.mubr.bf16.mxu0 %v807
      %2087 = vmatmul.mubr.bf16.gmra.mrb[0].mxu0 %v744
      %v2088 = vpop.f32.mrb[0].mxu0
      %v2089 = vadd.f32 %v1896, %v2088
      %v2090 = vpop.f32.mrb[0].mxu0
      %v2091 = vpop.f32.mrb[0].mxu0
      %v2092 = vadd.f32 %v1899, %v2091
      %v2093 = vpop.f32.mrb[0].mxu0
      %2094 = vmatprep.mubr.bf16.mxu0 %v809
      %2095 = vmatmul.mubr.bf16.gmra.mrb[0].mxu0 %v746
      %v2096 = vpop.f32.mrb[0].mxu0
      %v2097 = vadd.f32 %v1904, %v2096
      %v2098 = vpop.f32.mrb[0].mxu0
      %v2099 = vpop.f32.mrb[0].mxu0
      %v2100 = vadd.f32 %v1907, %v2099
      %v2101 = vpop.f32.mrb[0].mxu0
      %2102 = vmatprep.mubr.bf16.mxu0 %v811
      %2103 = vmatmul.mubr.bf16.gmra.mrb[0].mxu0 %v748
      %v2104 = vpop.f32.mrb[0].mxu0
      %v2105 = vadd.f32 %v1912, %v2104
      %v2106 = vpop.f32.mrb[0].mxu0
      %v2107 = vpop.f32.mrb[0].mxu0
      %v2108 = vadd.f32 %v1915, %v2107
      %v2109 = vpop.f32.mrb[0].mxu0
      %2110 = vmatprep.mubr.bf16.mxu0 %v813
      %2111 = vmatmul.mubr.bf16.gmra.mrb[0].mxu0 %v750
      %v2112 = vpop.f32.mrb[0].mxu0
      %v2113 = vadd.f32 %v1920, %v2112
      %v2114 = vpop.f32.mrb[0].mxu0
      %v2115 = vpop.f32.mrb[0].mxu0
      %v2116 = vadd.f32 %v1923, %v2115
      %v2117 = vpop.f32.mrb[0].mxu0
      %2118 = vmatprep.mubr.bf16.mxu0 %v815
      %2119 = vmatmul.mubr.bf16.gmra.mrb[0].mxu0 %v752
      %v2120 = vpop.f32.mrb[0].mxu0
      %v2121 = vadd.f32 %v1928, %v2120
      %v2122 = vpop.f32.mrb[0].mxu0
      %v2123 = vpop.f32.mrb[0].mxu0
      %v2124 = vadd.f32 %v1931, %v2123
      %v2125 = vpop.f32.mrb[0].mxu0
      %2126 = vmatprep.mubr.bf16.mxu0 %v817
      %2127 = vmatmul.mubr.bf16.gmra.mrb[0].mxu0 %v754
      %v2128 = vpop.f32.mrb[0].mxu0
      %v2129 = vadd.f32 %v1936, %v2128
      %v2130 = vpop.f32.mrb[0].mxu0
      %v2131 = vpop.f32.mrb[0].mxu0
      %v2132 = vadd.f32 %v1939, %v2131
      %v2133 = vpop.f32.mrb[0].mxu0
      %2134 = vmatprep.mubr.bf16.mxu0 %v819
      %2135 = vmatmul.mubr.bf16.gmra.mrb[0].mxu0 %v756
      %v2136 = vpop.f32.mrb[0].mxu0
      %v2137 = vadd.f32 %v1944, %v2136
      %v2138 = vpop.f32.mrb[0].mxu0
      %v2139 = vpop.f32.mrb[0].mxu0
      %v2140 = vadd.f32 %v1947, %v2139
      %v2141 = vpop.f32.mrb[0].mxu0
      %2142 = vmatprep.mubr.bf16.mxu0 %v821
      %2143 = vmatmul.mubr.bf16.gmra.mrb[0].mxu0 %v758
      %v2144 = vpop.f32.mrb[0].mxu0
      %v2145 = vadd.f32 %v1952, %v2144
      %v2146 = vpop.f32.mrb[0].mxu0
      %v2147 = vpop.f32.mrb[0].mxu0
      %v2148 = vadd.f32 %v1955, %v2147
      %v2149 = vpop.f32.mrb[0].mxu0
      %2150 = vmatprep.mubr.bf16.mxu0 %v823
      %2151 = vmatmul.mubr.bf16.gmra.mrb[0].mxu0 %v760
      %v2152 = vpop.f32.mrb[0].mxu0
      %v2153 = vadd.f32 %v1960, %v2152
      %v2154 = vpop.f32.mrb[0].mxu0
      %v2155 = vpop.f32.mrb[0].mxu0
      %v2156 = vadd.f32 %v1963, %v2155
      %v2157 = vpop.f32.mrb[0].mxu0
      %2158 = vmatprep.mubr.bf16.mxu0 %v825
      %2159 = vmatmul.mubr.bf16.gmra.mrb[0].mxu0 %v762
      %v2160 = vpop.f32.mrb[0].mxu0
      %v2161 = vadd.f32 %v1968, %v2160
      %v2162 = vpop.f32.mrb[0].mxu0
      %v2163 = vpop.f32.mrb[0].mxu0
      %v2164 = vadd.f32 %v1971, %v2163
      %v2165 = vpop.f32.mrb[0].mxu0
      %2166 = vmatprep.mubr.bf16.mxu0 %v827
      %2167 = vmatmul.mubr.bf16.gmra.mrb[0].mxu0 %v764
      %v2168 = vpop.f32.mrb[0].mxu0
      %v2169 = vadd.f32 %v1976, %v2168
      %v2170 = vpop.f32.mrb[0].mxu0
      %v2171 = vpop.f32.mrb[0].mxu0
      %v2172 = vadd.f32 %v1979, %v2171
      %v2173 = vpop.f32.mrb[0].mxu0
      %2174 = vmatprep.mubr.bf16.mxu0 %v829
      %2175 = vmatmul.mubr.bf16.gmra.mrb[0].mxu0 %v766
      %v2176 = vpop.f32.mrb[0].mxu0
      %v2177 = vadd.f32 %v1984, %v2176
      %v2178 = vpop.f32.mrb[0].mxu0
      %v2179 = vpop.f32.mrb[0].mxu0
      %v2180 = vadd.f32 %v1987, %v2179
      %v2181 = vpop.f32.mrb[0].mxu0
      %2182 = vmatprep.mubr.bf16.mxu0 %v831
      %2183 = vmatmul.mubr.bf16.gmra.mrb[0].mxu0 %v768
      %v2184 = vpop.f32.mrb[0].mxu0
      %v2185 = vadd.f32 %v1992, %v2184
      %v2186 = vpop.f32.mrb[0].mxu0
      %v2187 = vpop.f32.mrb[0].mxu0
      %v2188 = vadd.f32 %v1995, %v2187
      %v2189 = vpop.f32.mrb[0].mxu0
      %2190 = vmatprep.mubr.bf16.mxu0 %v833
      %2191 = vmatmul.mubr.bf16.gmra.mrb[0].mxu0 %v770
      %v2192 = vpop.f32.mrb[0].mxu0
      %v2193 = vadd.f32 %v2000, %v2192
      %v2194 = vpop.f32.mrb[0].mxu0
      %v2195 = vpop.f32.mrb[0].mxu0
      %v2196 = vadd.f32 %v2003, %v2195
      %v2197 = vpop.f32.mrb[0].mxu0
      %2198 = vmatprep.mubr.bf16.mxu0 %v835
      %2199 = vmatmul.mubr.bf16.gmra.mrb[0].mxu0 %v772
      %v2200 = vpop.f32.mrb[0].mxu0
      %v2201 = vadd.f32 %v2008, %v2200
      %v2202 = vpop.f32.mrb[0].mxu0
      %v2203 = vpop.f32.mrb[0].mxu0
      %v2204 = vadd.f32 %v2011, %v2203
      %v2205 = vpop.f32.mrb[0].mxu0
      %2206 = vmatprep.mubr.bf16.mxu0 %v837
      %2207 = vmatmul.mubr.bf16.gmra.mrb[0].mxu0 %v774
      %v2208 = vpop.f32.mrb[0].mxu0
      %v2209 = vadd.f32 %v2016, %v2208
      %v2210 = vpop.f32.mrb[0].mxu0
      %v2211 = vpop.f32.mrb[0].mxu0
      %v2212 = vadd.f32 %v2019, %v2211
      %v2213 = vpop.f32.mrb[0].mxu0
      %2214 = vmatprep.mubr.bf16.mxu0 %v839
      %2215 = vmatmul.mubr.bf16.gmra.mrb[0].mxu0 %v776
      %v2216 = vpop.f32.mrb[0].mxu0
      %v2217 = vadd.f32 %v2024, %v2216
      %v2218 = vpop.f32.mrb[0].mxu0
      %v2219 = vpop.f32.mrb[0].mxu0
      %v2220 = vadd.f32 %v2027, %v2219
      %v2221 = vpop.f32.mrb[0].mxu0
      %2222 = vmatprep.mubr.bf16.mxu0 %v841
      %2223 = vmatmul.mubr.bf16.gmra.mrb[0].mxu0 %v778
      %v2224 = vpop.f32.mrb[0].mxu0
      %v2225 = vadd.f32 %v2032, %v2224
      %v2226 = vpop.f32.mrb[0].mxu0
      %v2227 = vpop.f32.mrb[0].mxu0
      %v2228 = vadd.f32 %v2035, %v2227
      %v2229 = vpop.f32.mrb[0].mxu0
      %2230 = vdwg.mxu0
      %2231 = vmatprep.subr.bf16.mxu0 0
      %2232 = vmatpush1.bf16.msra.mxu0 %v1733
      %2233 = vmatprep.subr.bf16.mxu0 0
      %2234 = vmatpush1.bf16.msra.mxu0 %v1734
      %2235 = vmatprep.subr.bf16.mxu0 0
      %2236 = vmatpush1.bf16.msra.mxu0 %v1735
      %2237 = vmatprep.subr.bf16.mxu0 0
      %2238 = vmatpush1.bf16.msra.mxu0 %v1736
      %2239 = vmatprep.subr.bf16.mxu0 0
      %2240 = vmatpush1.bf16.msra.mxu0 %v1737
      %2241 = vmatprep.subr.bf16.mxu0 0
      %2242 = vmatpush1.bf16.msra.mxu0 %v1738
      %2243 = vmatprep.subr.bf16.mxu0 0
      %2244 = vmatpush1.bf16.msra.mxu0 %v1739
      %2245 = vmatprep.subr.bf16.mxu0 0
      %2246 = vmatpush1.bf16.msra.mxu0 %v1740
      %2247 = vmatprep.subr.bf16.mxu0 0
      %2248 = vmatpush1.bf16.msra.mxu0 %v1741
      %2249 = vmatprep.subr.bf16.mxu0 0
      %2250 = vmatpush1.bf16.msra.mxu0 %v1742
      %2251 = vmatprep.subr.bf16.mxu0 0
      %2252 = vmatpush1.bf16.msra.mxu0 %v1743
      %2253 = vmatprep.subr.bf16.mxu0 0
      %2254 = vmatpush1.bf16.msra.mxu0 %v1744
      %2255 = vmatprep.subr.bf16.mxu0 0
      %2256 = vmatpush1.bf16.msra.mxu0 %v1745
      %2257 = vmatprep.subr.bf16.mxu0 0
      %2258 = vmatpush1.bf16.msra.mxu0 %v1746
      %2259 = vmatprep.subr.bf16.mxu0 0
      %2260 = vmatpush1.bf16.msra.mxu0 %v1747
      %2261 = vmatprep.subr.bf16.mxu0 0
      %2262 = vmatpush1.bf16.msra.mxu0 %v1748
      %2263 = vmatprep.mubr.bf16.mxu0 %v976
      %2264 = vmatmul.mubr.bf16.gmra.mrb[0].mxu0 %v869
      %v2265 = vpop.f32.mrb[0].mxu0
      %v2266 = vadd.f32 %v2073, %v2265
      %v2267 = vpop.f32.mrb[0].mxu0
      %v2268 = vpop.f32.mrb[0].mxu0
      %v2269 = vadd.f32 %v2076, %v2268
      %v2270 = vpop.f32.mrb[0].mxu0
      %2271 = vmatprep.mubr.bf16.mxu0 %v978
      %2272 = vmatmul.mubr.bf16.gmra.mrb[0].mxu0 %v873
      %v2273 = vpop.f32.mrb[0].mxu0
      %v2274 = vadd.f32 %v2081, %v2273
      %v2275 = vpop.f32.mrb[0].mxu0
      %v2276 = vpop.f32.mrb[0].mxu0
      %v2277 = vadd.f32 %v2084, %v2276
      %v2278 = vpop.f32.mrb[0].mxu0
      %2279 = vmatprep.mubr.bf16.mxu0 %v980
      %2280 = vmatmul.mubr.bf16.gmra.mrb[0].mxu0 %v877
      %v2281 = vpop.f32.mrb[0].mxu0
      %v2282 = vadd.f32 %v2089, %v2281
      %v2283 = vpop.f32.mrb[0].mxu0
      %v2284 = vpop.f32.mrb[0].mxu0
      %v2285 = vadd.f32 %v2092, %v2284
      %v2286 = vpop.f32.mrb[0].mxu0
      %2287 = vmatprep.mubr.bf16.mxu0 %v982
      %2288 = vmatmul.mubr.bf16.gmra.mrb[0].mxu0 %v881
      %v2289 = vpop.f32.mrb[0].mxu0
      %v2290 = vadd.f32 %v2097, %v2289
      %v2291 = vpop.f32.mrb[0].mxu0
      %v2292 = vpop.f32.mrb[0].mxu0
      %v2293 = vadd.f32 %v2100, %v2292
      %v2294 = vpop.f32.mrb[0].mxu0
      %2295 = vmatprep.mubr.bf16.mxu0 %v984
      %2296 = vmatmul.mubr.bf16.gmra.mrb[0].mxu0 %v885
      %v2297 = vpop.f32.mrb[0].mxu0
      %v2298 = vadd.f32 %v2105, %v2297
      %v2299 = vpop.f32.mrb[0].mxu0
      %v2300 = vpop.f32.mrb[0].mxu0
      %v2301 = vadd.f32 %v2108, %v2300
      %v2302 = vpop.f32.mrb[0].mxu0
      %2303 = vmatprep.mubr.bf16.mxu0 %v986
      %2304 = vmatmul.mubr.bf16.gmra.mrb[0].mxu0 %v889
      %v2305 = vpop.f32.mrb[0].mxu0
      %v2306 = vadd.f32 %v2113, %v2305
      %v2307 = vpop.f32.mrb[0].mxu0
      %v2308 = vpop.f32.mrb[0].mxu0
      %v2309 = vadd.f32 %v2116, %v2308
      %v2310 = vpop.f32.mrb[0].mxu0
      %2311 = vmatprep.mubr.bf16.mxu0 %v988
      %2312 = vmatmul.mubr.bf16.gmra.mrb[0].mxu0 %v893
      %v2313 = vpop.f32.mrb[0].mxu0
      %v2314 = vadd.f32 %v2121, %v2313
      %v2315 = vpop.f32.mrb[0].mxu0
      %v2316 = vpop.f32.mrb[0].mxu0
      %v2317 = vadd.f32 %v2124, %v2316
      %v2318 = vpop.f32.mrb[0].mxu0
      %2319 = vmatprep.mubr.bf16.mxu0 %v990
      %2320 = vmatmul.mubr.bf16.gmra.mrb[0].mxu0 %v897
      %v2321 = vpop.f32.mrb[0].mxu0
      %v2322 = vadd.f32 %v2129, %v2321
      %v2323 = vpop.f32.mrb[0].mxu0
      %v2324 = vpop.f32.mrb[0].mxu0
      %v2325 = vadd.f32 %v2132, %v2324
      %v2326 = vpop.f32.mrb[0].mxu0
      %2327 = vmatprep.mubr.bf16.mxu0 %v992
      %2328 = vmatmul.mubr.bf16.gmra.mrb[0].mxu0 %v901
      %v2329 = vpop.f32.mrb[0].mxu0
      %v2330 = vadd.f32 %v2137, %v2329
      %v2331 = vpop.f32.mrb[0].mxu0
      %v2332 = vpop.f32.mrb[0].mxu0
      %v2333 = vadd.f32 %v2140, %v2332
      %v2334 = vpop.f32.mrb[0].mxu0
      %2335 = vmatprep.mubr.bf16.mxu0 %v994
      %2336 = vmatmul.mubr.bf16.gmra.mrb[0].mxu0 %v905
      %v2337 = vpop.f32.mrb[0].mxu0
      %v2338 = vadd.f32 %v2145, %v2337
      %v2339 = vpop.f32.mrb[0].mxu0
      %v2340 = vpop.f32.mrb[0].mxu0
      %v2341 = vadd.f32 %v2148, %v2340
      %v2342 = vpop.f32.mrb[0].mxu0
      %2343 = vmatprep.mubr.bf16.mxu0 %v996
      %2344 = vmatmul.mubr.bf16.gmra.mrb[0].mxu0 %v909
      %v2345 = vpop.f32.mrb[0].mxu0
      %v2346 = vadd.f32 %v2153, %v2345
      %v2347 = vpop.f32.mrb[0].mxu0
      %v2348 = vpop.f32.mrb[0].mxu0
      %v2349 = vadd.f32 %v2156, %v2348
      %v2350 = vpop.f32.mrb[0].mxu0
      %2351 = vmatprep.mubr.bf16.mxu0 %v998
      %2352 = vmatmul.mubr.bf16.gmra.mrb[0].mxu0 %v913
      %v2353 = vpop.f32.mrb[0].mxu0
      %v2354 = vadd.f32 %v2161, %v2353
      %v2355 = vpop.f32.mrb[0].mxu0
      %v2356 = vpop.f32.mrb[0].mxu0
      %v2357 = vadd.f32 %v2164, %v2356
      %v2358 = vpop.f32.mrb[0].mxu0
      %2359 = vmatprep.mubr.bf16.mxu0 %v1000
      %2360 = vmatmul.mubr.bf16.gmra.mrb[0].mxu0 %v917
      %v2361 = vpop.f32.mrb[0].mxu0
      %v2362 = vadd.f32 %v2169, %v2361
      %v2363 = vpop.f32.mrb[0].mxu0
      %v2364 = vpop.f32.mrb[0].mxu0
      %v2365 = vadd.f32 %v2172, %v2364
      %v2366 = vpop.f32.mrb[0].mxu0
      %2367 = vmatprep.mubr.bf16.mxu0 %v1002
      %2368 = vmatmul.mubr.bf16.gmra.mrb[0].mxu0 %v921
      %v2369 = vpop.f32.mrb[0].mxu0
      %v2370 = vadd.f32 %v2177, %v2369
      %v2371 = vpop.f32.mrb[0].mxu0
      %v2372 = vpop.f32.mrb[0].mxu0
      %v2373 = vadd.f32 %v2180, %v2372
      %v2374 = vpop.f32.mrb[0].mxu0
      %2375 = vmatprep.mubr.bf16.mxu0 %v1004
      %2376 = vmatmul.mubr.bf16.gmra.mrb[0].mxu0 %v925
      %v2377 = vpop.f32.mrb[0].mxu0
      %v2378 = vadd.f32 %v2185, %v2377
      %v2379 = vpop.f32.mrb[0].mxu0
      %v2380 = vpop.f32.mrb[0].mxu0
      %v2381 = vadd.f32 %v2188, %v2380
      %v2382 = vpop.f32.mrb[0].mxu0
      %2383 = vmatprep.mubr.bf16.mxu0 %v1006
      %2384 = vmatmul.mubr.bf16.gmra.mrb[0].mxu0 %v929
      %v2385 = vpop.f32.mrb[0].mxu0
      %v2386 = vadd.f32 %v2193, %v2385
      %v2387 = vpop.f32.mrb[0].mxu0
      %v2388 = vpop.f32.mrb[0].mxu0
      %v2389 = vadd.f32 %v2196, %v2388
      %v2390 = vpop.f32.mrb[0].mxu0
      %2391 = vmatprep.mubr.bf16.mxu0 %v1008
      %2392 = vmatmul.mubr.bf16.gmra.mrb[0].mxu0 %v933
      %v2393 = vpop.f32.mrb[0].mxu0
      %v2394 = vadd.f32 %v2201, %v2393
      %v2395 = vpop.f32.mrb[0].mxu0
      %v2396 = vpop.f32.mrb[0].mxu0
      %v2397 = vadd.f32 %v2204, %v2396
      %v2398 = vpop.f32.mrb[0].mxu0
      %2399 = vmatprep.mubr.bf16.mxu0 %v1010
      %2400 = vmatmul.mubr.bf16.gmra.mrb[0].mxu0 %v937
      %v2401 = vpop.f32.mrb[0].mxu0
      %v2402 = vadd.f32 %v2209, %v2401
      %v2403 = vpop.f32.mrb[0].mxu0
      %v2404 = vpop.f32.mrb[0].mxu0
      %v2405 = vadd.f32 %v2212, %v2404
      %v2406 = vpop.f32.mrb[0].mxu0
      %2407 = vmatprep.mubr.bf16.mxu0 %v1012
      %2408 = vmatmul.mubr.bf16.gmra.mrb[0].mxu0 %v943
      %v2409 = vpop.f32.mrb[0].mxu0
      %v2410 = vadd.f32 %v2217, %v2409
      %v2411 = vpop.f32.mrb[0].mxu0
      %v2412 = vpop.f32.mrb[0].mxu0
      %v2413 = vadd.f32 %v2220, %v2412
      %v2414 = vpop.f32.mrb[0].mxu0
      %2415 = vmatprep.mubr.bf16.mxu0 %v1014
      %2416 = vmatmul.mubr.bf16.gmra.mrb[0].mxu0 %v952
      %v2417 = vpop.f32.mrb[0].mxu0
      %v2418 = vadd.f32 %v2225, %v2417
      %v2419 = vpop.f32.mrb[0].mxu0
      %v2420 = vpop.f32.mrb[0].mxu0
      %v2421 = vadd.f32 %v2228, %v2420
      %v2422 = vpop.f32.mrb[0].mxu0
      %2423 = vdwg.mxu0
      %2424 = vmatprep.subr.bf16.mxu0 0
      %2425 = vmatpush1.bf16.msra.mxu0 %v1749
      %2426 = vmatprep.subr.bf16.mxu0 0
      %2427 = vmatpush1.bf16.msra.mxu0 %v1750
      %2428 = vmatprep.subr.bf16.mxu0 0
      %2429 = vmatpush1.bf16.msra.mxu0 %v1751
      %2430 = vmatprep.subr.bf16.mxu0 0
      %2431 = vmatpush1.bf16.msra.mxu0 %v1752
      %2432 = vmatprep.subr.bf16.mxu0 0
      %2433 = vmatpush1.bf16.msra.mxu0 %v1753
      %2434 = vmatprep.subr.bf16.mxu0 0
      %2435 = vmatpush1.bf16.msra.mxu0 %v1754
      %2436 = vmatprep.subr.bf16.mxu0 0
      %2437 = vmatpush1.bf16.msra.mxu0 %v1755
      %2438 = vmatprep.subr.bf16.mxu0 0
      %2439 = vmatpush1.bf16.msra.mxu0 %v1756
      %2440 = vmatprep.subr.bf16.mxu0 0
      %2441 = vmatpush1.bf16.msra.mxu0 %v1757
      %2442 = vmatprep.subr.bf16.mxu0 0
      %2443 = vmatpush1.bf16.msra.mxu0 %v1758
      %2444 = vmatprep.subr.bf16.mxu0 0
      %2445 = vmatpush1.bf16.msra.mxu0 %v1759
      %2446 = vmatprep.subr.bf16.mxu0 0
      %2447 = vmatpush1.bf16.msra.mxu0 %v1760
      %2448 = vmatprep.subr.bf16.mxu0 0
      %2449 = vmatpush1.bf16.msra.mxu0 %v1761
      %2450 = vmatprep.subr.bf16.mxu0 0
      %2451 = vmatpush1.bf16.msra.mxu0 %v1762
      %2452 = vmatprep.subr.bf16.mxu0 0
      %2453 = vmatpush1.bf16.msra.mxu0 %v1763
      %2454 = vmatprep.subr.bf16.mxu0 0
      %2455 = vmatpush1.bf16.msra.mxu0 %v1764
      %2456 = vmatprep.mubr.bf16.mxu0 %v1105
      %2457 = vmatmul.mubr.bf16.gmra.mrb[0].mxu0 %v1039
      %v2458 = vpop.f32.mrb[0].mxu0
      %v2459 = vadd.f32 %v2266, %v2458
      %v2460 = vpop.f32.mrb[0].mxu0
      %v2461 = vpop.f32.mrb[0].mxu0
      %v2462 = vadd.f32 %v2269, %v2461
      %v2463 = vpop.f32.mrb[0].mxu0
      %2464 = vmatprep.mubr.bf16.mxu0 %v1109
      %2465 = vmatmul.mubr.bf16.gmra.mrb[0].mxu0 %v1041
      %v2466 = vpop.f32.mrb[0].mxu0
      %v2467 = vadd.f32 %v2274, %v2466
      %v2468 = vpop.f32.mrb[0].mxu0
      %v2469 = vpop.f32.mrb[0].mxu0
      %v2470 = vadd.f32 %v2277, %v2469
      %v2471 = vpop.f32.mrb[0].mxu0
      %2472 = vmatprep.mubr.bf16.mxu0 %v1113
      %2473 = vmatmul.mubr.bf16.gmra.mrb[0].mxu0 %v1043
      %v2474 = vpop.f32.mrb[0].mxu0
      %v2475 = vadd.f32 %v2282, %v2474
      %v2476 = vpop.f32.mrb[0].mxu0
      %v2477 = vpop.f32.mrb[0].mxu0
      %v2478 = vadd.f32 %v2285, %v2477
      %v2479 = vpop.f32.mrb[0].mxu0
      %2480 = vmatprep.mubr.bf16.mxu0 %v1117
      %2481 = vmatmul.mubr.bf16.gmra.mrb[0].mxu0 %v1045
      %v2482 = vpop.f32.mrb[0].mxu0
      %v2483 = vadd.f32 %v2290, %v2482
      %v2484 = vpop.f32.mrb[0].mxu0
      %v2485 = vpop.f32.mrb[0].mxu0
      %v2486 = vadd.f32 %v2293, %v2485
      %v2487 = vpop.f32.mrb[0].mxu0
      %2488 = vmatprep.mubr.bf16.mxu0 %v1121
      %2489 = vmatmul.mubr.bf16.gmra.mrb[0].mxu0 %v1047
      %v2490 = vpop.f32.mrb[0].mxu0
      %v2491 = vadd.f32 %v2298, %v2490
      %v2492 = vpop.f32.mrb[0].mxu0
      %v2493 = vpop.f32.mrb[0].mxu0
      %v2494 = vadd.f32 %v2301, %v2493
      %v2495 = vpop.f32.mrb[0].mxu0
      %2496 = vmatprep.mubr.bf16.mxu0 %v1125
      %2497 = vmatmul.mubr.bf16.gmra.mrb[0].mxu0 %v1049
      %v2498 = vpop.f32.mrb[0].mxu0
      %v2499 = vadd.f32 %v2306, %v2498
      %v2500 = vpop.f32.mrb[0].mxu0
      %v2501 = vpop.f32.mrb[0].mxu0
      %v2502 = vadd.f32 %v2309, %v2501
      %v2503 = vpop.f32.mrb[0].mxu0
      %2504 = vmatprep.mubr.bf16.mxu0 %v1129
      %2505 = vmatmul.mubr.bf16.gmra.mrb[0].mxu0 %v1051
      %v2506 = vpop.f32.mrb[0].mxu0
      %v2507 = vadd.f32 %v2314, %v2506
      %v2508 = vpop.f32.mrb[0].mxu0
      %v2509 = vpop.f32.mrb[0].mxu0
      %v2510 = vadd.f32 %v2317, %v2509
      %v2511 = vpop.f32.mrb[0].mxu0
      %2512 = vmatprep.mubr.bf16.mxu0 %v1133
      %2513 = vmatmul.mubr.bf16.gmra.mrb[0].mxu0 %v1053
      %v2514 = vpop.f32.mrb[0].mxu0
      %v2515 = vadd.f32 %v2322, %v2514
      %v2516 = vpop.f32.mrb[0].mxu0
      %v2517 = vpop.f32.mrb[0].mxu0
      %v2518 = vadd.f32 %v2325, %v2517
      %v2519 = vpop.f32.mrb[0].mxu0
      %2520 = vmatprep.mubr.bf16.mxu0 %v1137
      %2521 = vmatmul.mubr.bf16.gmra.mrb[0].mxu0 %v1055
      %v2522 = vpop.f32.mrb[0].mxu0
      %v2523 = vadd.f32 %v2330, %v2522
      %v2524 = vpop.f32.mrb[0].mxu0
      %v2525 = vpop.f32.mrb[0].mxu0
      %v2526 = vadd.f32 %v2333, %v2525
      %v2527 = vpop.f32.mrb[0].mxu0
      %2528 = vmatprep.mubr.bf16.mxu0 %v1141
      %2529 = vmatmul.mubr.bf16.gmra.mrb[0].mxu0 %v1057
      %v2530 = vpop.f32.mrb[0].mxu0
      %v2531 = vadd.f32 %v2338, %v2530
      %v2532 = vpop.f32.mrb[0].mxu0
      %v2533 = vpop.f32.mrb[0].mxu0
      %v2534 = vadd.f32 %v2341, %v2533
      %v2535 = vpop.f32.mrb[0].mxu0
      %2536 = vmatprep.mubr.bf16.mxu0 %v1145
      %2537 = vmatmul.mubr.bf16.gmra.mrb[0].mxu0 %v1059
      %v2538 = vpop.f32.mrb[0].mxu0
      %v2539 = vadd.f32 %v2346, %v2538
      %v2540 = vpop.f32.mrb[0].mxu0
      %v2541 = vpop.f32.mrb[0].mxu0
      %v2542 = vadd.f32 %v2349, %v2541
      %v2543 = vpop.f32.mrb[0].mxu0
      %2544 = vmatprep.mubr.bf16.mxu0 %v1149
      %2545 = vmatmul.mubr.bf16.gmra.mrb[0].mxu0 %v1061
      %v2546 = vpop.f32.mrb[0].mxu0
      %v2547 = vadd.f32 %v2354, %v2546
      %v2548 = vpop.f32.mrb[0].mxu0
      %v2549 = vpop.f32.mrb[0].mxu0
      %v2550 = vadd.f32 %v2357, %v2549
      %v2551 = vpop.f32.mrb[0].mxu0
      %2552 = vmatprep.mubr.bf16.mxu0 %v1153
      %2553 = vmatmul.mubr.bf16.gmra.mrb[0].mxu0 %v1063
      %v2554 = vpop.f32.mrb[0].mxu0
      %v2555 = vadd.f32 %v2362, %v2554
      %v2556 = vpop.f32.mrb[0].mxu0
      %v2557 = vpop.f32.mrb[0].mxu0
      %v2558 = vadd.f32 %v2365, %v2557
      %v2559 = vpop.f32.mrb[0].mxu0
      %2560 = vmatprep.mubr.bf16.mxu0 %v1157
      %2561 = vmatmul.mubr.bf16.gmra.mrb[0].mxu0 %v1065
      %v2562 = vpop.f32.mrb[0].mxu0
      %v2563 = vadd.f32 %v2370, %v2562
      %v2564 = vpop.f32.mrb[0].mxu0
      %v2565 = vpop.f32.mrb[0].mxu0
      %v2566 = vadd.f32 %v2373, %v2565
      %v2567 = vpop.f32.mrb[0].mxu0
      %2568 = vmatprep.mubr.bf16.mxu0 %v1161
      %2569 = vmatmul.mubr.bf16.gmra.mrb[0].mxu0 %v1067
      %v2570 = vpop.f32.mrb[0].mxu0
      %v2571 = vadd.f32 %v2378, %v2570
      %v2572 = vpop.f32.mrb[0].mxu0
      %v2573 = vpop.f32.mrb[0].mxu0
      %v2574 = vadd.f32 %v2381, %v2573
      %v2575 = vpop.f32.mrb[0].mxu0
      %2576 = vmatprep.mubr.bf16.mxu0 %v1165
      %2577 = vmatmul.mubr.bf16.gmra.mrb[0].mxu0 %v1069
      %v2578 = vpop.f32.mrb[0].mxu0
      %v2579 = vadd.f32 %v2386, %v2578
      %v2580 = vpop.f32.mrb[0].mxu0
      %v2581 = vpop.f32.mrb[0].mxu0
      %v2582 = vadd.f32 %v2389, %v2581
      %v2583 = vpop.f32.mrb[0].mxu0
      %2584 = vmatprep.mubr.bf16.mxu0 %v1169
      %2585 = vmatmul.mubr.bf16.gmra.mrb[0].mxu0 %v1071
      %v2586 = vpop.f32.mrb[0].mxu0
      %v2587 = vadd.f32 %v2394, %v2586
      %v2588 = vpop.f32.mrb[0].mxu0
      %v2589 = vpop.f32.mrb[0].mxu0
      %v2590 = vadd.f32 %v2397, %v2589
      %v2591 = vpop.f32.mrb[0].mxu0
      %2592 = vmatprep.mubr.bf16.mxu0 %v1173
      %2593 = vmatmul.mubr.bf16.gmra.mrb[0].mxu0 %v1073
      %v2594 = vpop.f32.mrb[0].mxu0
      %v2595 = vadd.f32 %v2402, %v2594
      %v2596 = vpop.f32.mrb[0].mxu0
      %v2597 = vpop.f32.mrb[0].mxu0
      %v2598 = vadd.f32 %v2405, %v2597
      %v2599 = vpop.f32.mrb[0].mxu0
      %2600 = vmatprep.mubr.bf16.mxu0 %v1177
      %2601 = vmatmul.mubr.bf16.gmra.mrb[0].mxu0 %v1075
      %v2602 = vpop.f32.mrb[0].mxu0
      %v2603 = vadd.f32 %v2410, %v2602
      %v2604 = vpop.f32.mrb[0].mxu0
      %v2605 = vpop.f32.mrb[0].mxu0
      %v2606 = vadd.f32 %v2413, %v2605
      %v2607 = vpop.f32.mrb[0].mxu0
      %2608 = vmatprep.mubr.bf16.mxu0 %v1186
      %2609 = vmatmul.mubr.bf16.gmra.mrb[0].mxu0 %v1077
      %v2610 = vpop.f32.mrb[0].mxu0
      %v2611 = vadd.f32 %v2418, %v2610
      %v2612 = vpop.f32.mrb[0].mxu0
      %v2613 = vpop.f32.mrb[0].mxu0
      %v2614 = vadd.f32 %v2421, %v2613
      %v2615 = vpop.f32.mrb[0].mxu0
      %2616 = vdwg.mxu0
      %2617 = vmatprep.subr.bf16.mxu0 0
      %2618 = vmatpush1.bf16.msra.mxu0 %v1765
      %2619 = vmatprep.subr.bf16.mxu0 0
      %2620 = vmatpush1.bf16.msra.mxu0 %v1766
      %2621 = vmatprep.subr.bf16.mxu0 0
      %2622 = vmatpush1.bf16.msra.mxu0 %v1767
      %2623 = vmatprep.subr.bf16.mxu0 0
      %2624 = vmatpush1.bf16.msra.mxu0 %v1768
      %2625 = vmatprep.subr.bf16.mxu0 0
      %2626 = vmatpush1.bf16.msra.mxu0 %v1769
      %2627 = vmatprep.subr.bf16.mxu0 0
      %2628 = vmatpush1.bf16.msra.mxu0 %v1770
      %2629 = vmatprep.subr.bf16.mxu0 0
      %2630 = vmatpush1.bf16.msra.mxu0 %v1771
      %2631 = vmatprep.subr.bf16.mxu0 0
      %2632 = vmatpush1.bf16.msra.mxu0 %v1772
      %2633 = vmatprep.subr.bf16.mxu0 0
      %2634 = vmatpush1.bf16.msra.mxu0 0
      %2635 = vmatprep.subr.bf16.mxu0 0
      %2636 = vmatpush1.bf16.msra.mxu0 0
      %2637 = vmatprep.subr.bf16.mxu0 0
      %2638 = vmatpush1.bf16.msra.mxu0 0
      %2639 = vmatprep.subr.bf16.mxu0 0
      %2640 = vmatpush1.bf16.msra.mxu0 0
      %2641 = vmatprep.subr.bf16.mxu0 0
      %2642 = vmatpush1.bf16.msra.mxu0 0
      %2643 = vmatprep.subr.bf16.mxu0 0
      %2644 = vmatpush1.bf16.msra.mxu0 0
      %2645 = vmatprep.subr.bf16.mxu0 0
      %2646 = vmatpush1.bf16.msra.mxu0 0
      %2647 = vmatprep.subr.bf16.mxu0 0
      %2648 = vmatpush1.bf16.msra.mxu0 0
      %2649 = vmatprep.mubr.bf16.mxu0 0
      %2650 = vmatmul.mubr.bf16.gmra.mrb[0].mxu0 %v1210
      %v2651 = vpop.f32.mrb[0].mxu0
      %v2652 = vadd.f32 %v2459, %v2651
      %v2653 = vpop.f32.mrb[0].mxu0
      %v2654 = vpop.f32.mrb[0].mxu0
      %v2655 = vadd.f32 %v2462, %v2654
      %v2656 = vpop.f32.mrb[0].mxu0
      %2657 = vmatprep.mubr.bf16.mxu0 0
      %2658 = vmatmul.mubr.bf16.gmra.mrb[0].mxu0 %v1212
      %v2659 = vpop.f32.mrb[0].mxu0
      %v2660 = vadd.f32 %v2467, %v2659
      %v2661 = vpop.f32.mrb[0].mxu0
      %v2662 = vpop.f32.mrb[0].mxu0
      %v2663 = vadd.f32 %v2470, %v2662
      %v2664 = vpop.f32.mrb[0].mxu0
      %2665 = vmatprep.mubr.bf16.mxu0 0
      %2666 = vmatmul.mubr.bf16.gmra.mrb[0].mxu0 %v1214
      %v2667 = vpop.f32.mrb[0].mxu0
      %v2668 = vadd.f32 %v2475, %v2667
      %v2669 = vpop.f32.mrb[0].mxu0
      %v2670 = vpop.f32.mrb[0].mxu0
      %v2671 = vadd.f32 %v2478, %v2670
      %v2672 = vpop.f32.mrb[0].mxu0
      %2673 = vmatprep.mubr.bf16.mxu0 0
      %2674 = vmatmul.mubr.bf16.gmra.mrb[0].mxu0 %v1216
      %v2675 = vpop.f32.mrb[0].mxu0
      %v2676 = vadd.f32 %v2483, %v2675
      %v2677 = vpop.f32.mrb[0].mxu0
      %v2678 = vpop.f32.mrb[0].mxu0
      %v2679 = vadd.f32 %v2486, %v2678
      %v2680 = vpop.f32.mrb[0].mxu0
      %2681 = vmatprep.mubr.bf16.mxu0 0
      %2682 = vmatmul.mubr.bf16.gmra.mrb[0].mxu0 %v1218
      %v2683 = vpop.f32.mrb[0].mxu0
      %v2684 = vadd.f32 %v2491, %v2683
      %v2685 = vpop.f32.mrb[0].mxu0
      %v2686 = vpop.f32.mrb[0].mxu0
      %v2687 = vadd.f32 %v2494, %v2686
      %v2688 = vpop.f32.mrb[0].mxu0
      %2689 = vmatprep.mubr.bf16.mxu0 0
      %2690 = vmatmul.mubr.bf16.gmra.mrb[0].mxu0 %v1220
      %v2691 = vpop.f32.mrb[0].mxu0
      %v2692 = vadd.f32 %v2499, %v2691
      %v2693 = vpop.f32.mrb[0].mxu0
      %v2694 = vpop.f32.mrb[0].mxu0
      %v2695 = vadd.f32 %v2502, %v2694
      %v2696 = vpop.f32.mrb[0].mxu0
      %2697 = vmatprep.mubr.bf16.mxu0 0
      %2698 = vmatmul.mubr.bf16.gmra.mrb[0].mxu0 %v1222
      %v2699 = vpop.f32.mrb[0].mxu0
      %v2700 = vadd.f32 %v2507, %v2699
      %v2701 = vpop.f32.mrb[0].mxu0
      %v2702 = vpop.f32.mrb[0].mxu0
      %v2703 = vadd.f32 %v2510, %v2702
      %v2704 = vpop.f32.mrb[0].mxu0
      %2705 = vmatprep.mubr.bf16.mxu0 0
      %2706 = vmatmul.mubr.bf16.gmra.mrb[0].mxu0 %v1224
      %v2707 = vpop.f32.mrb[0].mxu0
      %v2708 = vadd.f32 %v2515, %v2707
      %v2709 = vpop.f32.mrb[0].mxu0
      %v2710 = vpop.f32.mrb[0].mxu0
      %v2711 = vadd.f32 %v2518, %v2710
      %v2712 = vpop.f32.mrb[0].mxu0
      %2713 = vmatprep.mubr.bf16.mxu0 0
      %2714 = vmatmul.mubr.bf16.gmra.mrb[0].mxu0 %v1226
      %v2715 = vpop.f32.mrb[0].mxu0
      %v2716 = vadd.f32 %v2523, %v2715
      %v2717 = vpop.f32.mrb[0].mxu0
      %v2718 = vpop.f32.mrb[0].mxu0
      %v2719 = vadd.f32 %v2526, %v2718
      %v2720 = vpop.f32.mrb[0].mxu0
      %2721 = vmatprep.mubr.bf16.mxu0 0
      %2722 = vmatmul.mubr.bf16.gmra.mrb[0].mxu0 %v1228
      %v2723 = vpop.f32.mrb[0].mxu0
      %v2724 = vadd.f32 %v2531, %v2723
      %v2725 = vpop.f32.mrb[0].mxu0
      %v2726 = vpop.f32.mrb[0].mxu0
      %v2727 = vadd.f32 %v2534, %v2726
      %v2728 = vpop.f32.mrb[0].mxu0
      %2729 = vmatprep.mubr.bf16.mxu0 0
      %2730 = vmatmul.mubr.bf16.gmra.mrb[0].mxu0 %v1230
      %v2731 = vpop.f32.mrb[0].mxu0
      %v2732 = vadd.f32 %v2539, %v2731
      %v2733 = vpop.f32.mrb[0].mxu0
      %v2734 = vpop.f32.mrb[0].mxu0
      %v2735 = vadd.f32 %v2542, %v2734
      %v2736 = vpop.f32.mrb[0].mxu0
      %2737 = vmatprep.mubr.bf16.mxu0 0
      %2738 = vmatmul.mubr.bf16.gmra.mrb[0].mxu0 %v1232
      %v2739 = vpop.f32.mrb[0].mxu0
      %v2740 = vadd.f32 %v2547, %v2739
      %v2741 = vpop.f32.mrb[0].mxu0
      %v2742 = vpop.f32.mrb[0].mxu0
      %v2743 = vadd.f32 %v2550, %v2742
      %v2744 = vpop.f32.mrb[0].mxu0
      %2745 = vmatprep.mubr.bf16.mxu0 0
      %2746 = vmatmul.mubr.bf16.gmra.mrb[0].mxu0 %v1234
      %v2747 = vpop.f32.mrb[0].mxu0
      %v2748 = vadd.f32 %v2555, %v2747
      %v2749 = vpop.f32.mrb[0].mxu0
      %v2750 = vpop.f32.mrb[0].mxu0
      %v2751 = vadd.f32 %v2558, %v2750
      %v2752 = vpop.f32.mrb[0].mxu0
      %2753 = vmatprep.mubr.bf16.mxu0 0
      %2754 = vmatmul.mubr.bf16.gmra.mrb[0].mxu0 %v1236
      %v2755 = vpop.f32.mrb[0].mxu0
      %v2756 = vadd.f32 %v2563, %v2755
      %v2757 = vpop.f32.mrb[0].mxu0
      %v2758 = vpop.f32.mrb[0].mxu0
      %v2759 = vadd.f32 %v2566, %v2758
      %v2760 = vpop.f32.mrb[0].mxu0
      %2761 = vmatprep.mubr.bf16.mxu0 0
      %2762 = vmatmul.mubr.bf16.gmra.mrb[0].mxu0 %v1238
      %v2763 = vpop.f32.mrb[0].mxu0
      %v2764 = vadd.f32 %v2571, %v2763
      %v2765 = vpop.f32.mrb[0].mxu0
      %v2766 = vpop.f32.mrb[0].mxu0
      %v2767 = vadd.f32 %v2574, %v2766
      %v2768 = vpop.f32.mrb[0].mxu0
      %2769 = vmatprep.mubr.bf16.mxu0 0
      %2770 = vmatmul.mubr.bf16.gmra.mrb[0].mxu0 %v1240
      %v2771 = vpop.f32.mrb[0].mxu0
      %v2772 = vadd.f32 %v2579, %v2771
      %v2773 = vpop.f32.mrb[0].mxu0
      %v2774 = vpop.f32.mrb[0].mxu0
      %v2775 = vadd.f32 %v2582, %v2774
      %v2776 = vpop.f32.mrb[0].mxu0
      %2777 = vmatprep.mubr.bf16.mxu0 0
      %2778 = vmatmul.mubr.bf16.gmra.mrb[0].mxu0 %v1242
      %v2779 = vpop.f32.mrb[0].mxu0
      %v2780 = vadd.f32 %v2587, %v2779
      %v2781 = vpop.f32.mrb[0].mxu0
      %v2782 = vpop.f32.mrb[0].mxu0
      %v2783 = vadd.f32 %v2590, %v2782
      %v2784 = vpop.f32.mrb[0].mxu0
      %2785 = vmatprep.mubr.bf16.mxu0 0
      %2786 = vmatmul.mubr.bf16.gmra.mrb[0].mxu0 %v1244
      %v2787 = vpop.f32.mrb[0].mxu0
      %v2788 = vadd.f32 %v2595, %v2787
      %v2789 = vpop.f32.mrb[0].mxu0
      %v2790 = vpop.f32.mrb[0].mxu0
      %v2791 = vadd.f32 %v2598, %v2790
      %v2792 = vpop.f32.mrb[0].mxu0
      %2793 = vmatprep.mubr.bf16.mxu0 0
      %2794 = vmatmul.mubr.bf16.gmra.mrb[0].mxu0 %v1246
      %v2795 = vpop.f32.mrb[0].mxu0
      %v2796 = vadd.f32 %v2603, %v2795
      %v2797 = vpop.f32.mrb[0].mxu0
      %v2798 = vpop.f32.mrb[0].mxu0
      %v2799 = vadd.f32 %v2606, %v2798
      %v2800 = vpop.f32.mrb[0].mxu0
      %2801 = vmatprep.mubr.bf16.mxu0 0
      %2802 = vmatmul.mubr.bf16.gmra.mrb[0].mxu0 %v1248
      %v2803 = vpop.f32.mrb[0].mxu0
      %v2804 = vadd.f32 %v2611, %v2803
      %v2805 = vpop.f32.mrb[0].mxu0
      %v2806 = vpop.f32.mrb[0].mxu0
      %v2807 = vadd.f32 %v2614, %v2806
      %v2808 = vpop.f32.mrb[0].mxu0
      %2809 = vdwg.mxu0
      %v2810 = vpack.c.bf16 %v2655, %v2652
      %v2811 = vpack.c.bf16 %v2663, %v2660
      %v2812 = vpack.c.bf16 %v2671, %v2668
      %v2813 = vpack.c.bf16 %v2679, %v2676
      %v2814 = vpack.c.bf16 %v2687, %v2684
      %v2815 = vpack.c.bf16 %v2695, %v2692
      %v2816 = vpack.c.bf16 %v2703, %v2700
      %v2817 = vpack.c.bf16 %v2711, %v2708
      %v2818 = vpack.c.bf16 %v2719, %v2716
      %v2819 = vpack.c.bf16 %v2727, %v2724
      %v2820 = vpack.c.bf16 %v2735, %v2732
      %v2821 = vpack.c.bf16 %v2743, %v2740
      %v2822 = vpack.c.bf16 %v2751, %v2748
      %v2823 = vpack.c.bf16 %v2759, %v2756
      %v2824 = vpack.c.bf16 %v2767, %v2764
      %v2825 = vpack.c.bf16 %v2775, %v2772
      %v2826 = vpack.c.bf16 %v2783, %v2780
      %v2827 = vpack.c.bf16 %v2791, %v2788
      %v2828 = vpack.c.bf16 %v2799, %v2796
      %v2829 = vpack.c.bf16 %v2807, %v2804
      %v2850 = vunpack.c.l.b16 %v2810
      %v2851 = vunpack.c.h.b16 %v2810
      %v2852 = vunpack.c.l.b16 %v2811
      %v2853 = vunpack.c.h.b16 %v2811
      %v2854 = vunpack.c.l.b16 %v2812
      %v2855 = vunpack.c.h.b16 %v2812
      %v2856 = vunpack.c.l.b16 %v2813
      %v2857 = vunpack.c.h.b16 %v2813
      %v2858 = vunpack.c.l.b16 %v2814
      %v2859 = vunpack.c.h.b16 %v2814
      %v2860 = vunpack.c.l.b16 %v2815
      %v2861 = vunpack.c.h.b16 %v2815
      %v2862 = vunpack.c.l.b16 %v2816
      %v2863 = vunpack.c.h.b16 %v2816
      %v2864 = vunpack.c.l.b16 %v2817
      %v2865 = vunpack.c.h.b16 %v2817
      %v2866 = vunpack.c.l.b16 %v2818
      %v2867 = vunpack.c.h.b16 %v2818
      %v2868 = vunpack.c.l.b16 %v2819
      %v2869 = vunpack.c.h.b16 %v2819
      %v2870 = vunpack.c.l.b16 %v2820
      %v2871 = vunpack.c.h.b16 %v2820
      %v2872 = vunpack.c.l.b16 %v2821
      %v2873 = vunpack.c.h.b16 %v2821
      %v2874 = vunpack.c.l.b16 %v2822
      %v2875 = vunpack.c.h.b16 %v2822
      %v2876 = vunpack.c.l.b16 %v2823
      %v2877 = vunpack.c.h.b16 %v2823
      %v2878 = vunpack.c.l.b16 %v2824
      %v2879 = vunpack.c.h.b16 %v2824
      %v2880 = vunpack.c.l.b16 %v2825
      %v2881 = vunpack.c.h.b16 %v2825
      %v2882 = vunpack.c.l.b16 %v2826
      %v2883 = vunpack.c.h.b16 %v2826
      %v2884 = vunpack.c.l.b16 %v2827
      %v2885 = vunpack.c.h.b16 %v2827
      %v2886 = vunpack.c.l.b16 %v2828
      %v2887 = vunpack.c.h.b16 %v2828
      %v2888 = vunpack.c.l.b16 %v2829
      %v2889 = vunpack.c.h.b16 %v2829
      %v2890 = vpack.c.b16 %v2850, %v2850
      %v2891 = vpack.c.b16 %v2851, %v2851
      %v2892 = vpack.c.b16 %v2852, %v2852
      %v2893 = vpack.c.b16 %v2853, %v2853
      %v2894 = vpack.c.b16 %v2854, %v2854
      %v2895 = vpack.c.b16 %v2855, %v2855
      %v2896 = vpack.c.b16 %v2856, %v2856
      %v2897 = vpack.c.b16 %v2857, %v2857
      %v2898 = vpack.c.b16 %v2858, %v2858
      %v2899 = vpack.c.b16 %v2859, %v2859
      %v2900 = vpack.c.b16 %v2860, %v2860
      %v2901 = vpack.c.b16 %v2861, %v2861
      %v2902 = vpack.c.b16 %v2862, %v2862
      %v2903 = vpack.c.b16 %v2863, %v2863
      %v2904 = vpack.c.b16 %v2864, %v2864
      %v2905 = vpack.c.b16 %v2865, %v2865
      %v2906 = vpack.c.b16 %v2866, %v2866
      %v2907 = vpack.c.b16 %v2867, %v2867
      %v2908 = vpack.c.b16 %v2868, %v2868
      %v2909 = vpack.c.b16 %v2869, %v2869
      %v2910 = vpack.c.b16 %v2870, %v2870
      %v2911 = vpack.c.b16 %v2871, %v2871
      %v2912 = vpack.c.b16 %v2872, %v2872
      %v2913 = vpack.c.b16 %v2873, %v2873
      %v2914 = vpack.c.b16 %v2874, %v2874
      %v2915 = vpack.c.b16 %v2875, %v2875
      %v2916 = vpack.c.b16 %v2876, %v2876
      %v2917 = vpack.c.b16 %v2877, %v2877
      %v2918 = vpack.c.b16 %v2878, %v2878
      %v2919 = vpack.c.b16 %v2879, %v2879
      %v2920 = vpack.c.b16 %v2880, %v2880
      %v2921 = vpack.c.b16 %v2881, %v2881
      %v2922 = vpack.c.b16 %v2882, %v2882
      %v2923 = vpack.c.b16 %v2883, %v2883
      %v2924 = vpack.c.b16 %v2884, %v2884
      %v2925 = vpack.c.b16 %v2885, %v2885
      %v2926 = vpack.c.b16 %v2886, %v2886
      %v2927 = vpack.c.b16 %v2887, %v2887
      %v2928 = vpack.c.b16 %v2888, %v2888
      %v2929 = vpack.c.b16 %v2889, %v2889
      %2970 = vst [vmem:[%s258] sm:$0xf] %v2890
      %2971 = vst [vmem:[%s258 + $0x4] sm:$0xf] %v2891
      %2972 = vst [vmem:[%s258 + $0x8] sm:$0xf] %v2892
      %2973 = vst [vmem:[%s258 + $0xc] sm:$0xf] %v2893
      %2974 = vst [vmem:[%s258 + $0x10] sm:$0xf] %v2894
      %2975 = vst [vmem:[%s258 + $0x14] sm:$0xf] %v2895
      %2976 = vst [vmem:[%s258 + $0x18] sm:$0xf] %v2896
      %2977 = vst [vmem:[%s258 + $0x1c] sm:$0xf] %v2897
      %2978 = vst [vmem:[%s258 + $0x20] sm:$0xf] %v2898
      %2979 = vst [vmem:[%s258 + $0x24] sm:$0xf] %v2899
      %2980 = vst [vmem:[%s258 + $0x28] sm:$0xf] %v2900
      %2981 = vst [vmem:[%s258 + $0x2c] sm:$0xf] %v2901
      %2982 = vst [vmem:[%s258 + $0x30] sm:$0xf] %v2902
      %2983 = vst [vmem:[%s258 + $0x34] sm:$0xf] %v2903
      %2984 = vst [vmem:[%s258 + $0x38] sm:$0xf] %v2904
      %2985 = vst [vmem:[%s258 + $0x3c] sm:$0xf] %v2905
      %2986 = vst [vmem:[%s258 + $0x40] sm:$0xf] %v2906
      %2987 = vst [vmem:[%s258 + $0x44] sm:$0xf] %v2907
      %2988 = vst [vmem:[%s258 + $0x48] sm:$0xf] %v2908
      %2989 = vst [vmem:[%s258 + $0x4c] sm:$0xf] %v2909
      %2990 = vst [vmem:[%s258 + $0x50] sm:$0xf] %v2910
      %2991 = vst [vmem:[%s258 + $0x54] sm:$0xf] %v2911
      %2992 = vst [vmem:[%s258 + $0x58] sm:$0xf] %v2912
      %2993 = vst [vmem:[%s258 + $0x5c] sm:$0xf] %v2913
      %2994 = vst [vmem:[%s258 + $0x60] sm:$0xf] %v2914
      %2995 = vst [vmem:[%s258 + $0x64] sm:$0xf] %v2915
      %2996 = vst [vmem:[%s258 + $0x68] sm:$0xf] %v2916
      %2997 = vst [vmem:[%s258 + $0x6c] sm:$0xf] %v2917
      %2998 = vst [vmem:[%s258 + $0x70] sm:$0xf] %v2918
      %2999 = vst [vmem:[%s258 + $0x74] sm:$0xf] %v2919
      %3000 = vst [vmem:[%s258 + $0x78] sm:$0xf] %v2920
      %3001 = vst [vmem:[%s258 + $0x7c] sm:$0xf] %v2921
      %3002 = vst [vmem:[%s258 + $0x80] sm:$0xf] %v2922
      %3003 = vst [vmem:[%s258 + $0x84] sm:$0xf] %v2923
      %3004 = vst [vmem:[%s258 + $0x88] sm:$0xf] %v2924
      %3005 = vst [vmem:[%s258 + $0x8c] sm:$0xf] %v2925
      %3006 = vst [vmem:[%s258 + $0x90] sm:$0xf] %v2926
      %3007 = vst [vmem:[%s258 + $0x94] sm:$0xf] %v2927
      %3008 = vst [vmem:[%s258 + $0x98] sm:$0xf] %v2928
      %3009 = vst [vmem:[%s258 + $0x9c] sm:$0xf] %v2929
      %v3010 = vld [vmem:[%s2] sm:$0xff]
      %v3011 = vld [vmem:[%s2 + $0x8] sm:$0xff]
      %v3012 = vld [vmem:[%s2 + $0x10] sm:$0xff]
      %v3013 = vld [vmem:[%s2 + $0x18] sm:$0xff]
      %v3014 = vld [vmem:[%s2 + $0x20] sm:$0xff]
      %v3015 = vld [vmem:[%s2 + $0x28] sm:$0xff]
      %v3016 = vld [vmem:[%s2 + $0x30] sm:$0xff]
      %v3017 = vld [vmem:[%s2 + $0x38] sm:$0xff]
      %v3018 = vld [vmem:[%s2 + $0x40] sm:$0xff]
      %v3019 = vld [vmem:[%s2 + $0x48] sm:$0xff]
      %v3020 = vld [vmem:[%s2 + $0x50] sm:$0xff]
      %v3021 = vld [vmem:[%s2 + $0x58] sm:$0xff]
      %v3022 = vld [vmem:[%s2 + $0x60] sm:$0xff]
      %v3023 = vld [vmem:[%s2 + $0x68] sm:$0xff]
      %v3024 = vld [vmem:[%s2 + $0x70] sm:$0xff]
      %v3025 = vld [vmem:[%s2 + $0x78] sm:$0xff]
      %v3026 = vld [vmem:[%s2 + $0x80] sm:$0xff]
      %v3027 = vld [vmem:[%s2 + $0x88] sm:$0xff]
      %v3028 = vld [vmem:[%s2 + $0x90] sm:$0xff]
      %v3029 = vld [vmem:[%s2 + $0x98] sm:$0xff]
      %v3030 = vld [vmem:[%s2 + $0xa0] sm:$0xff]
      %v3031 = vld [vmem:[%s2 + $0xa8] sm:$0xff]
      %v3032 = vld [vmem:[%s2 + $0xb0] sm:$0xff]
      %v3033 = vld [vmem:[%s2 + $0xb8] sm:$0xff]
      %v3034 = vld [vmem:[%s2 + $0xc0] sm:$0xff]
      %v3035 = vld [vmem:[%s2 + $0xc8] sm:$0xff]
      %v3036 = vld [vmem:[%s2 + $0xd0] sm:$0xff]
      %v3037 = vld [vmem:[%s2 + $0xd8] sm:$0xff]
      %v3038 = vld [vmem:[%s2 + $0xe0] sm:$0xff]
      %v3039 = vld [vmem:[%s2 + $0xe8] sm:$0xff]
      %v3040 = vld [vmem:[%s2 + $0xf0] sm:$0xff]
      %v3041 = vld [vmem:[%s2 + $0xf8] sm:$0xff]
      %v3042 = vld [vmem:[%s2 + $0x100] sm:$0xff]
      %v3043 = vld [vmem:[%s2 + $0x108] sm:$0xff]
      %v3044 = vld [vmem:[%s2 + $0x110] sm:$0xff]
      %v3045 = vld [vmem:[%s2 + $0x118] sm:$0xff]
      %v3046 = vld [vmem:[%s2 + $0x120] sm:$0xff]
      %v3047 = vld [vmem:[%s2 + $0x128] sm:$0xff]
      %v3048 = vld [vmem:[%s2 + $0x130] sm:$0xff]
      %v3049 = vld [vmem:[%s2 + $0x138] sm:$0xff]
      %3051 = vset.pattern.permute.xlu0 0
      %3052 = vperm.xlu0 %3051, %v3010
      %v3053 = vpop.permute.xlu0 %3052
      %3056 = vset.pattern.permute.xlu0 0
      %3057 = vperm.xlu0 %3056, %v3011
      %v3058 = vpop.permute.xlu0 %3057
      %3061 = vset.pattern.permute.xlu0 0
      %3062 = vperm.xlu0 %3061, %v3012
      %v3063 = vpop.permute.xlu0 %3062
      %3066 = vset.pattern.permute.xlu0 0
      %3067 = vperm.xlu0 %3066, %v3013
      %v3068 = vpop.permute.xlu0 %3067
      %3071 = vset.pattern.permute.xlu0 0
      %3072 = vperm.xlu0 %3071, %v3014
      %v3073 = vpop.permute.xlu0 %3072
      %3076 = vset.pattern.permute.xlu0 0
      %3077 = vperm.xlu0 %3076, %v3015
      %v3078 = vpop.permute.xlu0 %3077
      %3081 = vset.pattern.permute.xlu0 0
      %3082 = vperm.xlu0 %3081, %v3016
      %v3083 = vpop.permute.xlu0 %3082
      %3086 = vset.pattern.permute.xlu0 0
      %3087 = vperm.xlu0 %3086, %v3017
      %v3088 = vpop.permute.xlu0 %3087
      %3091 = vset.pattern.permute.xlu0 0
      %3092 = vperm.xlu0 %3091, %v3018
      %v3093 = vpop.permute.xlu0 %3092
      %3096 = vset.pattern.permute.xlu0 0
      %3097 = vperm.xlu0 %3096, %v3019
      %v3098 = vpop.permute.xlu0 %3097
      %3101 = vset.pattern.permute.xlu0 0
      %3102 = vperm.xlu0 %3101, %v3020
      %v3103 = vpop.permute.xlu0 %3102
      %3106 = vset.pattern.permute.xlu0 0
      %3107 = vperm.xlu0 %3106, %v3021
      %v3108 = vpop.permute.xlu0 %3107
      %3111 = vset.pattern.permute.xlu0 0
      %3112 = vperm.xlu0 %3111, %v3022
      %v3113 = vpop.permute.xlu0 %3112
      %3116 = vset.pattern.permute.xlu0 0
      %3117 = vperm.xlu0 %3116, %v3023
      %v3118 = vpop.permute.xlu0 %3117
      %3121 = vset.pattern.permute.xlu0 0
      %3122 = vperm.xlu0 %3121, %v3024
      %v3123 = vpop.permute.xlu0 %3122
      %3126 = vset.pattern.permute.xlu0 0
      %3127 = vperm.xlu0 %3126, %v3025
      %v3128 = vpop.permute.xlu0 %3127
      %3131 = vset.pattern.permute.xlu0 0
      %3132 = vperm.xlu0 %3131, %v3026
      %v3133 = vpop.permute.xlu0 %3132
      %3136 = vset.pattern.permute.xlu0 0
      %3137 = vperm.xlu0 %3136, %v3027
      %v3138 = vpop.permute.xlu0 %3137
      %3141 = vset.pattern.permute.xlu0 0
      %3142 = vperm.xlu0 %3141, %v3028
      %v3143 = vpop.permute.xlu0 %3142
      %3146 = vset.pattern.permute.xlu0 0
      %3147 = vperm.xlu0 %3146, %v3029
      %v3148 = vpop.permute.xlu0 %3147
      %3151 = vset.pattern.permute.xlu0 0
      %3152 = vperm.xlu0 %3151, %v3030
      %v3153 = vpop.permute.xlu0 %3152
      %3156 = vset.pattern.permute.xlu0 0
      %3157 = vperm.xlu0 %3156, %v3031
      %v3158 = vpop.permute.xlu0 %3157
      %3161 = vset.pattern.permute.xlu0 0
      %3162 = vperm.xlu0 %3161, %v3032
      %v3163 = vpop.permute.xlu0 %3162
      %3166 = vset.pattern.permute.xlu0 0
      %3167 = vperm.xlu0 %3166, %v3033
      %v3168 = vpop.permute.xlu0 %3167
      %3171 = vset.pattern.permute.xlu0 0
      %3172 = vperm.xlu0 %3171, %v3034
      %v3173 = vpop.permute.xlu0 %3172
      %3176 = vset.pattern.permute.xlu0 0
      %3177 = vperm.xlu0 %3176, %v3035
      %v3178 = vpop.permute.xlu0 %3177
      %3181 = vset.pattern.permute.xlu0 0
      %3182 = vperm.xlu0 %3181, %v3036
      %v3183 = vpop.permute.xlu0 %3182
      %3186 = vset.pattern.permute.xlu0 0
      %3187 = vperm.xlu0 %3186, %v3037
      %v3188 = vpop.permute.xlu0 %3187
      %3191 = vset.pattern.permute.xlu0 0
      %3192 = vperm.xlu0 %3191, %v3038
      %v3193 = vpop.permute.xlu0 %3192
      %3196 = vset.pattern.permute.xlu0 0
      %3197 = vperm.xlu0 %3196, %v3039
      %v3198 = vpop.permute.xlu0 %3197
      %3201 = vset.pattern.permute.xlu0 0
      %3202 = vperm.xlu0 %3201, %v3040
      %v3203 = vpop.permute.xlu0 %3202
      %3206 = vset.pattern.permute.xlu0 0
      %3207 = vperm.xlu0 %3206, %v3041
      %v3208 = vpop.permute.xlu0 %3207
      %3211 = vset.pattern.permute.xlu0 0
      %3212 = vperm.xlu0 %3211, %v3042
      %v3213 = vpop.permute.xlu0 %3212
      %3216 = vset.pattern.permute.xlu0 0
      %3217 = vperm.xlu0 %3216, %v3043
      %v3218 = vpop.permute.xlu0 %3217
      %3221 = vset.pattern.permute.xlu0 0
      %3222 = vperm.xlu0 %3221, %v3044
      %v3223 = vpop.permute.xlu0 %3222
      %3226 = vset.pattern.permute.xlu0 0
      %3227 = vperm.xlu0 %3226, %v3045
      %v3228 = vpop.permute.xlu0 %3227
      %3231 = vset.pattern.permute.xlu0 0
      %3232 = vperm.xlu0 %3231, %v3046
      %v3233 = vpop.permute.xlu0 %3232
      %3236 = vset.pattern.permute.xlu0 0
      %3237 = vperm.xlu0 %3236, %v3047
      %v3238 = vpop.permute.xlu0 %3237
      %3241 = vset.pattern.permute.xlu0 0
      %3242 = vperm.xlu0 %3241, %v3048
      %v3243 = vpop.permute.xlu0 %3242
      %3246 = vset.pattern.permute.xlu0 0
      %3247 = vperm.xlu0 %3246, %v3049
      %v3248 = vpop.permute.xlu0 %3247
      %v3250 = vmul.f32 %v2652, %v3053
      %v3251 = vmul.f32 %v2655, %v3058
      %v3252 = vmul.f32 %v2660, %v3063
      %v3253 = vmul.f32 %v2663, %v3068
      %v3254 = vmul.f32 %v2668, %v3073
      %v3255 = vmul.f32 %v2671, %v3078
      %v3256 = vmul.f32 %v2676, %v3083
      %v3257 = vmul.f32 %v2679, %v3088
      %v3258 = vmul.f32 %v2684, %v3093
      %v3259 = vmul.f32 %v2687, %v3098
      %v3260 = vmul.f32 %v2692, %v3103
      %v3261 = vmul.f32 %v2695, %v3108
      %v3262 = vmul.f32 %v2700, %v3113
      %v3263 = vmul.f32 %v2703, %v3118
      %v3264 = vmul.f32 %v2708, %v3123
      %v3265 = vmul.f32 %v2711, %v3128
      %v3266 = vmul.f32 %v2716, %v3133
      %v3267 = vmul.f32 %v2719, %v3138
      %v3268 = vmul.f32 %v2724, %v3143
      %v3269 = vmul.f32 %v2727, %v3148
      %v3270 = vmul.f32 %v2732, %v3153
      %v3271 = vmul.f32 %v2735, %v3158
      %v3272 = vmul.f32 %v2740, %v3163
      %v3273 = vmul.f32 %v2743, %v3168
      %v3274 = vmul.f32 %v2748, %v3173
      %v3275 = vmul.f32 %v2751, %v3178
      %v3276 = vmul.f32 %v2756, %v3183
      %v3277 = vmul.f32 %v2759, %v3188
      %v3278 = vmul.f32 %v2764, %v3193
      %v3279 = vmul.f32 %v2767, %v3198
      %v3280 = vmul.f32 %v2772, %v3203
      %v3281 = vmul.f32 %v2775, %v3208
      %v3282 = vmul.f32 %v2780, %v3213
      %v3283 = vmul.f32 %v2783, %v3218
      %v3284 = vmul.f32 %v2788, %v3223
      %v3285 = vmul.f32 %v2791, %v3228
      %v3286 = vmul.f32 %v2796, %v3233
      %v3287 = vmul.f32 %v2799, %v3238
      %v3288 = vmul.f32 %v2804, %v3243
      %v3289 = vmul.f32 %v2807, %v3248
      %v3290 = vadd.f32 %v3250, %v3251
      %v3291 = vadd.f32 %v3290, %v3252
      %v3292 = vadd.f32 %v3291, %v3253
      %v3293 = vadd.f32 %v3292, %v3254
      %v3294 = vadd.f32 %v3293, %v3255
      %v3295 = vadd.f32 %v3294, %v3256
      %v3296 = vadd.f32 %v3295, %v3257
      %v3297 = vadd.f32 %v3296, %v3258
      %v3298 = vadd.f32 %v3297, %v3259
      %v3299 = vadd.f32 %v3298, %v3260
      %v3300 = vadd.f32 %v3299, %v3261
      %v3301 = vadd.f32 %v3300, %v3262
      %v3302 = vadd.f32 %v3301, %v3263
      %v3303 = vadd.f32 %v3302, %v3264
      %v3304 = vadd.f32 %v3303, %v3265
      %v3305 = vadd.f32 %v3304, %v3266
      %v3306 = vadd.f32 %v3305, %v3267
      %v3307 = vadd.f32 %v3306, %v3268
      %v3308 = vadd.f32 %v3307, %v3269
      %v3309 = vadd.f32 %v3308, %v3270
      %v3310 = vadd.f32 %v3309, %v3271
      %v3311 = vadd.f32 %v3310, %v3272
      %v3312 = vadd.f32 %v3311, %v3273
      %v3313 = vadd.f32 %v3312, %v3274
      %v3314 = vadd.f32 %v3313, %v3275
      %v3315 = vadd.f32 %v3314, %v3276
      %v3316 = vadd.f32 %v3315, %v3277
      %v3317 = vadd.f32 %v3316, %v3278
      %v3318 = vadd.f32 %v3317, %v3279
      %v3319 = vadd.f32 %v3318, %v3280
      %v3320 = vadd.f32 %v3319, %v3281
      %v3321 = vadd.f32 %v3320, %v3282
      %v3322 = vadd.f32 %v3321, %v3283
      %v3323 = vadd.f32 %v3322, %v3284
      %v3324 = vadd.f32 %v3323, %v3285
      %v3325 = vadd.f32 %v3324, %v3286
      %v3326 = vadd.f32 %v3325, %v3287
      %v3327 = vadd.f32 %v3326, %v3288
      %v3328 = vadd.f32 %v3327, %v3289
      %v3329 = vrot.slane %v3328, 4
      %v3330 = vadd.f32 %v3328, %v3329
      %v3331 = vrot.slane %v3330, 2
      %v3332 = vadd.f32 %v3330, %v3331
      %v3333 = vrot.slane %v3332, 1
      %v3334 = vadd.f32 %v3332, %v3333
      %v3335 = vlaneseq
      %vm3336 = vcmp.ge.s32.totalorder %v3335, 0
      %vm3337 = vcmp.lt.s32.totalorder %v3335, 128
      %vm3338 = vmand %vm3336, %vm3337
      %3339 = vst.msk [vmem:[%s262] sm:$0x1] %vm3338, %v3334
      %v3340 = vmul.f32 %v3250, %v2652
      %v3341 = vmul.f32 %v3251, %v2655
      %v3342 = vmul.f32 %v3252, %v2660
      %v3343 = vmul.f32 %v3253, %v2663
      %v3344 = vmul.f32 %v3254, %v2668
      %v3345 = vmul.f32 %v3255, %v2671
      %v3346 = vmul.f32 %v3256, %v2676
      %v3347 = vmul.f32 %v3257, %v2679
      %v3348 = vmul.f32 %v3258, %v2684
      %v3349 = vmul.f32 %v3259, %v2687
      %v3350 = vmul.f32 %v3260, %v2692
      %v3351 = vmul.f32 %v3261, %v2695
      %v3352 = vmul.f32 %v3262, %v2700
      %v3353 = vmul.f32 %v3263, %v2703
      %v3354 = vmul.f32 %v3264, %v2708
      %v3355 = vmul.f32 %v3265, %v2711
      %v3356 = vmul.f32 %v3266, %v2716
      %v3357 = vmul.f32 %v3267, %v2719
      %v3358 = vmul.f32 %v3268, %v2724
      %v3359 = vmul.f32 %v3269, %v2727
      %v3360 = vmul.f32 %v3270, %v2732
      %v3361 = vmul.f32 %v3271, %v2735
      %v3362 = vmul.f32 %v3272, %v2740
      %v3363 = vmul.f32 %v3273, %v2743
      %v3364 = vmul.f32 %v3274, %v2748
      %v3365 = vmul.f32 %v3275, %v2751
      %v3366 = vmul.f32 %v3276, %v2756
      %v3367 = vmul.f32 %v3277, %v2759
      %v3368 = vmul.f32 %v3278, %v2764
      %v3369 = vmul.f32 %v3279, %v2767
      %v3370 = vmul.f32 %v3280, %v2772
      %v3371 = vmul.f32 %v3281, %v2775
      %v3372 = vmul.f32 %v3282, %v2780
      %v3373 = vmul.f32 %v3283, %v2783
      %v3374 = vmul.f32 %v3284, %v2788
      %v3375 = vmul.f32 %v3285, %v2791
      %v3376 = vmul.f32 %v3286, %v2796
      %v3377 = vmul.f32 %v3287, %v2799
      %v3378 = vmul.f32 %v3288, %v2804
      %v3379 = vmul.f32 %v3289, %v2807
      %v3380 = vadd.f32 %v3340, %v3341
      %v3381 = vadd.f32 %v3380, %v3342
      %v3382 = vadd.f32 %v3381, %v3343
      %v3383 = vadd.f32 %v3382, %v3344
      %v3384 = vadd.f32 %v3383, %v3345
      %v3385 = vadd.f32 %v3384, %v3346
      %v3386 = vadd.f32 %v3385, %v3347
      %v3387 = vadd.f32 %v3386, %v3348
      %v3388 = vadd.f32 %v3387, %v3349
      %v3389 = vadd.f32 %v3388, %v3350
      %v3390 = vadd.f32 %v3389, %v3351
      %v3391 = vadd.f32 %v3390, %v3352
      %v3392 = vadd.f32 %v3391, %v3353
      %v3393 = vadd.f32 %v3392, %v3354
      %v3394 = vadd.f32 %v3393, %v3355
      %v3395 = vadd.f32 %v3394, %v3356
      %v3396 = vadd.f32 %v3395, %v3357
      %v3397 = vadd.f32 %v3396, %v3358
      %v3398 = vadd.f32 %v3397, %v3359
      %v3399 = vadd.f32 %v3398, %v3360
      %v3400 = vadd.f32 %v3399, %v3361
      %v3401 = vadd.f32 %v3400, %v3362
      %v3402 = vadd.f32 %v3401, %v3363
      %v3403 = vadd.f32 %v3402, %v3364
      %v3404 = vadd.f32 %v3403, %v3365
      %v3405 = vadd.f32 %v3404, %v3366
      %v3406 = vadd.f32 %v3405, %v3367
      %v3407 = vadd.f32 %v3406, %v3368
      %v3408 = vadd.f32 %v3407, %v3369
      %v3409 = vadd.f32 %v3408, %v3370
      %v3410 = vadd.f32 %v3409, %v3371
      %v3411 = vadd.f32 %v3410, %v3372
      %v3412 = vadd.f32 %v3411, %v3373
      %v3413 = vadd.f32 %v3412, %v3374
      %v3414 = vadd.f32 %v3413, %v3375
      %v3415 = vadd.f32 %v3414, %v3376
      %v3416 = vadd.f32 %v3415, %v3377
      %v3417 = vadd.f32 %v3416, %v3378
      %v3418 = vadd.f32 %v3417, %v3379
      %v3419 = vrot.slane %v3418, 4
      %v3420 = vadd.f32 %v3418, %v3419
      %v3421 = vrot.slane %v3420, 2
      %v3422 = vadd.f32 %v3420, %v3421
      %v3423 = vrot.slane %v3422, 1
      %v3424 = vadd.f32 %v3422, %v3423
      %3425 = vst.msk [vmem:[%s262 + $0x1] sm:$0x1] %vm3338, %v3424
      %p3426 = scmp.lt.s32.totalorder %s18, 1
      %s3427 = scalar_select %p3426, %s18, 1
      %s3428 = smul.addr %s3427, 40
      %s3429 = smul.addr %s3428, 4
      %s3430 = scalar_lea.vmem %s5, %s3429
      %p3431 = scmp.lt.s32.totalorder %s18, 1
      %s3432 = scalar_select %p3431, %s18, 1
      %s3433 = smul.addr %s3432, 2
      %s3434 = scalar_lea.vmem %s6, %s3433
      // Predicated region
      $region41: #{double_conv_forward.4} parent=39 // pred_check
        %p3435 = pneg %p146
      $region42: #{double_conv_forward.4} parent=39 // pred_check_branch
        %3437 = sbr.rel (%p3435) target = $region44
      $region43: #{double_conv_forward.4} parent=39 // pred_region
        _
      $region44: #{double_conv_forward.4} parent=39 // pred_fallthru
        _
      // Predicated region
      $region45: #{double_conv_forward.4} parent=39 // pred_check
        %p3438 = pneg %p172
      $region46: #{double_conv_forward.4} parent=39 // pred_check_branch
        %3440 = sbr.rel (%p3438) target = $region48
      $region47: #{double_conv_forward.4} parent=39 // pred_region
        _
      $region48: #{double_conv_forward.4} parent=39 // pred_fallthru
        _
    $region40: #{double_conv_forward.4} parent=5 // pred_fallthru
      _
    %p3441 = scmp.le.s32.totalorder 2, %s13
    // Predicated region
    $region49: #{double_conv_forward.4} parent=5 // pred_check
      %p3442 = pneg %p3441
    $region50: #{double_conv_forward.4} parent=5 // pred_check_branch
      %3444 = sbr.rel (%p3442) target = $region52
    $region51: #{double_conv_forward.4} parent=5 // pred_region
      %s3445 = ssub.s32 %s13, 2
      // Predicated region
      $region53: #{double_conv_forward.4} parent=51 // pred_check
        %p3446 = pneg %p152
      $region54: #{double_conv_forward.4} parent=51 // pred_check_branch
        %3448 = sbr.rel (%p3446) target = $region56
      $region55: #{double_conv_forward.4} parent=51 // pred_region
        %p3449 = scmp.lt.s32.totalorder %s19, 1
        %s3450 = scalar_select %p3449, %s19, 1
        %s3451 = smul.addr %s3450, 40
        %s3452 = smul.addr %s3451, 4
        %s3453 = scalar_lea.vmem %s5, %s3452
      $region56: #{double_conv_forward.4} parent=51 // pred_fallthru
        _
      // Predicated region
      $region57: #{double_conv_forward.4} parent=51 // pred_check
        %p3454 = pneg %p178
      $region58: #{double_conv_forward.4} parent=51 // pred_check_branch
        %3456 = sbr.rel (%p3454) target = $region60
      $region59: #{double_conv_forward.4} parent=51 // pred_region
        %p3457 = scmp.lt.s32.totalorder %s19, 1
        %s3458 = scalar_select %p3457, %s19, 1
        %s3459 = smul.addr %s3458, 2
        %s3460 = scalar_lea.vmem %s6, %s3459
      $region60: #{double_conv_forward.4} parent=51 // pred_fallthru
        _
    $region52: #{double_conv_forward.4} parent=5 // pred_fallthru
      _
  $region6: #{double_conv_forward.4} parent=0 // loop_footer
    %s17 = sadd.s32 1, %s13
  $region7: #{double_conv_forward.4} parent=0 // loop_footer_branch
    %12 = sbr.rel target = $region3
  $region8: #{double_conv_forward.4} parent=0 // loop_exit
    _

</llo_original>
